<compile_context>
chip_gen: v7x
topology: tpu7x:2x2x1
jax: 0.10.0
libtpu: 0.0.40
codegen_flags: <defaults>
</compile_context>

<pallas_src>
import numpy as np
import jax
import jax.numpy as jnp
from jax.experimental import pallas as pl
from jax.experimental.pallas import tpu as pltpu


# ----------------------------- flags / sizes --------------------------------
class Flags:
    DIM_text = 16
    class_dim = 24
    batch_size = 2
    factorized_representation = True
    text_encoding = "char"
    num_features = 71        # char vocabulary size


FLAGS = Flags()
STYLE_DIM = 8
DIM = FLAGS.DIM_text
VOCAB = FLAGS.num_features
VPAD = 128                         # vocab padded to one full lane tile
Z_DIM = STYLE_DIM + FLAGS.class_dim
NEG = -1e30                        # additive mask for padded vocab lanes

# TODO(synk): DataGeneratorText_CharEnc is not defined in the reference file;
# implemented here as a representative char decoder: 4 ConvTranspose1d
# upsampling layers (ReLU after each), a 1x1 Conv1d to the vocabulary and
# LogSoftmax over the channel (vocab) dim.
CONVT_CFG = [
    # (Cin,     Cout,    K, stride, pad)    length: 1 -> 4 -> 8 -> 16 -> 32
    (5 * DIM, 5 * DIM, 4, 1, 0),
    (5 * DIM, 4 * DIM, 4, 2, 1),
    (4 * DIM, 2 * DIM, 4, 2, 1),
    (2 * DIM, 1 * DIM, 4, 2, 1),
]
SEQ_LEN = 32


# --------------------- parameter setup (plain NumPy glue) -------------------
def _convT_as_matmul(w, b, l_in, stride, pad, time_major_out=False):
    """ConvTranspose1d -> dense matrix on a flattened layout.

    input flat index:  i * l_in + s   (channel-major)
    output flat index: o * l_out + t  (channel-major)   if not time_major_out
                       t * c_out + o  (time-major)      if time_major_out
    """
    c_in, c_out, k = w.shape
    l_out = (l_in - 1) * stride - 2 * pad + k
    m = np.zeros((c_in * l_in, c_out * l_out), dtype=np.float32)
    rows = np.arange(c_in)[:, None] * l_in
    for s in range(l_in):
        for kk in range(k):
            t = s * stride - pad + kk
            if 0 <= t < l_out:
                if time_major_out:
                    cols = np.arange(c_out)[None, :] + t * c_out
                else:
                    cols = np.arange(c_out)[None, :] * l_out + t
                m[rows + s, cols] += w[:, :, kk]
    if time_major_out:
        bias = np.tile(b, l_out)[None, :].astype(np.float32)
    else:
        bias = np.repeat(b, l_out)[None, :].astype(np.float32)
    return m, bias, l_out


def init_params(key):
    params = []
    # feature_generator: nn.Linear(style_dim + class_dim, 5*DIM_text, bias=True)
    key, k1, k2 = jax.random.split(key, 3)
    w_fc = np.asarray(jax.random.normal(k1, (5 * DIM, Z_DIM), jnp.float32)) / np.sqrt(Z_DIM)
    b_fc = np.asarray(jax.random.normal(k2, (5 * DIM,), jnp.float32)) * 0.01
    params.append(jnp.asarray(w_fc.T, dtype=jnp.bfloat16))        # (Z_DIM, 5*DIM)
    params.append(jnp.asarray(b_fc[None, :], dtype=jnp.float32))  # (1, 5*DIM)

    # text_generator: ConvTranspose1d stack lowered to dense matmuls (bf16)
    l_in = 1
    for li, (c_in, c_out, k_sz, stride, pad) in enumerate(CONVT_CFG):
        key, kw, kb = jax.random.split(key, 3)
        w = np.asarray(jax.random.normal(kw, (c_in, c_out, k_sz), jnp.float32)) / np.sqrt(c_in * k_sz)
        b = np.asarray(jax.random.normal(kb, (c_out,), jnp.float32)) * 0.01
        time_major = (li == len(CONVT_CFG) - 1)   # last layer -> time-major output
        m, bias, l_in = _convT_as_matmul(w, b, l_in, stride, pad, time_major_out=time_major)
        params.append(jnp.asarray(m, dtype=jnp.bfloat16))
        params.append(jnp.asarray(bias, dtype=jnp.float32))
    assert l_in == SEQ_LEN

    # final 1x1 conv to vocabulary: raw weight, padded to 128 lanes
    key, kw, kb = jax.random.split(key, 3)
    w_v = np.asarray(jax.random.normal(kw, (VOCAB, DIM), jnp.float32)) / np.sqrt(DIM)
    b_v = np.asarray(jax.random.normal(kb, (VOCAB,), jnp.float32)) * 0.01
    w5p = np.zeros((DIM, VPAD), dtype=np.float32)
    w5p[:, :VOCAB] = w_v.T
    b5p = np.full((1, VPAD), NEG, dtype=np.float32)   # padded lanes masked out
    b5p[0, :VOCAB] = b_v
    params.append(jnp.asarray(w5p, dtype=jnp.bfloat16))
    params.append(jnp.asarray(b5p, dtype=jnp.float32))
    return params


# ------------------------------ Pallas kernel --------------------------------
def _decoder_kernel(z_ref, wfc_ref, bfc_ref,
                    m1_ref, b1_ref, m2_ref, b2_ref,
                    m3_ref, b3_ref, m4_ref, b4_ref,
                    w5_ref, b5_ref, out_ref):
    # feature_generator: Linear -> text_feat_hat (B, 5*DIM)
    x = jnp.dot(z_ref[...].astype(jnp.bfloat16), wfc_ref[...],
                preferred_element_type=jnp.float32) + bfc_ref[...]

    # ConvTranspose1d upsampling stack as MXU matmuls (+ReLU).  Layers 1-3
    # keep the activation channel-major (c*L + t); layer 4's lowered matrix
    # emits time-major (t*DIM + c) so the 1x1 vocab conv needs no relayout.
    for m_ref, b_ref in ((m1_ref, b1_ref), (m2_ref, b2_ref),
                         (m3_ref, b3_ref), (m4_ref, b4_ref)):
        x = jnp.dot(x.astype(jnp.bfloat16), m_ref[...],
                    preferred_element_type=jnp.float32) + b_ref[...]
        x = jnp.maximum(x, 0.0)

    # final 1x1 conv to the 128-padded vocab + fused LogSoftmax per timestep.
    w5 = w5_ref[...]
    b5 = b5_ref[...]          # padded lanes hold -1e30 -> excluded from softmax
    parts = []
    for t in range(SEQ_LEN):
        xt = x[:, t * DIM:(t + 1) * DIM].astype(jnp.bfloat16)          # (B, DIM)
        logit = jnp.dot(xt, w5, preferred_element_type=jnp.float32) + b5  # (B, VPAD)
        m = jnp.max(logit, axis=-1, keepdims=True)
        e = jnp.exp(logit - m)
        parts.append((logit - m) - jnp.log(jnp.sum(e, axis=-1, keepdims=True)))
    # single lane-dense store of the whole (B, L*128) log-prob slab
    out_ref[...] = jnp.concatenate(parts, axis=-1)


def _vmem_spec():
    return pl.BlockSpec(memory_space=pltpu.MemorySpace.VMEM)


def _run_decoder(z, params):
    b = z.shape[0]
    n_in = 1 + len(params)
    return pl.pallas_call(
        _decoder_kernel,
        out_shape=jax.ShapeDtypeStruct((b, SEQ_LEN * VPAD), jnp.float32),
        in_specs=[_vmem_spec() for _ in range(n_in)],
        out_specs=_vmem_spec(),
    )(z, *params)


# ------------------------------ module forward -------------------------------
def decoder_text_forward(z_style, z_content, params):
    if FLAGS.factorized_representation:
        # torch.cat((z_style, z_content), dim=1).squeeze(-1)
        z = jnp.concatenate([z_style, z_content], axis=1)
    else:
        z = z_content
    b = z.shape[0]
    # Full batch in ONE fused pallas_call (the torch DataLoader chunking is
    # row-independent, so results are identical; per-chunk calls would only
    # re-DMA the weights).
    logp = _run_decoder(z, params)                      # (B, L*VPAD), time-major
    text_hat = logp.reshape(b, SEQ_LEN, VPAD)[:, :, :VOCAB]   # == text_hat.transpose(-2,-1)
    return [text_hat]


# ----------------------------------- main ------------------------------------
if __name__ == "__main__":
    key = jax.random.PRNGKey(0)
    kp, ks, kc = jax.random.split(key, 3)
    params = init_params(kp)

    z_style = jax.random.normal(ks, (2, STYLE_DIM), jnp.float32)
    z_content = jax.random.normal(kc, (2, FLAGS.class_dim), jnp.float32)

    out = decoder_text_forward(z_style, z_content, params)
    text_hat = jax.block_until_ready(out[0])

    assert text_hat.shape == (2, SEQ_LEN, VOCAB)
    assert bool(jnp.all(jnp.isfinite(text_hat)))
    print("KERNEL_OK")
</pallas_src>

<mosaic_0001>
module attributes {stable_mosaic.version = 11 : i64} {
  func.func @_decoder_kernel(%arg0: memref<2x32xf32, #tpu.memory_space<vmem>>, %arg1: memref<32x80xbf16, #tpu.memory_space<vmem>>, %arg2: memref<1x80xf32, #tpu.memory_space<vmem>>, %arg3: memref<80x320xbf16, #tpu.memory_space<vmem>>, %arg4: memref<1x320xf32, #tpu.memory_space<vmem>>, %arg5: memref<320x512xbf16, #tpu.memory_space<vmem>>, %arg6: memref<1x512xf32, #tpu.memory_space<vmem>>, %arg7: memref<512x512xbf16, #tpu.memory_space<vmem>>, %arg8: memref<1x512xf32, #tpu.memory_space<vmem>>, %arg9: memref<512x512xbf16, #tpu.memory_space<vmem>>, %arg10: memref<1x512xf32, #tpu.memory_space<vmem>>, %arg11: memref<16x128xbf16, #tpu.memory_space<vmem>>, %arg12: memref<1x128xf32, #tpu.memory_space<vmem>>, %arg13: memref<2x4096xf32, #tpu.memory_space<vmem>>) attributes {dimension_semantics = [], scalar_prefetch = 0 : i64, scratch_operands = 0 : i64, tpu.core_type = #tpu.core_type<tc>} {
    %c0 = arith.constant 0 : index
    %c0_0 = arith.constant 0 : index
    %0 = vector.load %arg0[%c0, %c0_0] : memref<2x32xf32, #tpu.memory_space<vmem>>, vector<2x32xf32>
    %1 = arith.truncf %0 : vector<2x32xf32> to vector<2x32xbf16>
    %c0_1 = arith.constant 0 : index
    %c0_2 = arith.constant 0 : index
    %2 = vector.load %arg1[%c0_1, %c0_2] : memref<32x80xbf16, #tpu.memory_space<vmem>>, vector<32x80xbf16>
    %cst = arith.constant dense<0.000000e+00> : vector<2x80xf32>
    %3 = tpu.matmul %1, %2, %cst {dimension_numbers = #tpu.dot_dimension_numbers<[1], [0], [0], [1], [0, 0, 1, 1], [], []>} : vector<2x32xbf16>, vector<32x80xbf16>, vector<2x80xf32> -> vector<2x80xf32>
    %c0_3 = arith.constant 0 : index
    %c0_4 = arith.constant 0 : index
    %4 = vector.load %arg2[%c0_3, %c0_4] : memref<1x80xf32, #tpu.memory_space<vmem>>, vector<1x80xf32>
    %5 = vector.broadcast %4 : vector<1x80xf32> to vector<2x80xf32>
    %6 = arith.addf %3, %5 : vector<2x80xf32>
    %7 = arith.truncf %6 : vector<2x80xf32> to vector<2x80xbf16>
    %c0_5 = arith.constant 0 : index
    %c0_6 = arith.constant 0 : index
    %8 = vector.load %arg3[%c0_5, %c0_6] : memref<80x320xbf16, #tpu.memory_space<vmem>>, vector<80x320xbf16>
    %cst_7 = arith.constant dense<0.000000e+00> : vector<2x320xf32>
    %9 = tpu.matmul %7, %8, %cst_7 {dimension_numbers = #tpu.dot_dimension_numbers<[1], [0], [0], [1], [0, 0, 1, 1], [], []>} : vector<2x80xbf16>, vector<80x320xbf16>, vector<2x320xf32> -> vector<2x320xf32>
    %c0_8 = arith.constant 0 : index
    %c0_9 = arith.constant 0 : index
    %10 = vector.load %arg4[%c0_8, %c0_9] : memref<1x320xf32, #tpu.memory_space<vmem>>, vector<1x320xf32>
    %11 = vector.broadcast %10 : vector<1x320xf32> to vector<2x320xf32>
    %12 = arith.addf %9, %11 : vector<2x320xf32>
    %cst_10 = arith.constant 0.000000e+00 : f32
    %13 = vector.broadcast %cst_10 : f32 to vector<2x320xf32>
    %14 = arith.maximumf %12, %13 : vector<2x320xf32>
    %15 = arith.truncf %14 : vector<2x320xf32> to vector<2x320xbf16>
    %c0_11 = arith.constant 0 : index
    %c0_12 = arith.constant 0 : index
    %16 = vector.load %arg5[%c0_11, %c0_12] : memref<320x512xbf16, #tpu.memory_space<vmem>>, vector<320x512xbf16>
    %cst_13 = arith.constant dense<0.000000e+00> : vector<2x512xf32>
    %17 = tpu.matmul %15, %16, %cst_13 {dimension_numbers = #tpu.dot_dimension_numbers<[1], [0], [0], [1], [0, 0, 1, 1], [], []>} : vector<2x320xbf16>, vector<320x512xbf16>, vector<2x512xf32> -> vector<2x512xf32>
    %c0_14 = arith.constant 0 : index
    %c0_15 = arith.constant 0 : index
    %18 = vector.load %arg6[%c0_14, %c0_15] : memref<1x512xf32, #tpu.memory_space<vmem>>, vector<1x512xf32>
    %19 = vector.broadcast %18 : vector<1x512xf32> to vector<2x512xf32>
    %20 = arith.addf %17, %19 : vector<2x512xf32>
    %cst_16 = arith.constant 0.000000e+00 : f32
    %21 = vector.broadcast %cst_16 : f32 to vector<2x512xf32>
    %22 = arith.maximumf %20, %21 : vector<2x512xf32>
    %23 = arith.truncf %22 : vector<2x512xf32> to vector<2x512xbf16>
    %c0_17 = arith.constant 0 : index
    %c0_18 = arith.constant 0 : index
    %24 = vector.load %arg7[%c0_17, %c0_18] : memref<512x512xbf16, #tpu.memory_space<vmem>>, vector<512x512xbf16>
    %cst_19 = arith.constant dense<0.000000e+00> : vector<2x512xf32>
    %25 = tpu.matmul %23, %24, %cst_19 {dimension_numbers = #tpu.dot_dimension_numbers<[1], [0], [0], [1], [0, 0, 1, 1], [], []>} : vector<2x512xbf16>, vector<512x512xbf16>, vector<2x512xf32> -> vector<2x512xf32>
    %c0_20 = arith.constant 0 : index
    %c0_21 = arith.constant 0 : index
    %26 = vector.load %arg8[%c0_20, %c0_21] : memref<1x512xf32, #tpu.memory_space<vmem>>, vector<1x512xf32>
    %27 = vector.broadcast %26 : vector<1x512xf32> to vector<2x512xf32>
    %28 = arith.addf %25, %27 : vector<2x512xf32>
    %cst_22 = arith.constant 0.000000e+00 : f32
    %29 = vector.broadcast %cst_22 : f32 to vector<2x512xf32>
    %30 = arith.maximumf %28, %29 : vector<2x512xf32>
    %31 = arith.truncf %30 : vector<2x512xf32> to vector<2x512xbf16>
    %c0_23 = arith.constant 0 : index
    %c0_24 = arith.constant 0 : index
    %32 = vector.load %arg9[%c0_23, %c0_24] : memref<512x512xbf16, #tpu.memory_space<vmem>>, vector<512x512xbf16>
    %cst_25 = arith.constant dense<0.000000e+00> : vector<2x512xf32>
    %33 = tpu.matmul %31, %32, %cst_25 {dimension_numbers = #tpu.dot_dimension_numbers<[1], [0], [0], [1], [0, 0, 1, 1], [], []>} : vector<2x512xbf16>, vector<512x512xbf16>, vector<2x512xf32> -> vector<2x512xf32>
    %c0_26 = arith.constant 0 : index
    %c0_27 = arith.constant 0 : index
    %34 = vector.load %arg10[%c0_26, %c0_27] : memref<1x512xf32, #tpu.memory_space<vmem>>, vector<1x512xf32>
    %35 = vector.broadcast %34 : vector<1x512xf32> to vector<2x512xf32>
    %36 = arith.addf %33, %35 : vector<2x512xf32>
    %cst_28 = arith.constant 0.000000e+00 : f32
    %37 = vector.broadcast %cst_28 : f32 to vector<2x512xf32>
    %38 = arith.maximumf %36, %37 : vector<2x512xf32>
    %c0_29 = arith.constant 0 : index
    %c0_30 = arith.constant 0 : index
    %39 = vector.load %arg11[%c0_29, %c0_30] : memref<16x128xbf16, #tpu.memory_space<vmem>>, vector<16x128xbf16>
    %c0_31 = arith.constant 0 : index
    %c0_32 = arith.constant 0 : index
    %40 = vector.load %arg12[%c0_31, %c0_32] : memref<1x128xf32, #tpu.memory_space<vmem>>, vector<1x128xf32>
    %41 = vector.extract_strided_slice %38 {offsets = [0, 0], sizes = [2, 16], strides = [1, 1]} : vector<2x512xf32> to vector<2x16xf32>
    %42 = arith.truncf %41 : vector<2x16xf32> to vector<2x16xbf16>
    %cst_33 = arith.constant dense<0.000000e+00> : vector<2x128xf32>
    %43 = tpu.matmul %42, %39, %cst_33 {dimension_numbers = #tpu.dot_dimension_numbers<[1], [0], [0], [1], [0, 0, 1, 1], [], []>} : vector<2x16xbf16>, vector<16x128xbf16>, vector<2x128xf32> -> vector<2x128xf32>
    %44 = vector.broadcast %40 : vector<1x128xf32> to vector<2x128xf32>
    %45 = arith.addf %43, %44 : vector<2x128xf32>
    %cst_34 = arith.constant dense<0xFF800000> : vector<2xf32>
    %46 = vector.multi_reduction <maximumf>, %45, %cst_34 [1] : vector<2x128xf32> to vector<2xf32>
    %47 = vector.shape_cast %46 : vector<2xf32> to vector<2x1xf32>
    %48 = vector.broadcast %47 : vector<2x1xf32> to vector<2x128xf32>
    %49 = arith.subf %45, %48 : vector<2x128xf32>
    %50 = math.exp %49 : vector<2x128xf32>
    %51 = vector.broadcast %47 : vector<2x1xf32> to vector<2x128xf32>
    %52 = arith.subf %45, %51 : vector<2x128xf32>
    %cst_35 = arith.constant dense<0.000000e+00> : vector<2xf32>
    %53 = vector.multi_reduction <add>, %50, %cst_35 [1] : vector<2x128xf32> to vector<2xf32>
    %54 = vector.shape_cast %53 : vector<2xf32> to vector<2x1xf32>
    %55 = math.log %54 : vector<2x1xf32>
    %56 = vector.broadcast %55 : vector<2x1xf32> to vector<2x128xf32>
    %57 = arith.subf %52, %56 : vector<2x128xf32>
    %58 = vector.extract_strided_slice %38 {offsets = [0, 16], sizes = [2, 16], strides = [1, 1]} : vector<2x512xf32> to vector<2x16xf32>
    %59 = arith.truncf %58 : vector<2x16xf32> to vector<2x16xbf16>
    %cst_36 = arith.constant dense<0.000000e+00> : vector<2x128xf32>
    %60 = tpu.matmul %59, %39, %cst_36 {dimension_numbers = #tpu.dot_dimension_numbers<[1], [0], [0], [1], [0, 0, 1, 1], [], []>} : vector<2x16xbf16>, vector<16x128xbf16>, vector<2x128xf32> -> vector<2x128xf32>
    %61 = vector.broadcast %40 : vector<1x128xf32> to vector<2x128xf32>
    %62 = arith.addf %60, %61 : vector<2x128xf32>
    %cst_37 = arith.constant dense<0xFF800000> : vector<2xf32>
    %63 = vector.multi_reduction <maximumf>, %62, %cst_37 [1] : vector<2x128xf32> to vector<2xf32>
    %64 = vector.shape_cast %63 : vector<2xf32> to vector<2x1xf32>
    %65 = vector.broadcast %64 : vector<2x1xf32> to vector<2x128xf32>
    %66 = arith.subf %62, %65 : vector<2x128xf32>
    %67 = math.exp %66 : vector<2x128xf32>
    %68 = vector.broadcast %64 : vector<2x1xf32> to vector<2x128xf32>
    %69 = arith.subf %62, %68 : vector<2x128xf32>
    %cst_38 = arith.constant dense<0.000000e+00> : vector<2xf32>
    %70 = vector.multi_reduction <add>, %67, %cst_38 [1] : vector<2x128xf32> to vector<2xf32>
    %71 = vector.shape_cast %70 : vector<2xf32> to vector<2x1xf32>
    %72 = math.log %71 : vector<2x1xf32>
    %73 = vector.broadcast %72 : vector<2x1xf32> to vector<2x128xf32>
    %74 = arith.subf %69, %73 : vector<2x128xf32>
    %75 = vector.extract_strided_slice %38 {offsets = [0, 32], sizes = [2, 16], strides = [1, 1]} : vector<2x512xf32> to vector<2x16xf32>
    %76 = arith.truncf %75 : vector<2x16xf32> to vector<2x16xbf16>
    %cst_39 = arith.constant dense<0.000000e+00> : vector<2x128xf32>
    %77 = tpu.matmul %76, %39, %cst_39 {dimension_numbers = #tpu.dot_dimension_numbers<[1], [0], [0], [1], [0, 0, 1, 1], [], []>} : vector<2x16xbf16>, vector<16x128xbf16>, vector<2x128xf32> -> vector<2x128xf32>
    %78 = vector.broadcast %40 : vector<1x128xf32> to vector<2x128xf32>
    %79 = arith.addf %77, %78 : vector<2x128xf32>
    %cst_40 = arith.constant dense<0xFF800000> : vector<2xf32>
    %80 = vector.multi_reduction <maximumf>, %79, %cst_40 [1] : vector<2x128xf32> to vector<2xf32>
    %81 = vector.shape_cast %80 : vector<2xf32> to vector<2x1xf32>
    %82 = vector.broadcast %81 : vector<2x1xf32> to vector<2x128xf32>
    %83 = arith.subf %79, %82 : vector<2x128xf32>
    %84 = math.exp %83 : vector<2x128xf32>
    %85 = vector.broadcast %81 : vector<2x1xf32> to vector<2x128xf32>
    %86 = arith.subf %79, %85 : vector<2x128xf32>
    %cst_41 = arith.constant dense<0.000000e+00> : vector<2xf32>
    %87 = vector.multi_reduction <add>, %84, %cst_41 [1] : vector<2x128xf32> to vector<2xf32>
    %88 = vector.shape_cast %87 : vector<2xf32> to vector<2x1xf32>
    %89 = math.log %88 : vector<2x1xf32>
    %90 = vector.broadcast %89 : vector<2x1xf32> to vector<2x128xf32>
    %91 = arith.subf %86, %90 : vector<2x128xf32>
    %92 = vector.extract_strided_slice %38 {offsets = [0, 48], sizes = [2, 16], strides = [1, 1]} : vector<2x512xf32> to vector<2x16xf32>
    %93 = arith.truncf %92 : vector<2x16xf32> to vector<2x16xbf16>
    %cst_42 = arith.constant dense<0.000000e+00> : vector<2x128xf32>
    %94 = tpu.matmul %93, %39, %cst_42 {dimension_numbers = #tpu.dot_dimension_numbers<[1], [0], [0], [1], [0, 0, 1, 1], [], []>} : vector<2x16xbf16>, vector<16x128xbf16>, vector<2x128xf32> -> vector<2x128xf32>
    %95 = vector.broadcast %40 : vector<1x128xf32> to vector<2x128xf32>
    %96 = arith.addf %94, %95 : vector<2x128xf32>
    %cst_43 = arith.constant dense<0xFF800000> : vector<2xf32>
    %97 = vector.multi_reduction <maximumf>, %96, %cst_43 [1] : vector<2x128xf32> to vector<2xf32>
    %98 = vector.shape_cast %97 : vector<2xf32> to vector<2x1xf32>
    %99 = vector.broadcast %98 : vector<2x1xf32> to vector<2x128xf32>
    %100 = arith.subf %96, %99 : vector<2x128xf32>
    %101 = math.exp %100 : vector<2x128xf32>
    %102 = vector.broadcast %98 : vector<2x1xf32> to vector<2x128xf32>
    %103 = arith.subf %96, %102 : vector<2x128xf32>
    %cst_44 = arith.constant dense<0.000000e+00> : vector<2xf32>
    %104 = vector.multi_reduction <add>, %101, %cst_44 [1] : vector<2x128xf32> to vector<2xf32>
    %105 = vector.shape_cast %104 : vector<2xf32> to vector<2x1xf32>
    %106 = math.log %105 : vector<2x1xf32>
    %107 = vector.broadcast %106 : vector<2x1xf32> to vector<2x128xf32>
    %108 = arith.subf %103, %107 : vector<2x128xf32>
    %109 = vector.extract_strided_slice %38 {offsets = [0, 64], sizes = [2, 16], strides = [1, 1]} : vector<2x512xf32> to vector<2x16xf32>
    %110 = arith.truncf %109 : vector<2x16xf32> to vector<2x16xbf16>
    %cst_45 = arith.constant dense<0.000000e+00> : vector<2x128xf32>
    %111 = tpu.matmul %110, %39, %cst_45 {dimension_numbers = #tpu.dot_dimension_numbers<[1], [0], [0], [1], [0, 0, 1, 1], [], []>} : vector<2x16xbf16>, vector<16x128xbf16>, vector<2x128xf32> -> vector<2x128xf32>
    %112 = vector.broadcast %40 : vector<1x128xf32> to vector<2x128xf32>
    %113 = arith.addf %111, %112 : vector<2x128xf32>
    %cst_46 = arith.constant dense<0xFF800000> : vector<2xf32>
    %114 = vector.multi_reduction <maximumf>, %113, %cst_46 [1] : vector<2x128xf32> to vector<2xf32>
    %115 = vector.shape_cast %114 : vector<2xf32> to vector<2x1xf32>
    %116 = vector.broadcast %115 : vector<2x1xf32> to vector<2x128xf32>
    %117 = arith.subf %113, %116 : vector<2x128xf32>
    %118 = math.exp %117 : vector<2x128xf32>
    %119 = vector.broadcast %115 : vector<2x1xf32> to vector<2x128xf32>
    %120 = arith.subf %113, %119 : vector<2x128xf32>
    %cst_47 = arith.constant dense<0.000000e+00> : vector<2xf32>
    %121 = vector.multi_reduction <add>, %118, %cst_47 [1] : vector<2x128xf32> to vector<2xf32>
    %122 = vector.shape_cast %121 : vector<2xf32> to vector<2x1xf32>
    %123 = math.log %122 : vector<2x1xf32>
    %124 = vector.broadcast %123 : vector<2x1xf32> to vector<2x128xf32>
    %125 = arith.subf %120, %124 : vector<2x128xf32>
    %126 = vector.extract_strided_slice %38 {offsets = [0, 80], sizes = [2, 16], strides = [1, 1]} : vector<2x512xf32> to vector<2x16xf32>
    %127 = arith.truncf %126 : vector<2x16xf32> to vector<2x16xbf16>
    %cst_48 = arith.constant dense<0.000000e+00> : vector<2x128xf32>
    %128 = tpu.matmul %127, %39, %cst_48 {dimension_numbers = #tpu.dot_dimension_numbers<[1], [0], [0], [1], [0, 0, 1, 1], [], []>} : vector<2x16xbf16>, vector<16x128xbf16>, vector<2x128xf32> -> vector<2x128xf32>
    %129 = vector.broadcast %40 : vector<1x128xf32> to vector<2x128xf32>
    %130 = arith.addf %128, %129 : vector<2x128xf32>
    %cst_49 = arith.constant dense<0xFF800000> : vector<2xf32>
    %131 = vector.multi_reduction <maximumf>, %130, %cst_49 [1] : vector<2x128xf32> to vector<2xf32>
    %132 = vector.shape_cast %131 : vector<2xf32> to vector<2x1xf32>
    %133 = vector.broadcast %132 : vector<2x1xf32> to vector<2x128xf32>
    %134 = arith.subf %130, %133 : vector<2x128xf32>
    %135 = math.exp %134 : vector<2x128xf32>
    %136 = vector.broadcast %132 : vector<2x1xf32> to vector<2x128xf32>
    %137 = arith.subf %130, %136 : vector<2x128xf32>
    %cst_50 = arith.constant dense<0.000000e+00> : vector<2xf32>
    %138 = vector.multi_reduction <add>, %135, %cst_50 [1] : vector<2x128xf32> to vector<2xf32>
    %139 = vector.shape_cast %138 : vector<2xf32> to vector<2x1xf32>
    %140 = math.log %139 : vector<2x1xf32>
    %141 = vector.broadcast %140 : vector<2x1xf32> to vector<2x128xf32>
    %142 = arith.subf %137, %141 : vector<2x128xf32>
    %143 = vector.extract_strided_slice %38 {offsets = [0, 96], sizes = [2, 16], strides = [1, 1]} : vector<2x512xf32> to vector<2x16xf32>
    %144 = arith.truncf %143 : vector<2x16xf32> to vector<2x16xbf16>
    %cst_51 = arith.constant dense<0.000000e+00> : vector<2x128xf32>
    %145 = tpu.matmul %144, %39, %cst_51 {dimension_numbers = #tpu.dot_dimension_numbers<[1], [0], [0], [1], [0, 0, 1, 1], [], []>} : vector<2x16xbf16>, vector<16x128xbf16>, vector<2x128xf32> -> vector<2x128xf32>
    %146 = vector.broadcast %40 : vector<1x128xf32> to vector<2x128xf32>
    %147 = arith.addf %145, %146 : vector<2x128xf32>
    %cst_52 = arith.constant dense<0xFF800000> : vector<2xf32>
    %148 = vector.multi_reduction <maximumf>, %147, %cst_52 [1] : vector<2x128xf32> to vector<2xf32>
    %149 = vector.shape_cast %148 : vector<2xf32> to vector<2x1xf32>
    %150 = vector.broadcast %149 : vector<2x1xf32> to vector<2x128xf32>
    %151 = arith.subf %147, %150 : vector<2x128xf32>
    %152 = math.exp %151 : vector<2x128xf32>
    %153 = vector.broadcast %149 : vector<2x1xf32> to vector<2x128xf32>
    %154 = arith.subf %147, %153 : vector<2x128xf32>
    %cst_53 = arith.constant dense<0.000000e+00> : vector<2xf32>
    %155 = vector.multi_reduction <add>, %152, %cst_53 [1] : vector<2x128xf32> to vector<2xf32>
    %156 = vector.shape_cast %155 : vector<2xf32> to vector<2x1xf32>
    %157 = math.log %156 : vector<2x1xf32>
    %158 = vector.broadcast %157 : vector<2x1xf32> to vector<2x128xf32>
    %159 = arith.subf %154, %158 : vector<2x128xf32>
    %160 = vector.extract_strided_slice %38 {offsets = [0, 112], sizes = [2, 16], strides = [1, 1]} : vector<2x512xf32> to vector<2x16xf32>
    %161 = arith.truncf %160 : vector<2x16xf32> to vector<2x16xbf16>
    %cst_54 = arith.constant dense<0.000000e+00> : vector<2x128xf32>
    %162 = tpu.matmul %161, %39, %cst_54 {dimension_numbers = #tpu.dot_dimension_numbers<[1], [0], [0], [1], [0, 0, 1, 1], [], []>} : vector<2x16xbf16>, vector<16x128xbf16>, vector<2x128xf32> -> vector<2x128xf32>
    %163 = vector.broadcast %40 : vector<1x128xf32> to vector<2x128xf32>
    %164 = arith.addf %162, %163 : vector<2x128xf32>
    %cst_55 = arith.constant dense<0xFF800000> : vector<2xf32>
    %165 = vector.multi_reduction <maximumf>, %164, %cst_55 [1] : vector<2x128xf32> to vector<2xf32>
    %166 = vector.shape_cast %165 : vector<2xf32> to vector<2x1xf32>
    %167 = vector.broadcast %166 : vector<2x1xf32> to vector<2x128xf32>
    %168 = arith.subf %164, %167 : vector<2x128xf32>
    %169 = math.exp %168 : vector<2x128xf32>
    %170 = vector.broadcast %166 : vector<2x1xf32> to vector<2x128xf32>
    %171 = arith.subf %164, %170 : vector<2x128xf32>
    %cst_56 = arith.constant dense<0.000000e+00> : vector<2xf32>
    %172 = vector.multi_reduction <add>, %169, %cst_56 [1] : vector<2x128xf32> to vector<2xf32>
    %173 = vector.shape_cast %172 : vector<2xf32> to vector<2x1xf32>
    %174 = math.log %173 : vector<2x1xf32>
    %175 = vector.broadcast %174 : vector<2x1xf32> to vector<2x128xf32>
    %176 = arith.subf %171, %175 : vector<2x128xf32>
    %177 = vector.extract_strided_slice %38 {offsets = [0, 128], sizes = [2, 16], strides = [1, 1]} : vector<2x512xf32> to vector<2x16xf32>
    %178 = arith.truncf %177 : vector<2x16xf32> to vector<2x16xbf16>
    %cst_57 = arith.constant dense<0.000000e+00> : vector<2x128xf32>
    %179 = tpu.matmul %178, %39, %cst_57 {dimension_numbers = #tpu.dot_dimension_numbers<[1], [0], [0], [1], [0, 0, 1, 1], [], []>} : vector<2x16xbf16>, vector<16x128xbf16>, vector<2x128xf32> -> vector<2x128xf32>
    %180 = vector.broadcast %40 : vector<1x128xf32> to vector<2x128xf32>
    %181 = arith.addf %179, %180 : vector<2x128xf32>
    %cst_58 = arith.constant dense<0xFF800000> : vector<2xf32>
    %182 = vector.multi_reduction <maximumf>, %181, %cst_58 [1] : vector<2x128xf32> to vector<2xf32>
    %183 = vector.shape_cast %182 : vector<2xf32> to vector<2x1xf32>
    %184 = vector.broadcast %183 : vector<2x1xf32> to vector<2x128xf32>
    %185 = arith.subf %181, %184 : vector<2x128xf32>
    %186 = math.exp %185 : vector<2x128xf32>
    %187 = vector.broadcast %183 : vector<2x1xf32> to vector<2x128xf32>
    %188 = arith.subf %181, %187 : vector<2x128xf32>
    %cst_59 = arith.constant dense<0.000000e+00> : vector<2xf32>
    %189 = vector.multi_reduction <add>, %186, %cst_59 [1] : vector<2x128xf32> to vector<2xf32>
    %190 = vector.shape_cast %189 : vector<2xf32> to vector<2x1xf32>
    %191 = math.log %190 : vector<2x1xf32>
    %192 = vector.broadcast %191 : vector<2x1xf32> to vector<2x128xf32>
    %193 = arith.subf %188, %192 : vector<2x128xf32>
    %194 = vector.extract_strided_slice %38 {offsets = [0, 144], sizes = [2, 16], strides = [1, 1]} : vector<2x512xf32> to vector<2x16xf32>
    %195 = arith.truncf %194 : vector<2x16xf32> to vector<2x16xbf16>
    %cst_60 = arith.constant dense<0.000000e+00> : vector<2x128xf32>
    %196 = tpu.matmul %195, %39, %cst_60 {dimension_numbers = #tpu.dot_dimension_numbers<[1], [0], [0], [1], [0, 0, 1, 1], [], []>} : vector<2x16xbf16>, vector<16x128xbf16>, vector<2x128xf32> -> vector<2x128xf32>
    %197 = vector.broadcast %40 : vector<1x128xf32> to vector<2x128xf32>
    %198 = arith.addf %196, %197 : vector<2x128xf32>
    %cst_61 = arith.constant dense<0xFF800000> : vector<2xf32>
    %199 = vector.multi_reduction <maximumf>, %198, %cst_61 [1] : vector<2x128xf32> to vector<2xf32>
    %200 = vector.shape_cast %199 : vector<2xf32> to vector<2x1xf32>
    %201 = vector.broadcast %200 : vector<2x1xf32> to vector<2x128xf32>
    %202 = arith.subf %198, %201 : vector<2x128xf32>
    %203 = math.exp %202 : vector<2x128xf32>
    %204 = vector.broadcast %200 : vector<2x1xf32> to vector<2x128xf32>
    %205 = arith.subf %198, %204 : vector<2x128xf32>
    %cst_62 = arith.constant dense<0.000000e+00> : vector<2xf32>
    %206 = vector.multi_reduction <add>, %203, %cst_62 [1] : vector<2x128xf32> to vector<2xf32>
    %207 = vector.shape_cast %206 : vector<2xf32> to vector<2x1xf32>
    %208 = math.log %207 : vector<2x1xf32>
    %209 = vector.broadcast %208 : vector<2x1xf32> to vector<2x128xf32>
    %210 = arith.subf %205, %209 : vector<2x128xf32>
    %211 = vector.extract_strided_slice %38 {offsets = [0, 160], sizes = [2, 16], strides = [1, 1]} : vector<2x512xf32> to vector<2x16xf32>
    %212 = arith.truncf %211 : vector<2x16xf32> to vector<2x16xbf16>
    %cst_63 = arith.constant dense<0.000000e+00> : vector<2x128xf32>
    %213 = tpu.matmul %212, %39, %cst_63 {dimension_numbers = #tpu.dot_dimension_numbers<[1], [0], [0], [1], [0, 0, 1, 1], [], []>} : vector<2x16xbf16>, vector<16x128xbf16>, vector<2x128xf32> -> vector<2x128xf32>
    %214 = vector.broadcast %40 : vector<1x128xf32> to vector<2x128xf32>
    %215 = arith.addf %213, %214 : vector<2x128xf32>
    %cst_64 = arith.constant dense<0xFF800000> : vector<2xf32>
    %216 = vector.multi_reduction <maximumf>, %215, %cst_64 [1] : vector<2x128xf32> to vector<2xf32>
    %217 = vector.shape_cast %216 : vector<2xf32> to vector<2x1xf32>
    %218 = vector.broadcast %217 : vector<2x1xf32> to vector<2x128xf32>
    %219 = arith.subf %215, %218 : vector<2x128xf32>
    %220 = math.exp %219 : vector<2x128xf32>
    %221 = vector.broadcast %217 : vector<2x1xf32> to vector<2x128xf32>
    %222 = arith.subf %215, %221 : vector<2x128xf32>
    %cst_65 = arith.constant dense<0.000000e+00> : vector<2xf32>
    %223 = vector.multi_reduction <add>, %220, %cst_65 [1] : vector<2x128xf32> to vector<2xf32>
    %224 = vector.shape_cast %223 : vector<2xf32> to vector<2x1xf32>
    %225 = math.log %224 : vector<2x1xf32>
    %226 = vector.broadcast %225 : vector<2x1xf32> to vector<2x128xf32>
    %227 = arith.subf %222, %226 : vector<2x128xf32>
    %228 = vector.extract_strided_slice %38 {offsets = [0, 176], sizes = [2, 16], strides = [1, 1]} : vector<2x512xf32> to vector<2x16xf32>
    %229 = arith.truncf %228 : vector<2x16xf32> to vector<2x16xbf16>
    %cst_66 = arith.constant dense<0.000000e+00> : vector<2x128xf32>
    %230 = tpu.matmul %229, %39, %cst_66 {dimension_numbers = #tpu.dot_dimension_numbers<[1], [0], [0], [1], [0, 0, 1, 1], [], []>} : vector<2x16xbf16>, vector<16x128xbf16>, vector<2x128xf32> -> vector<2x128xf32>
    %231 = vector.broadcast %40 : vector<1x128xf32> to vector<2x128xf32>
    %232 = arith.addf %230, %231 : vector<2x128xf32>
    %cst_67 = arith.constant dense<0xFF800000> : vector<2xf32>
    %233 = vector.multi_reduction <maximumf>, %232, %cst_67 [1] : vector<2x128xf32> to vector<2xf32>
    %234 = vector.shape_cast %233 : vector<2xf32> to vector<2x1xf32>
    %235 = vector.broadcast %234 : vector<2x1xf32> to vector<2x128xf32>
    %236 = arith.subf %232, %235 : vector<2x128xf32>
    %237 = math.exp %236 : vector<2x128xf32>
    %238 = vector.broadcast %234 : vector<2x1xf32> to vector<2x128xf32>
    %239 = arith.subf %232, %238 : vector<2x128xf32>
    %cst_68 = arith.constant dense<0.000000e+00> : vector<2xf32>
    %240 = vector.multi_reduction <add>, %237, %cst_68 [1] : vector<2x128xf32> to vector<2xf32>
    %241 = vector.shape_cast %240 : vector<2xf32> to vector<2x1xf32>
    %242 = math.log %241 : vector<2x1xf32>
    %243 = vector.broadcast %242 : vector<2x1xf32> to vector<2x128xf32>
    %244 = arith.subf %239, %243 : vector<2x128xf32>
    %245 = vector.extract_strided_slice %38 {offsets = [0, 192], sizes = [2, 16], strides = [1, 1]} : vector<2x512xf32> to vector<2x16xf32>
    %246 = arith.truncf %245 : vector<2x16xf32> to vector<2x16xbf16>
    %cst_69 = arith.constant dense<0.000000e+00> : vector<2x128xf32>
    %247 = tpu.matmul %246, %39, %cst_69 {dimension_numbers = #tpu.dot_dimension_numbers<[1], [0], [0], [1], [0, 0, 1, 1], [], []>} : vector<2x16xbf16>, vector<16x128xbf16>, vector<2x128xf32> -> vector<2x128xf32>
    %248 = vector.broadcast %40 : vector<1x128xf32> to vector<2x128xf32>
    %249 = arith.addf %247, %248 : vector<2x128xf32>
    %cst_70 = arith.constant dense<0xFF800000> : vector<2xf32>
    %250 = vector.multi_reduction <maximumf>, %249, %cst_70 [1] : vector<2x128xf32> to vector<2xf32>
    %251 = vector.shape_cast %250 : vector<2xf32> to vector<2x1xf32>
    %252 = vector.broadcast %251 : vector<2x1xf32> to vector<2x128xf32>
    %253 = arith.subf %249, %252 : vector<2x128xf32>
    %254 = math.exp %253 : vector<2x128xf32>
    %255 = vector.broadcast %251 : vector<2x1xf32> to vector<2x128xf32>
    %256 = arith.subf %249, %255 : vector<2x128xf32>
    %cst_71 = arith.constant dense<0.000000e+00> : vector<2xf32>
    %257 = vector.multi_reduction <add>, %254, %cst_71 [1] : vector<2x128xf32> to vector<2xf32>
    %258 = vector.shape_cast %257 : vector<2xf32> to vector<2x1xf32>
    %259 = math.log %258 : vector<2x1xf32>
    %260 = vector.broadcast %259 : vector<2x1xf32> to vector<2x128xf32>
    %261 = arith.subf %256, %260 : vector<2x128xf32>
    %262 = vector.extract_strided_slice %38 {offsets = [0, 208], sizes = [2, 16], strides = [1, 1]} : vector<2x512xf32> to vector<2x16xf32>
    %263 = arith.truncf %262 : vector<2x16xf32> to vector<2x16xbf16>
    %cst_72 = arith.constant dense<0.000000e+00> : vector<2x128xf32>
    %264 = tpu.matmul %263, %39, %cst_72 {dimension_numbers = #tpu.dot_dimension_numbers<[1], [0], [0], [1], [0, 0, 1, 1], [], []>} : vector<2x16xbf16>, vector<16x128xbf16>, vector<2x128xf32> -> vector<2x128xf32>
    %265 = vector.broadcast %40 : vector<1x128xf32> to vector<2x128xf32>
    %266 = arith.addf %264, %265 : vector<2x128xf32>
    %cst_73 = arith.constant dense<0xFF800000> : vector<2xf32>
    %267 = vector.multi_reduction <maximumf>, %266, %cst_73 [1] : vector<2x128xf32> to vector<2xf32>
    %268 = vector.shape_cast %267 : vector<2xf32> to vector<2x1xf32>
    %269 = vector.broadcast %268 : vector<2x1xf32> to vector<2x128xf32>
    %270 = arith.subf %266, %269 : vector<2x128xf32>
    %271 = math.exp %270 : vector<2x128xf32>
    %272 = vector.broadcast %268 : vector<2x1xf32> to vector<2x128xf32>
    %273 = arith.subf %266, %272 : vector<2x128xf32>
    %cst_74 = arith.constant dense<0.000000e+00> : vector<2xf32>
    %274 = vector.multi_reduction <add>, %271, %cst_74 [1] : vector<2x128xf32> to vector<2xf32>
    %275 = vector.shape_cast %274 : vector<2xf32> to vector<2x1xf32>
    %276 = math.log %275 : vector<2x1xf32>
    %277 = vector.broadcast %276 : vector<2x1xf32> to vector<2x128xf32>
    %278 = arith.subf %273, %277 : vector<2x128xf32>
    %279 = vector.extract_strided_slice %38 {offsets = [0, 224], sizes = [2, 16], strides = [1, 1]} : vector<2x512xf32> to vector<2x16xf32>
    %280 = arith.truncf %279 : vector<2x16xf32> to vector<2x16xbf16>
    %cst_75 = arith.constant dense<0.000000e+00> : vector<2x128xf32>
    %281 = tpu.matmul %280, %39, %cst_75 {dimension_numbers = #tpu.dot_dimension_numbers<[1], [0], [0], [1], [0, 0, 1, 1], [], []>} : vector<2x16xbf16>, vector<16x128xbf16>, vector<2x128xf32> -> vector<2x128xf32>
    %282 = vector.broadcast %40 : vector<1x128xf32> to vector<2x128xf32>
    %283 = arith.addf %281, %282 : vector<2x128xf32>
    %cst_76 = arith.constant dense<0xFF800000> : vector<2xf32>
    %284 = vector.multi_reduction <maximumf>, %283, %cst_76 [1] : vector<2x128xf32> to vector<2xf32>
    %285 = vector.shape_cast %284 : vector<2xf32> to vector<2x1xf32>
    %286 = vector.broadcast %285 : vector<2x1xf32> to vector<2x128xf32>
    %287 = arith.subf %283, %286 : vector<2x128xf32>
    %288 = math.exp %287 : vector<2x128xf32>
    %289 = vector.broadcast %285 : vector<2x1xf32> to vector<2x128xf32>
    %290 = arith.subf %283, %289 : vector<2x128xf32>
    %cst_77 = arith.constant dense<0.000000e+00> : vector<2xf32>
    %291 = vector.multi_reduction <add>, %288, %cst_77 [1] : vector<2x128xf32> to vector<2xf32>
    %292 = vector.shape_cast %291 : vector<2xf32> to vector<2x1xf32>
    %293 = math.log %292 : vector<2x1xf32>
    %294 = vector.broadcast %293 : vector<2x1xf32> to vector<2x128xf32>
    %295 = arith.subf %290, %294 : vector<2x128xf32>
    %296 = vector.extract_strided_slice %38 {offsets = [0, 240], sizes = [2, 16], strides = [1, 1]} : vector<2x512xf32> to vector<2x16xf32>
    %297 = arith.truncf %296 : vector<2x16xf32> to vector<2x16xbf16>
    %cst_78 = arith.constant dense<0.000000e+00> : vector<2x128xf32>
    %298 = tpu.matmul %297, %39, %cst_78 {dimension_numbers = #tpu.dot_dimension_numbers<[1], [0], [0], [1], [0, 0, 1, 1], [], []>} : vector<2x16xbf16>, vector<16x128xbf16>, vector<2x128xf32> -> vector<2x128xf32>
    %299 = vector.broadcast %40 : vector<1x128xf32> to vector<2x128xf32>
    %300 = arith.addf %298, %299 : vector<2x128xf32>
    %cst_79 = arith.constant dense<0xFF800000> : vector<2xf32>
    %301 = vector.multi_reduction <maximumf>, %300, %cst_79 [1] : vector<2x128xf32> to vector<2xf32>
    %302 = vector.shape_cast %301 : vector<2xf32> to vector<2x1xf32>
    %303 = vector.broadcast %302 : vector<2x1xf32> to vector<2x128xf32>
    %304 = arith.subf %300, %303 : vector<2x128xf32>
    %305 = math.exp %304 : vector<2x128xf32>
    %306 = vector.broadcast %302 : vector<2x1xf32> to vector<2x128xf32>
    %307 = arith.subf %300, %306 : vector<2x128xf32>
    %cst_80 = arith.constant dense<0.000000e+00> : vector<2xf32>
    %308 = vector.multi_reduction <add>, %305, %cst_80 [1] : vector<2x128xf32> to vector<2xf32>
    %309 = vector.shape_cast %308 : vector<2xf32> to vector<2x1xf32>
    %310 = math.log %309 : vector<2x1xf32>
    %311 = vector.broadcast %310 : vector<2x1xf32> to vector<2x128xf32>
    %312 = arith.subf %307, %311 : vector<2x128xf32>
    %313 = vector.extract_strided_slice %38 {offsets = [0, 256], sizes = [2, 16], strides = [1, 1]} : vector<2x512xf32> to vector<2x16xf32>
    %314 = arith.truncf %313 : vector<2x16xf32> to vector<2x16xbf16>
    %cst_81 = arith.constant dense<0.000000e+00> : vector<2x128xf32>
    %315 = tpu.matmul %314, %39, %cst_81 {dimension_numbers = #tpu.dot_dimension_numbers<[1], [0], [0], [1], [0, 0, 1, 1], [], []>} : vector<2x16xbf16>, vector<16x128xbf16>, vector<2x128xf32> -> vector<2x128xf32>
    %316 = vector.broadcast %40 : vector<1x128xf32> to vector<2x128xf32>
    %317 = arith.addf %315, %316 : vector<2x128xf32>
    %cst_82 = arith.constant dense<0xFF800000> : vector<2xf32>
    %318 = vector.multi_reduction <maximumf>, %317, %cst_82 [1] : vector<2x128xf32> to vector<2xf32>
    %319 = vector.shape_cast %318 : vector<2xf32> to vector<2x1xf32>
    %320 = vector.broadcast %319 : vector<2x1xf32> to vector<2x128xf32>
    %321 = arith.subf %317, %320 : vector<2x128xf32>
    %322 = math.exp %321 : vector<2x128xf32>
    %323 = vector.broadcast %319 : vector<2x1xf32> to vector<2x128xf32>
    %324 = arith.subf %317, %323 : vector<2x128xf32>
    %cst_83 = arith.constant dense<0.000000e+00> : vector<2xf32>
    %325 = vector.multi_reduction <add>, %322, %cst_83 [1] : vector<2x128xf32> to vector<2xf32>
    %326 = vector.shape_cast %325 : vector<2xf32> to vector<2x1xf32>
    %327 = math.log %326 : vector<2x1xf32>
    %328 = vector.broadcast %327 : vector<2x1xf32> to vector<2x128xf32>
    %329 = arith.subf %324, %328 : vector<2x128xf32>
    %330 = vector.extract_strided_slice %38 {offsets = [0, 272], sizes = [2, 16], strides = [1, 1]} : vector<2x512xf32> to vector<2x16xf32>
    %331 = arith.truncf %330 : vector<2x16xf32> to vector<2x16xbf16>
    %cst_84 = arith.constant dense<0.000000e+00> : vector<2x128xf32>
    %332 = tpu.matmul %331, %39, %cst_84 {dimension_numbers = #tpu.dot_dimension_numbers<[1], [0], [0], [1], [0, 0, 1, 1], [], []>} : vector<2x16xbf16>, vector<16x128xbf16>, vector<2x128xf32> -> vector<2x128xf32>
    %333 = vector.broadcast %40 : vector<1x128xf32> to vector<2x128xf32>
    %334 = arith.addf %332, %333 : vector<2x128xf32>
    %cst_85 = arith.constant dense<0xFF800000> : vector<2xf32>
    %335 = vector.multi_reduction <maximumf>, %334, %cst_85 [1] : vector<2x128xf32> to vector<2xf32>
    %336 = vector.shape_cast %335 : vector<2xf32> to vector<2x1xf32>
    %337 = vector.broadcast %336 : vector<2x1xf32> to vector<2x128xf32>
    %338 = arith.subf %334, %337 : vector<2x128xf32>
    %339 = math.exp %338 : vector<2x128xf32>
    %340 = vector.broadcast %336 : vector<2x1xf32> to vector<2x128xf32>
    %341 = arith.subf %334, %340 : vector<2x128xf32>
    %cst_86 = arith.constant dense<0.000000e+00> : vector<2xf32>
    %342 = vector.multi_reduction <add>, %339, %cst_86 [1] : vector<2x128xf32> to vector<2xf32>
    %343 = vector.shape_cast %342 : vector<2xf32> to vector<2x1xf32>
    %344 = math.log %343 : vector<2x1xf32>
    %345 = vector.broadcast %344 : vector<2x1xf32> to vector<2x128xf32>
    %346 = arith.subf %341, %345 : vector<2x128xf32>
    %347 = vector.extract_strided_slice %38 {offsets = [0, 288], sizes = [2, 16], strides = [1, 1]} : vector<2x512xf32> to vector<2x16xf32>
    %348 = arith.truncf %347 : vector<2x16xf32> to vector<2x16xbf16>
    %cst_87 = arith.constant dense<0.000000e+00> : vector<2x128xf32>
    %349 = tpu.matmul %348, %39, %cst_87 {dimension_numbers = #tpu.dot_dimension_numbers<[1], [0], [0], [1], [0, 0, 1, 1], [], []>} : vector<2x16xbf16>, vector<16x128xbf16>, vector<2x128xf32> -> vector<2x128xf32>
    %350 = vector.broadcast %40 : vector<1x128xf32> to vector<2x128xf32>
    %351 = arith.addf %349, %350 : vector<2x128xf32>
    %cst_88 = arith.constant dense<0xFF800000> : vector<2xf32>
    %352 = vector.multi_reduction <maximumf>, %351, %cst_88 [1] : vector<2x128xf32> to vector<2xf32>
    %353 = vector.shape_cast %352 : vector<2xf32> to vector<2x1xf32>
    %354 = vector.broadcast %353 : vector<2x1xf32> to vector<2x128xf32>
    %355 = arith.subf %351, %354 : vector<2x128xf32>
    %356 = math.exp %355 : vector<2x128xf32>
    %357 = vector.broadcast %353 : vector<2x1xf32> to vector<2x128xf32>
    %358 = arith.subf %351, %357 : vector<2x128xf32>
    %cst_89 = arith.constant dense<0.000000e+00> : vector<2xf32>
    %359 = vector.multi_reduction <add>, %356, %cst_89 [1] : vector<2x128xf32> to vector<2xf32>
    %360 = vector.shape_cast %359 : vector<2xf32> to vector<2x1xf32>
    %361 = math.log %360 : vector<2x1xf32>
    %362 = vector.broadcast %361 : vector<2x1xf32> to vector<2x128xf32>
    %363 = arith.subf %358, %362 : vector<2x128xf32>
    %364 = vector.extract_strided_slice %38 {offsets = [0, 304], sizes = [2, 16], strides = [1, 1]} : vector<2x512xf32> to vector<2x16xf32>
    %365 = arith.truncf %364 : vector<2x16xf32> to vector<2x16xbf16>
    %cst_90 = arith.constant dense<0.000000e+00> : vector<2x128xf32>
    %366 = tpu.matmul %365, %39, %cst_90 {dimension_numbers = #tpu.dot_dimension_numbers<[1], [0], [0], [1], [0, 0, 1, 1], [], []>} : vector<2x16xbf16>, vector<16x128xbf16>, vector<2x128xf32> -> vector<2x128xf32>
    %367 = vector.broadcast %40 : vector<1x128xf32> to vector<2x128xf32>
    %368 = arith.addf %366, %367 : vector<2x128xf32>
    %cst_91 = arith.constant dense<0xFF800000> : vector<2xf32>
    %369 = vector.multi_reduction <maximumf>, %368, %cst_91 [1] : vector<2x128xf32> to vector<2xf32>
    %370 = vector.shape_cast %369 : vector<2xf32> to vector<2x1xf32>
    %371 = vector.broadcast %370 : vector<2x1xf32> to vector<2x128xf32>
    %372 = arith.subf %368, %371 : vector<2x128xf32>
    %373 = math.exp %372 : vector<2x128xf32>
    %374 = vector.broadcast %370 : vector<2x1xf32> to vector<2x128xf32>
    %375 = arith.subf %368, %374 : vector<2x128xf32>
    %cst_92 = arith.constant dense<0.000000e+00> : vector<2xf32>
    %376 = vector.multi_reduction <add>, %373, %cst_92 [1] : vector<2x128xf32> to vector<2xf32>
    %377 = vector.shape_cast %376 : vector<2xf32> to vector<2x1xf32>
    %378 = math.log %377 : vector<2x1xf32>
    %379 = vector.broadcast %378 : vector<2x1xf32> to vector<2x128xf32>
    %380 = arith.subf %375, %379 : vector<2x128xf32>
    %381 = vector.extract_strided_slice %38 {offsets = [0, 320], sizes = [2, 16], strides = [1, 1]} : vector<2x512xf32> to vector<2x16xf32>
    %382 = arith.truncf %381 : vector<2x16xf32> to vector<2x16xbf16>
    %cst_93 = arith.constant dense<0.000000e+00> : vector<2x128xf32>
    %383 = tpu.matmul %382, %39, %cst_93 {dimension_numbers = #tpu.dot_dimension_numbers<[1], [0], [0], [1], [0, 0, 1, 1], [], []>} : vector<2x16xbf16>, vector<16x128xbf16>, vector<2x128xf32> -> vector<2x128xf32>
    %384 = vector.broadcast %40 : vector<1x128xf32> to vector<2x128xf32>
    %385 = arith.addf %383, %384 : vector<2x128xf32>
    %cst_94 = arith.constant dense<0xFF800000> : vector<2xf32>
    %386 = vector.multi_reduction <maximumf>, %385, %cst_94 [1] : vector<2x128xf32> to vector<2xf32>
    %387 = vector.shape_cast %386 : vector<2xf32> to vector<2x1xf32>
    %388 = vector.broadcast %387 : vector<2x1xf32> to vector<2x128xf32>
    %389 = arith.subf %385, %388 : vector<2x128xf32>
    %390 = math.exp %389 : vector<2x128xf32>
    %391 = vector.broadcast %387 : vector<2x1xf32> to vector<2x128xf32>
    %392 = arith.subf %385, %391 : vector<2x128xf32>
    %cst_95 = arith.constant dense<0.000000e+00> : vector<2xf32>
    %393 = vector.multi_reduction <add>, %390, %cst_95 [1] : vector<2x128xf32> to vector<2xf32>
    %394 = vector.shape_cast %393 : vector<2xf32> to vector<2x1xf32>
    %395 = math.log %394 : vector<2x1xf32>
    %396 = vector.broadcast %395 : vector<2x1xf32> to vector<2x128xf32>
    %397 = arith.subf %392, %396 : vector<2x128xf32>
    %398 = vector.extract_strided_slice %38 {offsets = [0, 336], sizes = [2, 16], strides = [1, 1]} : vector<2x512xf32> to vector<2x16xf32>
    %399 = arith.truncf %398 : vector<2x16xf32> to vector<2x16xbf16>
    %cst_96 = arith.constant dense<0.000000e+00> : vector<2x128xf32>
    %400 = tpu.matmul %399, %39, %cst_96 {dimension_numbers = #tpu.dot_dimension_numbers<[1], [0], [0], [1], [0, 0, 1, 1], [], []>} : vector<2x16xbf16>, vector<16x128xbf16>, vector<2x128xf32> -> vector<2x128xf32>
    %401 = vector.broadcast %40 : vector<1x128xf32> to vector<2x128xf32>
    %402 = arith.addf %400, %401 : vector<2x128xf32>
    %cst_97 = arith.constant dense<0xFF800000> : vector<2xf32>
    %403 = vector.multi_reduction <maximumf>, %402, %cst_97 [1] : vector<2x128xf32> to vector<2xf32>
    %404 = vector.shape_cast %403 : vector<2xf32> to vector<2x1xf32>
    %405 = vector.broadcast %404 : vector<2x1xf32> to vector<2x128xf32>
    %406 = arith.subf %402, %405 : vector<2x128xf32>
    %407 = math.exp %406 : vector<2x128xf32>
    %408 = vector.broadcast %404 : vector<2x1xf32> to vector<2x128xf32>
    %409 = arith.subf %402, %408 : vector<2x128xf32>
    %cst_98 = arith.constant dense<0.000000e+00> : vector<2xf32>
    %410 = vector.multi_reduction <add>, %407, %cst_98 [1] : vector<2x128xf32> to vector<2xf32>
    %411 = vector.shape_cast %410 : vector<2xf32> to vector<2x1xf32>
    %412 = math.log %411 : vector<2x1xf32>
    %413 = vector.broadcast %412 : vector<2x1xf32> to vector<2x128xf32>
    %414 = arith.subf %409, %413 : vector<2x128xf32>
    %415 = vector.extract_strided_slice %38 {offsets = [0, 352], sizes = [2, 16], strides = [1, 1]} : vector<2x512xf32> to vector<2x16xf32>
    %416 = arith.truncf %415 : vector<2x16xf32> to vector<2x16xbf16>
    %cst_99 = arith.constant dense<0.000000e+00> : vector<2x128xf32>
    %417 = tpu.matmul %416, %39, %cst_99 {dimension_numbers = #tpu.dot_dimension_numbers<[1], [0], [0], [1], [0, 0, 1, 1], [], []>} : vector<2x16xbf16>, vector<16x128xbf16>, vector<2x128xf32> -> vector<2x128xf32>
    %418 = vector.broadcast %40 : vector<1x128xf32> to vector<2x128xf32>
    %419 = arith.addf %417, %418 : vector<2x128xf32>
    %cst_100 = arith.constant dense<0xFF800000> : vector<2xf32>
    %420 = vector.multi_reduction <maximumf>, %419, %cst_100 [1] : vector<2x128xf32> to vector<2xf32>
    %421 = vector.shape_cast %420 : vector<2xf32> to vector<2x1xf32>
    %422 = vector.broadcast %421 : vector<2x1xf32> to vector<2x128xf32>
    %423 = arith.subf %419, %422 : vector<2x128xf32>
    %424 = math.exp %423 : vector<2x128xf32>
    %425 = vector.broadcast %421 : vector<2x1xf32> to vector<2x128xf32>
    %426 = arith.subf %419, %425 : vector<2x128xf32>
    %cst_101 = arith.constant dense<0.000000e+00> : vector<2xf32>
    %427 = vector.multi_reduction <add>, %424, %cst_101 [1] : vector<2x128xf32> to vector<2xf32>
    %428 = vector.shape_cast %427 : vector<2xf32> to vector<2x1xf32>
    %429 = math.log %428 : vector<2x1xf32>
    %430 = vector.broadcast %429 : vector<2x1xf32> to vector<2x128xf32>
    %431 = arith.subf %426, %430 : vector<2x128xf32>
    %432 = vector.extract_strided_slice %38 {offsets = [0, 368], sizes = [2, 16], strides = [1, 1]} : vector<2x512xf32> to vector<2x16xf32>
    %433 = arith.truncf %432 : vector<2x16xf32> to vector<2x16xbf16>
    %cst_102 = arith.constant dense<0.000000e+00> : vector<2x128xf32>
    %434 = tpu.matmul %433, %39, %cst_102 {dimension_numbers = #tpu.dot_dimension_numbers<[1], [0], [0], [1], [0, 0, 1, 1], [], []>} : vector<2x16xbf16>, vector<16x128xbf16>, vector<2x128xf32> -> vector<2x128xf32>
    %435 = vector.broadcast %40 : vector<1x128xf32> to vector<2x128xf32>
    %436 = arith.addf %434, %435 : vector<2x128xf32>
    %cst_103 = arith.constant dense<0xFF800000> : vector<2xf32>
    %437 = vector.multi_reduction <maximumf>, %436, %cst_103 [1] : vector<2x128xf32> to vector<2xf32>
    %438 = vector.shape_cast %437 : vector<2xf32> to vector<2x1xf32>
    %439 = vector.broadcast %438 : vector<2x1xf32> to vector<2x128xf32>
    %440 = arith.subf %436, %439 : vector<2x128xf32>
    %441 = math.exp %440 : vector<2x128xf32>
    %442 = vector.broadcast %438 : vector<2x1xf32> to vector<2x128xf32>
    %443 = arith.subf %436, %442 : vector<2x128xf32>
    %cst_104 = arith.constant dense<0.000000e+00> : vector<2xf32>
    %444 = vector.multi_reduction <add>, %441, %cst_104 [1] : vector<2x128xf32> to vector<2xf32>
    %445 = vector.shape_cast %444 : vector<2xf32> to vector<2x1xf32>
    %446 = math.log %445 : vector<2x1xf32>
    %447 = vector.broadcast %446 : vector<2x1xf32> to vector<2x128xf32>
    %448 = arith.subf %443, %447 : vector<2x128xf32>
    %449 = vector.extract_strided_slice %38 {offsets = [0, 384], sizes = [2, 16], strides = [1, 1]} : vector<2x512xf32> to vector<2x16xf32>
    %450 = arith.truncf %449 : vector<2x16xf32> to vector<2x16xbf16>
    %cst_105 = arith.constant dense<0.000000e+00> : vector<2x128xf32>
    %451 = tpu.matmul %450, %39, %cst_105 {dimension_numbers = #tpu.dot_dimension_numbers<[1], [0], [0], [1], [0, 0, 1, 1], [], []>} : vector<2x16xbf16>, vector<16x128xbf16>, vector<2x128xf32> -> vector<2x128xf32>
    %452 = vector.broadcast %40 : vector<1x128xf32> to vector<2x128xf32>
    %453 = arith.addf %451, %452 : vector<2x128xf32>
    %cst_106 = arith.constant dense<0xFF800000> : vector<2xf32>
    %454 = vector.multi_reduction <maximumf>, %453, %cst_106 [1] : vector<2x128xf32> to vector<2xf32>
    %455 = vector.shape_cast %454 : vector<2xf32> to vector<2x1xf32>
    %456 = vector.broadcast %455 : vector<2x1xf32> to vector<2x128xf32>
    %457 = arith.subf %453, %456 : vector<2x128xf32>
    %458 = math.exp %457 : vector<2x128xf32>
    %459 = vector.broadcast %455 : vector<2x1xf32> to vector<2x128xf32>
    %460 = arith.subf %453, %459 : vector<2x128xf32>
    %cst_107 = arith.constant dense<0.000000e+00> : vector<2xf32>
    %461 = vector.multi_reduction <add>, %458, %cst_107 [1] : vector<2x128xf32> to vector<2xf32>
    %462 = vector.shape_cast %461 : vector<2xf32> to vector<2x1xf32>
    %463 = math.log %462 : vector<2x1xf32>
    %464 = vector.broadcast %463 : vector<2x1xf32> to vector<2x128xf32>
    %465 = arith.subf %460, %464 : vector<2x128xf32>
    %466 = vector.extract_strided_slice %38 {offsets = [0, 400], sizes = [2, 16], strides = [1, 1]} : vector<2x512xf32> to vector<2x16xf32>
    %467 = arith.truncf %466 : vector<2x16xf32> to vector<2x16xbf16>
    %cst_108 = arith.constant dense<0.000000e+00> : vector<2x128xf32>
    %468 = tpu.matmul %467, %39, %cst_108 {dimension_numbers = #tpu.dot_dimension_numbers<[1], [0], [0], [1], [0, 0, 1, 1], [], []>} : vector<2x16xbf16>, vector<16x128xbf16>, vector<2x128xf32> -> vector<2x128xf32>
    %469 = vector.broadcast %40 : vector<1x128xf32> to vector<2x128xf32>
    %470 = arith.addf %468, %469 : vector<2x128xf32>
    %cst_109 = arith.constant dense<0xFF800000> : vector<2xf32>
    %471 = vector.multi_reduction <maximumf>, %470, %cst_109 [1] : vector<2x128xf32> to vector<2xf32>
    %472 = vector.shape_cast %471 : vector<2xf32> to vector<2x1xf32>
    %473 = vector.broadcast %472 : vector<2x1xf32> to vector<2x128xf32>
    %474 = arith.subf %470, %473 : vector<2x128xf32>
    %475 = math.exp %474 : vector<2x128xf32>
    %476 = vector.broadcast %472 : vector<2x1xf32> to vector<2x128xf32>
    %477 = arith.subf %470, %476 : vector<2x128xf32>
    %cst_110 = arith.constant dense<0.000000e+00> : vector<2xf32>
    %478 = vector.multi_reduction <add>, %475, %cst_110 [1] : vector<2x128xf32> to vector<2xf32>
    %479 = vector.shape_cast %478 : vector<2xf32> to vector<2x1xf32>
    %480 = math.log %479 : vector<2x1xf32>
    %481 = vector.broadcast %480 : vector<2x1xf32> to vector<2x128xf32>
    %482 = arith.subf %477, %481 : vector<2x128xf32>
    %483 = vector.extract_strided_slice %38 {offsets = [0, 416], sizes = [2, 16], strides = [1, 1]} : vector<2x512xf32> to vector<2x16xf32>
    %484 = arith.truncf %483 : vector<2x16xf32> to vector<2x16xbf16>
    %cst_111 = arith.constant dense<0.000000e+00> : vector<2x128xf32>
    %485 = tpu.matmul %484, %39, %cst_111 {dimension_numbers = #tpu.dot_dimension_numbers<[1], [0], [0], [1], [0, 0, 1, 1], [], []>} : vector<2x16xbf16>, vector<16x128xbf16>, vector<2x128xf32> -> vector<2x128xf32>
    %486 = vector.broadcast %40 : vector<1x128xf32> to vector<2x128xf32>
    %487 = arith.addf %485, %486 : vector<2x128xf32>
    %cst_112 = arith.constant dense<0xFF800000> : vector<2xf32>
    %488 = vector.multi_reduction <maximumf>, %487, %cst_112 [1] : vector<2x128xf32> to vector<2xf32>
    %489 = vector.shape_cast %488 : vector<2xf32> to vector<2x1xf32>
    %490 = vector.broadcast %489 : vector<2x1xf32> to vector<2x128xf32>
    %491 = arith.subf %487, %490 : vector<2x128xf32>
    %492 = math.exp %491 : vector<2x128xf32>
    %493 = vector.broadcast %489 : vector<2x1xf32> to vector<2x128xf32>
    %494 = arith.subf %487, %493 : vector<2x128xf32>
    %cst_113 = arith.constant dense<0.000000e+00> : vector<2xf32>
    %495 = vector.multi_reduction <add>, %492, %cst_113 [1] : vector<2x128xf32> to vector<2xf32>
    %496 = vector.shape_cast %495 : vector<2xf32> to vector<2x1xf32>
    %497 = math.log %496 : vector<2x1xf32>
    %498 = vector.broadcast %497 : vector<2x1xf32> to vector<2x128xf32>
    %499 = arith.subf %494, %498 : vector<2x128xf32>
    %500 = vector.extract_strided_slice %38 {offsets = [0, 432], sizes = [2, 16], strides = [1, 1]} : vector<2x512xf32> to vector<2x16xf32>
    %501 = arith.truncf %500 : vector<2x16xf32> to vector<2x16xbf16>
    %cst_114 = arith.constant dense<0.000000e+00> : vector<2x128xf32>
    %502 = tpu.matmul %501, %39, %cst_114 {dimension_numbers = #tpu.dot_dimension_numbers<[1], [0], [0], [1], [0, 0, 1, 1], [], []>} : vector<2x16xbf16>, vector<16x128xbf16>, vector<2x128xf32> -> vector<2x128xf32>
    %503 = vector.broadcast %40 : vector<1x128xf32> to vector<2x128xf32>
    %504 = arith.addf %502, %503 : vector<2x128xf32>
    %cst_115 = arith.constant dense<0xFF800000> : vector<2xf32>
    %505 = vector.multi_reduction <maximumf>, %504, %cst_115 [1] : vector<2x128xf32> to vector<2xf32>
    %506 = vector.shape_cast %505 : vector<2xf32> to vector<2x1xf32>
    %507 = vector.broadcast %506 : vector<2x1xf32> to vector<2x128xf32>
    %508 = arith.subf %504, %507 : vector<2x128xf32>
    %509 = math.exp %508 : vector<2x128xf32>
    %510 = vector.broadcast %506 : vector<2x1xf32> to vector<2x128xf32>
    %511 = arith.subf %504, %510 : vector<2x128xf32>
    %cst_116 = arith.constant dense<0.000000e+00> : vector<2xf32>
    %512 = vector.multi_reduction <add>, %509, %cst_116 [1] : vector<2x128xf32> to vector<2xf32>
    %513 = vector.shape_cast %512 : vector<2xf32> to vector<2x1xf32>
    %514 = math.log %513 : vector<2x1xf32>
    %515 = vector.broadcast %514 : vector<2x1xf32> to vector<2x128xf32>
    %516 = arith.subf %511, %515 : vector<2x128xf32>
    %517 = vector.extract_strided_slice %38 {offsets = [0, 448], sizes = [2, 16], strides = [1, 1]} : vector<2x512xf32> to vector<2x16xf32>
    %518 = arith.truncf %517 : vector<2x16xf32> to vector<2x16xbf16>
    %cst_117 = arith.constant dense<0.000000e+00> : vector<2x128xf32>
    %519 = tpu.matmul %518, %39, %cst_117 {dimension_numbers = #tpu.dot_dimension_numbers<[1], [0], [0], [1], [0, 0, 1, 1], [], []>} : vector<2x16xbf16>, vector<16x128xbf16>, vector<2x128xf32> -> vector<2x128xf32>
    %520 = vector.broadcast %40 : vector<1x128xf32> to vector<2x128xf32>
    %521 = arith.addf %519, %520 : vector<2x128xf32>
    %cst_118 = arith.constant dense<0xFF800000> : vector<2xf32>
    %522 = vector.multi_reduction <maximumf>, %521, %cst_118 [1] : vector<2x128xf32> to vector<2xf32>
    %523 = vector.shape_cast %522 : vector<2xf32> to vector<2x1xf32>
    %524 = vector.broadcast %523 : vector<2x1xf32> to vector<2x128xf32>
    %525 = arith.subf %521, %524 : vector<2x128xf32>
    %526 = math.exp %525 : vector<2x128xf32>
    %527 = vector.broadcast %523 : vector<2x1xf32> to vector<2x128xf32>
    %528 = arith.subf %521, %527 : vector<2x128xf32>
    %cst_119 = arith.constant dense<0.000000e+00> : vector<2xf32>
    %529 = vector.multi_reduction <add>, %526, %cst_119 [1] : vector<2x128xf32> to vector<2xf32>
    %530 = vector.shape_cast %529 : vector<2xf32> to vector<2x1xf32>
    %531 = math.log %530 : vector<2x1xf32>
    %532 = vector.broadcast %531 : vector<2x1xf32> to vector<2x128xf32>
    %533 = arith.subf %528, %532 : vector<2x128xf32>
    %534 = vector.extract_strided_slice %38 {offsets = [0, 464], sizes = [2, 16], strides = [1, 1]} : vector<2x512xf32> to vector<2x16xf32>
    %535 = arith.truncf %534 : vector<2x16xf32> to vector<2x16xbf16>
    %cst_120 = arith.constant dense<0.000000e+00> : vector<2x128xf32>
    %536 = tpu.matmul %535, %39, %cst_120 {dimension_numbers = #tpu.dot_dimension_numbers<[1], [0], [0], [1], [0, 0, 1, 1], [], []>} : vector<2x16xbf16>, vector<16x128xbf16>, vector<2x128xf32> -> vector<2x128xf32>
    %537 = vector.broadcast %40 : vector<1x128xf32> to vector<2x128xf32>
    %538 = arith.addf %536, %537 : vector<2x128xf32>
    %cst_121 = arith.constant dense<0xFF800000> : vector<2xf32>
    %539 = vector.multi_reduction <maximumf>, %538, %cst_121 [1] : vector<2x128xf32> to vector<2xf32>
    %540 = vector.shape_cast %539 : vector<2xf32> to vector<2x1xf32>
    %541 = vector.broadcast %540 : vector<2x1xf32> to vector<2x128xf32>
    %542 = arith.subf %538, %541 : vector<2x128xf32>
    %543 = math.exp %542 : vector<2x128xf32>
    %544 = vector.broadcast %540 : vector<2x1xf32> to vector<2x128xf32>
    %545 = arith.subf %538, %544 : vector<2x128xf32>
    %cst_122 = arith.constant dense<0.000000e+00> : vector<2xf32>
    %546 = vector.multi_reduction <add>, %543, %cst_122 [1] : vector<2x128xf32> to vector<2xf32>
    %547 = vector.shape_cast %546 : vector<2xf32> to vector<2x1xf32>
    %548 = math.log %547 : vector<2x1xf32>
    %549 = vector.broadcast %548 : vector<2x1xf32> to vector<2x128xf32>
    %550 = arith.subf %545, %549 : vector<2x128xf32>
    %551 = vector.extract_strided_slice %38 {offsets = [0, 480], sizes = [2, 16], strides = [1, 1]} : vector<2x512xf32> to vector<2x16xf32>
    %552 = arith.truncf %551 : vector<2x16xf32> to vector<2x16xbf16>
    %cst_123 = arith.constant dense<0.000000e+00> : vector<2x128xf32>
    %553 = tpu.matmul %552, %39, %cst_123 {dimension_numbers = #tpu.dot_dimension_numbers<[1], [0], [0], [1], [0, 0, 1, 1], [], []>} : vector<2x16xbf16>, vector<16x128xbf16>, vector<2x128xf32> -> vector<2x128xf32>
    %554 = vector.broadcast %40 : vector<1x128xf32> to vector<2x128xf32>
    %555 = arith.addf %553, %554 : vector<2x128xf32>
    %cst_124 = arith.constant dense<0xFF800000> : vector<2xf32>
    %556 = vector.multi_reduction <maximumf>, %555, %cst_124 [1] : vector<2x128xf32> to vector<2xf32>
    %557 = vector.shape_cast %556 : vector<2xf32> to vector<2x1xf32>
    %558 = vector.broadcast %557 : vector<2x1xf32> to vector<2x128xf32>
    %559 = arith.subf %555, %558 : vector<2x128xf32>
    %560 = math.exp %559 : vector<2x128xf32>
    %561 = vector.broadcast %557 : vector<2x1xf32> to vector<2x128xf32>
    %562 = arith.subf %555, %561 : vector<2x128xf32>
    %cst_125 = arith.constant dense<0.000000e+00> : vector<2xf32>
    %563 = vector.multi_reduction <add>, %560, %cst_125 [1] : vector<2x128xf32> to vector<2xf32>
    %564 = vector.shape_cast %563 : vector<2xf32> to vector<2x1xf32>
    %565 = math.log %564 : vector<2x1xf32>
    %566 = vector.broadcast %565 : vector<2x1xf32> to vector<2x128xf32>
    %567 = arith.subf %562, %566 : vector<2x128xf32>
    %568 = vector.extract_strided_slice %38 {offsets = [0, 496], sizes = [2, 16], strides = [1, 1]} : vector<2x512xf32> to vector<2x16xf32>
    %569 = arith.truncf %568 : vector<2x16xf32> to vector<2x16xbf16>
    %cst_126 = arith.constant dense<0.000000e+00> : vector<2x128xf32>
    %570 = tpu.matmul %569, %39, %cst_126 {dimension_numbers = #tpu.dot_dimension_numbers<[1], [0], [0], [1], [0, 0, 1, 1], [], []>} : vector<2x16xbf16>, vector<16x128xbf16>, vector<2x128xf32> -> vector<2x128xf32>
    %571 = vector.broadcast %40 : vector<1x128xf32> to vector<2x128xf32>
    %572 = arith.addf %570, %571 : vector<2x128xf32>
    %cst_127 = arith.constant dense<0xFF800000> : vector<2xf32>
    %573 = vector.multi_reduction <maximumf>, %572, %cst_127 [1] : vector<2x128xf32> to vector<2xf32>
    %574 = vector.shape_cast %573 : vector<2xf32> to vector<2x1xf32>
    %575 = vector.broadcast %574 : vector<2x1xf32> to vector<2x128xf32>
    %576 = arith.subf %572, %575 : vector<2x128xf32>
    %577 = math.exp %576 : vector<2x128xf32>
    %578 = vector.broadcast %574 : vector<2x1xf32> to vector<2x128xf32>
    %579 = arith.subf %572, %578 : vector<2x128xf32>
    %cst_128 = arith.constant dense<0.000000e+00> : vector<2xf32>
    %580 = vector.multi_reduction <add>, %577, %cst_128 [1] : vector<2x128xf32> to vector<2xf32>
    %581 = vector.shape_cast %580 : vector<2xf32> to vector<2x1xf32>
    %582 = math.log %581 : vector<2x1xf32>
    %583 = vector.broadcast %582 : vector<2x1xf32> to vector<2x128xf32>
    %584 = arith.subf %579, %583 : vector<2x128xf32>
    %585 = tpu.concatenate %57, %74, %91, %108, %125, %142, %159, %176, %193, %210, %227, %244, %261, %278, %295, %312 in 1 : vector<2x128xf32>, vector<2x128xf32>, vector<2x128xf32>, vector<2x128xf32>, vector<2x128xf32>, vector<2x128xf32>, vector<2x128xf32>, vector<2x128xf32>, vector<2x128xf32>, vector<2x128xf32>, vector<2x128xf32>, vector<2x128xf32>, vector<2x128xf32>, vector<2x128xf32>, vector<2x128xf32>, vector<2x128xf32> -> vector<2x2048xf32>
    %586 = tpu.concatenate %329, %346, %363, %380, %397, %414, %431, %448, %465, %482, %499, %516, %533, %550, %567, %584 in 1 : vector<2x128xf32>, vector<2x128xf32>, vector<2x128xf32>, vector<2x128xf32>, vector<2x128xf32>, vector<2x128xf32>, vector<2x128xf32>, vector<2x128xf32>, vector<2x128xf32>, vector<2x128xf32>, vector<2x128xf32>, vector<2x128xf32>, vector<2x128xf32>, vector<2x128xf32>, vector<2x128xf32>, vector<2x128xf32> -> vector<2x2048xf32>
    %587 = tpu.concatenate %585, %586 in 1 : vector<2x2048xf32>, vector<2x2048xf32> -> vector<2x4096xf32>
    %c0_129 = arith.constant 0 : index
    %c0_130 = arith.constant 0 : index
    %588 = vector.load %arg13[%c0_129, %c0_130] : memref<2x4096xf32, #tpu.memory_space<vmem>>, vector<2x4096xf32>
    tpu.vector_store %arg13[%c0_129, %c0_130], %587 {strides = array<i32>} : memref<2x4096xf32, #tpu.memory_space<vmem>>, vector<2x4096xf32>,
    return
  }
}

</mosaic_0001>

<llo_original>
// kernel: tpu_custom_call.1
$region0: #{tpu_custom_call.1}
  #allocation0 [shape = 'u32[]', space=smem, size = 0x4, offset = 0x4, fixed_abs, tag = 'smem constant byte address 0x4 - core index']
  #allocation1 [shape = 'u32[144,128]{1,0:T(1,128)}', space=vmem, size = 0x12000, scoped, tag = 'internal scratch']
  %s0 = inlined_call_operand.hbm [shape: f32[2,32], index: 0, kind: input, shape index: {}]
  %s1 = inlined_call_operand.hbm [shape: bf16[32,80], index: 1, kind: input, shape index: {}]
  %s2 = inlined_call_operand.vmem [shape: f32[1,80], index: 2, kind: input, shape index: {}]
  %s3 = inlined_call_operand.hbm [shape: bf16[80,320], index: 3, kind: input, shape index: {}]
  %s4 = inlined_call_operand.hbm [shape: f32[1,320], index: 4, kind: input, shape index: {}]
  %s5 = inlined_call_operand.hbm [shape: bf16[320,512], index: 5, kind: input, shape index: {}]
  %s6 = inlined_call_operand.vmem [shape: f32[1,512], index: 6, kind: input, shape index: {}]
  %s7 = inlined_call_operand.hbm [shape: bf16[512,512], index: 7, kind: input, shape index: {}]
  %s8 = inlined_call_operand.vmem [shape: f32[1,512], index: 8, kind: input, shape index: {}]
  %s9 = inlined_call_operand.hbm [shape: bf16[512,512], index: 9, kind: input, shape index: {}]
  %s10 = inlined_call_operand.vmem [shape: f32[1,512], index: 10, kind: input, shape index: {}]
  %s11 = inlined_call_operand.vmem [shape: bf16[16,128], index: 11, kind: input, shape index: {}]
  %s12 = inlined_call_operand.vmem [shape: f32[1,128], index: 12, kind: input, shape index: {}]
  %s13 = inlined_call_operand.hbm [shape: f32[2,4096], index: 13, kind: output, shape index: {}]
  %s14 = sld [smem:[#allocation0]]
  $region90: #{tpu_custom_call.1} parent=0
    _
  %s16 = ssub.s32 1, %s14
  %s17 = scalar_select 0, %s16, %s14
  $region1: #{tpu_custom_call.1} parent=0
    #allocation2 [shape = 'u8[1024]{0}', space=vmem, size = 0x400, scoped, tag = 'input window, operand 0, single buffered']
    #allocation3 [shape = 's32[1]{0}', space=sflag, size = 0x4, scoped, tag = 'scoped memory for tpu_custom_call.1']
    #allocation4 [shape = 's32[1]{0}', space=sflag, size = 0x4, scoped, tag = 'scoped memory for tpu_custom_call.1']
    #allocation5 [shape = 'u8[8192]{0}', space=vmem, size = 0x2000, scoped, tag = 'input window, operand 1, single buffered']
    #allocation6 [shape = 's32[1]{0}', space=sflag, size = 0x4, scoped, tag = 'scoped memory for tpu_custom_call.1']
    #allocation7 [shape = 'u8[61440]{0}', space=vmem, size = 0xf000, scoped, tag = 'input window, operand 3, single buffered']
    #allocation8 [shape = 'u8[1536]{0}', space=vmem, size = 0x800, scoped, tag = 'input window, operand 4, single buffered']
    #allocation9 [shape = 's32[1]{0}', space=sflag, size = 0x4, scoped, tag = 'scoped memory for tpu_custom_call.1']
    #allocation10 [shape = 'u8[327680]{0}', space=vmem, size = 0x50000, scoped, tag = 'input window, operand 5, single buffered']
    #allocation11 [shape = 'u8[524288]{0}', space=vmem, size = 0x80000, scoped, tag = 'input window, operand 7, single buffered']
    #allocation12 [shape = 's32[1]{0}', space=sflag, size = 0x4, scoped, tag = 'scoped memory for tpu_custom_call.1']
    #allocation13 [shape = 'u8[524288]{0}', space=vmem, size = 0x80000, scoped, tag = 'input window, operand 9, single buffered']
    #allocation14 [shape = 'u8[32768]{0}', space=vmem, size = 0x8000, scoped, tag = 'output window, operand 0, single buffered']
    %18 = vsyncpa [#allocation3], 0
    %19 = vsyncpa [#allocation6], 0
    %20 = vsyncpa [#allocation9], 0
    %21 = vsyncpa [#allocation12], 0
    %22 = vsyncpa [#allocation4], 0
    // Predicated region
    $region2: #{tpu_custom_call.1} parent=1 // pred_check
      _
    $region3: #{tpu_custom_call.1} parent=1 // pred_check_branch
      %24 = sbr.rel (0) target = $region5
    $region4: #{tpu_custom_call.1} parent=1 // pred_region
      %s26 = ssub.s32 32, 32
      %27 = vsyncadd [#allocation3], %s26
      %s29 = sshll.u32 [#allocation2], 4
      %s30 = int_to_ptr.vmem [resolvable:$true] %s29
      %32 = dma.hbm_to_vmem [thread:$0]  %s0, 32, %s30, [#allocation3]
    $region5: #{tpu_custom_call.1} parent=1 // pred_fallthru
      _
    // Predicated region
    $region6: #{tpu_custom_call.1} parent=1 // pred_check
      _
    $region7: #{tpu_custom_call.1} parent=1 // pred_check_branch
      %34 = sbr.rel (0) target = $region9
    $region8: #{tpu_custom_call.1} parent=1 // pred_region
      %s36 = ssub.s32 256, 256
      %37 = vsyncadd [#allocation6], %s36
      %s38 = sshll.u32 [#allocation5], 4
      %s39 = int_to_ptr.vmem [resolvable:$true] %s38
      %44 = dma.hbm_to_vmem [thread:$0]  %s1, 256, %s39, [#allocation6], 64, 64, 4
    $region9: #{tpu_custom_call.1} parent=1 // pred_fallthru
      _
    // Predicated region
    $region10: #{tpu_custom_call.1} parent=1 // pred_check
      _
    $region11: #{tpu_custom_call.1} parent=1 // pred_check_branch
      %46 = sbr.rel (0) target = $region13
    $region12: #{tpu_custom_call.1} parent=1 // pred_region
      _
    $region13: #{tpu_custom_call.1} parent=1 // pred_fallthru
      _
    // Predicated region
    $region14: #{tpu_custom_call.1} parent=1 // pred_check
      _
    $region15: #{tpu_custom_call.1} parent=1 // pred_check_branch
      %48 = sbr.rel (0) target = $region17
    $region16: #{tpu_custom_call.1} parent=1 // pred_region
      %s50 = ssub.s32 1920, 1920
      %51 = vsyncadd [#allocation6], %s50
      %s52 = sshll.u32 [#allocation7], 4
      %s53 = int_to_ptr.vmem [resolvable:$true] %s52
      %58 = dma.hbm_to_vmem [thread:$0]  %s3, 1920, %s53, [#allocation6], 192, 192, 12
    $region17: #{tpu_custom_call.1} parent=1 // pred_fallthru
      _
    // Predicated region
    $region18: #{tpu_custom_call.1} parent=1 // pred_check
      _
    $region19: #{tpu_custom_call.1} parent=1 // pred_check_branch
      %60 = sbr.rel (0) target = $region21
    $region20: #{tpu_custom_call.1} parent=1 // pred_region
      %s62 = ssub.s32 48, 48
      %63 = vsyncadd [#allocation9], %s62
      %s65 = sshll.u32 [#allocation8], 4
      %s66 = int_to_ptr.vmem [resolvable:$true] %s65
      %68 = dma.hbm_to_vmem [thread:$0]  %s4, 48, %s66, [#allocation9]
    $region21: #{tpu_custom_call.1} parent=1 // pred_fallthru
      _
    // Predicated region
    $region22: #{tpu_custom_call.1} parent=1 // pred_check
      _
    $region23: #{tpu_custom_call.1} parent=1 // pred_check_branch
      %70 = sbr.rel (0) target = $region25
    $region24: #{tpu_custom_call.1} parent=1 // pred_region
      %s72 = ssub.s32 10240, 10240
      %73 = vsyncadd [#allocation9], %s72
      %s74 = sshll.u32 [#allocation10], 4
      %s75 = int_to_ptr.vmem [resolvable:$true] %s74
      %80 = dma.hbm_to_vmem [thread:$0]  %s5, 10240, %s75, [#allocation9], 256, 256, 16
    $region25: #{tpu_custom_call.1} parent=1 // pred_fallthru
      _
    // Predicated region
    $region26: #{tpu_custom_call.1} parent=1 // pred_check
      _
    $region27: #{tpu_custom_call.1} parent=1 // pred_check_branch
      %82 = sbr.rel (0) target = $region29
    $region28: #{tpu_custom_call.1} parent=1 // pred_region
      _
    $region29: #{tpu_custom_call.1} parent=1 // pred_fallthru
      _
    // Predicated region
    $region30: #{tpu_custom_call.1} parent=1 // pred_check
      _
    $region31: #{tpu_custom_call.1} parent=1 // pred_check_branch
      %84 = sbr.rel (0) target = $region33
    $region32: #{tpu_custom_call.1} parent=1 // pred_region
      %s86 = ssub.s32 16384, 16384
      %87 = vsyncadd [#allocation12], %s86
      %s88 = sshll.u32 [#allocation11], 4
      %s89 = int_to_ptr.vmem [resolvable:$true] %s88
      %94 = dma.hbm_to_vmem [thread:$0]  %s7, 16384, %s89, [#allocation12], 256, 256, 16
    $region33: #{tpu_custom_call.1} parent=1 // pred_fallthru
      _
    // Predicated region
    $region34: #{tpu_custom_call.1} parent=1 // pred_check
      _
    $region35: #{tpu_custom_call.1} parent=1 // pred_check_branch
      %96 = sbr.rel (0) target = $region37
    $region36: #{tpu_custom_call.1} parent=1 // pred_region
      _
    $region37: #{tpu_custom_call.1} parent=1 // pred_fallthru
      _
    // Predicated region
    $region38: #{tpu_custom_call.1} parent=1 // pred_check
      _
    $region39: #{tpu_custom_call.1} parent=1 // pred_check_branch
      %98 = sbr.rel (0) target = $region41
    $region40: #{tpu_custom_call.1} parent=1 // pred_region
      %s100 = ssub.s32 16384, 16384
      %101 = vsyncadd [#allocation12], %s100
      %s102 = sshll.u32 [#allocation13], 4
      %s103 = int_to_ptr.vmem [resolvable:$true] %s102
      %108 = dma.hbm_to_vmem [thread:$0]  %s9, 16384, %s103, [#allocation12], 256, 256, 16
    $region41: #{tpu_custom_call.1} parent=1 // pred_fallthru
      _
    // Predicated region
    $region42: #{tpu_custom_call.1} parent=1 // pred_check
      _
    $region43: #{tpu_custom_call.1} parent=1 // pred_check_branch
      %110 = sbr.rel (0) target = $region45
    $region44: #{tpu_custom_call.1} parent=1 // pred_region
      _
    $region45: #{tpu_custom_call.1} parent=1 // pred_fallthru
      _
    // Predicated region
    $region46: #{tpu_custom_call.1} parent=1 // pred_check
      _
    $region47: #{tpu_custom_call.1} parent=1 // pred_check_branch
      %112 = sbr.rel (0) target = $region49
    $region48: #{tpu_custom_call.1} parent=1 // pred_region
      _
    $region49: #{tpu_custom_call.1} parent=1 // pred_fallthru
      _
    // Predicated region
    $region50: #{tpu_custom_call.1} parent=1 // pred_check
      _
    $region51: #{tpu_custom_call.1} parent=1 // pred_check_branch
      %114 = sbr.rel (0) target = $region53
    $region52: #{tpu_custom_call.1} parent=1 // pred_region
      _
    $region53: #{tpu_custom_call.1} parent=1 // pred_fallthru
      _
    // Predicated region
    $region54: #{tpu_custom_call.1} parent=1 // pred_check
      _
    $region55: #{tpu_custom_call.1} parent=1 // pred_check_branch
      %116 = sbr.rel (0) target = $region57
    $region56: #{tpu_custom_call.1} parent=1 // pred_region
      %117 = dma.done [#allocation3], 32
    $region57: #{tpu_custom_call.1} parent=1 // pred_fallthru
      _
    // Predicated region
    $region58: #{tpu_custom_call.1} parent=1 // pred_check
      _
    $region59: #{tpu_custom_call.1} parent=1 // pred_check_branch
      %119 = sbr.rel (0) target = $region61
    $region60: #{tpu_custom_call.1} parent=1 // pred_region
      %120 = dma.done [#allocation6], 256
    $region61: #{tpu_custom_call.1} parent=1 // pred_fallthru
      _
    // Predicated region
    $region62: #{tpu_custom_call.1} parent=1 // pred_check
      _
    $region63: #{tpu_custom_call.1} parent=1 // pred_check_branch
      %122 = sbr.rel (0) target = $region65
    $region64: #{tpu_custom_call.1} parent=1 // pred_region
      %123 = dma.done [#allocation6], 1920
    $region65: #{tpu_custom_call.1} parent=1 // pred_fallthru
      _
    // Predicated region
    $region66: #{tpu_custom_call.1} parent=1 // pred_check
      _
    $region67: #{tpu_custom_call.1} parent=1 // pred_check_branch
      %125 = sbr.rel (0) target = $region69
    $region68: #{tpu_custom_call.1} parent=1 // pred_region
      %126 = dma.done [#allocation9], 48
    $region69: #{tpu_custom_call.1} parent=1 // pred_fallthru
      _
    // Predicated region
    $region70: #{tpu_custom_call.1} parent=1 // pred_check
      _
    $region71: #{tpu_custom_call.1} parent=1 // pred_check_branch
      %128 = sbr.rel (0) target = $region73
    $region72: #{tpu_custom_call.1} parent=1 // pred_region
      %129 = dma.done [#allocation9], 10240
    $region73: #{tpu_custom_call.1} parent=1 // pred_fallthru
      _
    // Predicated region
    $region74: #{tpu_custom_call.1} parent=1 // pred_check
      _
    $region75: #{tpu_custom_call.1} parent=1 // pred_check_branch
      %131 = sbr.rel (0) target = $region77
    $region76: #{tpu_custom_call.1} parent=1 // pred_region
      %132 = dma.done [#allocation12], 16384
    $region77: #{tpu_custom_call.1} parent=1 // pred_fallthru
      _
    // Predicated region
    $region78: #{tpu_custom_call.1} parent=1 // pred_check
      _
    $region79: #{tpu_custom_call.1} parent=1 // pred_check_branch
      %134 = sbr.rel (0) target = $region81
    $region80: #{tpu_custom_call.1} parent=1 // pred_region
      %135 = dma.done [#allocation12], 16384
    $region81: #{tpu_custom_call.1} parent=1 // pred_fallthru
      _
    %v137 = vld [vmem:[#allocation2] sm:$0x3]
    %v138 = vpack.c.bf16 %v137, %v137
    %v139 = vld [vmem:[#allocation5] sm:$0xf]
    %v140 = vld [vmem:[#allocation5 + $0x4] sm:$0xf]
    %v141 = vld [vmem:[#allocation5 + $0x8] sm:$0xf]
    %v142 = vld [vmem:[#allocation5 + $0xc] sm:$0xf]
    %v143 = vld [vmem:[%s2] sm:$0x1]
    %v145 = vlaneseq
    %v146 = vshrl.u32 %v145, 7
    %v147 = vsub.s32 0, %v146
    %v148 = vrot.slane %v143, %v147
    %v154 = vunpack.c.l.b16 %v139
    %v155 = vunpack.c.l.b16 %v140
    %v156 = vunpack.c.l.b16 %v141
    %v157 = vunpack.c.l.b16 %v142
    %v158 = vpack.c.b16 %v155, %v154
    %v159 = vpack.c.b16 %v157, %v156
    %vm162 = vcmask 261120
    %v164 = vsel %vm162, %v138, 0
    %166 = vmatprep.subr.bf16.mxu0 0
    %167 = vmatpush1.bf16.msra.mxu0 %v158
    %168 = vmatprep.subr.bf16.mxu0 0
    %169 = vmatpush1.bf16.msra.mxu0 %v159
    %170 = vmatprep.subr.bf16.mxu0 0
    %171 = vmatpush1.bf16.msra.mxu0 0
    %172 = vmatprep.subr.bf16.mxu0 0
    %173 = vmatpush1.bf16.msra.mxu0 0
    %174 = vmatprep.subr.bf16.mxu0 0
    %175 = vmatpush1.bf16.msra.mxu0 0
    %176 = vmatprep.subr.bf16.mxu0 0
    %177 = vmatpush1.bf16.msra.mxu0 0
    %178 = vmatprep.subr.bf16.mxu0 0
    %179 = vmatpush1.bf16.msra.mxu0 0
    %180 = vmatprep.subr.bf16.mxu0 0
    %181 = vmatpush1.bf16.msra.mxu0 0
    %182 = vmatprep.subr.bf16.mxu0 0
    %183 = vmatpush1.bf16.msra.mxu0 0
    %184 = vmatprep.subr.bf16.mxu0 0
    %185 = vmatpush1.bf16.msra.mxu0 0
    %186 = vmatprep.subr.bf16.mxu0 0
    %187 = vmatpush1.bf16.msra.mxu0 0
    %188 = vmatprep.subr.bf16.mxu0 0
    %189 = vmatpush1.bf16.msra.mxu0 0
    %190 = vmatprep.subr.bf16.mxu0 0
    %191 = vmatpush1.bf16.msra.mxu0 0
    %192 = vmatprep.subr.bf16.mxu0 0
    %193 = vmatpush1.bf16.msra.mxu0 0
    %194 = vmatprep.subr.bf16.mxu0 0
    %195 = vmatpush1.bf16.msra.mxu0 0
    %196 = vmatprep.subr.bf16.mxu0 0
    %197 = vmatpush1.bf16.msra.mxu0 0
    %198 = vmatprep.mubr.bf16.mxu0 0
    %199 = vmatmul.mubr.bf16.gmra.mrb[0].mxu0 %v164
    %v200 = vpop.f32.mrb[0].mxu0
    %v201 = vadd.f32 %v148, %v200
    %v202 = vpop.f32.mrb[0].mxu0
    %v203 = vpop.f32.mrb[0].mxu0
    %v204 = vpop.f32.mrb[0].mxu0
    %205 = vdwg.mxu0
    %v206 = vpack.c.bf16 %v201, %v201
    %v207 = vld [vmem:[#allocation7] sm:$0xff]
    %v208 = vld [vmem:[#allocation7 + $0x8] sm:$0xf]
    %v209 = vld [vmem:[#allocation7 + $0xc] sm:$0xff]
    %v210 = vld [vmem:[#allocation7 + $0x14] sm:$0xf]
    %v211 = vld [vmem:[#allocation7 + $0x18] sm:$0xff]
    %v212 = vld [vmem:[#allocation7 + $0x20] sm:$0xf]
    %v213 = vld [vmem:[#allocation7 + $0x24] sm:$0xff]
    %v214 = vld [vmem:[#allocation7 + $0x2c] sm:$0xf]
    %v215 = vld [vmem:[#allocation7 + $0x30] sm:$0xff]
    %v216 = vld [vmem:[#allocation7 + $0x38] sm:$0xf]
    %v217 = vld [vmem:[#allocation7 + $0x3c] sm:$0xff]
    %v218 = vld [vmem:[#allocation7 + $0x44] sm:$0xf]
    %v219 = vld [vmem:[#allocation7 + $0x48] sm:$0xff]
    %v220 = vld [vmem:[#allocation7 + $0x50] sm:$0xf]
    %v221 = vld [vmem:[#allocation7 + $0x54] sm:$0xff]
    %v222 = vld [vmem:[#allocation7 + $0x5c] sm:$0xf]
    %v223 = vld [vmem:[#allocation7 + $0x60] sm:$0xff]
    %v224 = vld [vmem:[#allocation7 + $0x68] sm:$0xf]
    %v225 = vld [vmem:[#allocation7 + $0x6c] sm:$0xff]
    %v226 = vld [vmem:[#allocation7 + $0x74] sm:$0xf]
    %v227 = vld [vmem:[#allocation8] sm:$0x7]
    %v229 = vlaneseq
    %v230 = vshrl.u32 %v229, 7
    %v231 = vsub.s32 0, %v230
    %v232 = vrot.slane %v227, %v231
    %v233 = vlaneseq
    %v234 = vshrl.u32 %v233, 7
    %v235 = vsub.s32 1, %v234
    %v236 = vrot.slane %v227, %v235
    %v237 = vlaneseq
    %v238 = vshrl.u32 %v237, 7
    %v239 = vsub.s32 2, %v238
    %v240 = vrot.slane %v227, %v239
    %v264 = vunpack.c.l.b16 %v207
    %v265 = vunpack.c.h.b16 %v207
    %v266 = vunpack.c.l.b16 %v208
    %v267 = vunpack.c.l.b16 %v209
    %v268 = vunpack.c.h.b16 %v209
    %v269 = vunpack.c.l.b16 %v210
    %v270 = vunpack.c.l.b16 %v211
    %v271 = vunpack.c.h.b16 %v211
    %v272 = vunpack.c.l.b16 %v212
    %v273 = vunpack.c.l.b16 %v213
    %v274 = vunpack.c.h.b16 %v213
    %v275 = vunpack.c.l.b16 %v214
    %v276 = vunpack.c.l.b16 %v215
    %v277 = vunpack.c.h.b16 %v215
    %v278 = vunpack.c.l.b16 %v216
    %v279 = vunpack.c.l.b16 %v217
    %v280 = vunpack.c.h.b16 %v217
    %v281 = vunpack.c.l.b16 %v218
    %v282 = vunpack.c.l.b16 %v219
    %v283 = vunpack.c.h.b16 %v219
    %v284 = vunpack.c.l.b16 %v220
    %v285 = vunpack.c.l.b16 %v221
    %v286 = vunpack.c.h.b16 %v221
    %v287 = vunpack.c.l.b16 %v222
    %v288 = vunpack.c.l.b16 %v223
    %v289 = vunpack.c.h.b16 %v223
    %v290 = vunpack.c.l.b16 %v224
    %v291 = vunpack.c.l.b16 %v225
    %v292 = vunpack.c.h.b16 %v225
    %v293 = vunpack.c.l.b16 %v226
    %v294 = vpack.c.b16 %v267, %v264
    %v295 = vpack.c.b16 %v268, %v265
    %v296 = vpack.c.b16 %v269, %v266
    %v297 = vpack.c.b16 %v273, %v270
    %v298 = vpack.c.b16 %v274, %v271
    %v299 = vpack.c.b16 %v275, %v272
    %v300 = vpack.c.b16 %v279, %v276
    %v301 = vpack.c.b16 %v280, %v277
    %v302 = vpack.c.b16 %v281, %v278
    %v303 = vpack.c.b16 %v285, %v282
    %v304 = vpack.c.b16 %v286, %v283
    %v305 = vpack.c.b16 %v287, %v284
    %v306 = vpack.c.b16 %v291, %v288
    %v307 = vpack.c.b16 %v292, %v289
    %v308 = vpack.c.b16 %v293, %v290
    %vm324 = vcmask 654336
    %v326 = vsel %vm324, %v206, 0
    %328 = vmatprep.subr.bf16.mxu0 %v295
    %329 = vmatpush1.bf16.msra.mxu0 %v294
    %330 = vmatprep.subr.bf16.mxu0 %v298
    %331 = vmatpush1.bf16.msra.mxu0 %v297
    %332 = vmatprep.subr.bf16.mxu0 %v301
    %333 = vmatpush1.bf16.msra.mxu0 %v300
    %334 = vmatprep.subr.bf16.mxu0 %v304
    %335 = vmatpush1.bf16.msra.mxu0 %v303
    %336 = vmatprep.subr.bf16.mxu0 %v307
    %337 = vmatpush1.bf16.msra.mxu0 %v306
    %338 = vmatprep.subr.bf16.mxu0 0
    %339 = vmatpush1.bf16.msra.mxu0 0
    %340 = vmatprep.subr.bf16.mxu0 0
    %341 = vmatpush1.bf16.msra.mxu0 0
    %342 = vmatprep.subr.bf16.mxu0 0
    %343 = vmatpush1.bf16.msra.mxu0 0
    %344 = vmatprep.subr.bf16.mxu0 0
    %345 = vmatpush1.bf16.msra.mxu0 0
    %346 = vmatprep.subr.bf16.mxu0 0
    %347 = vmatpush1.bf16.msra.mxu0 0
    %348 = vmatprep.subr.bf16.mxu0 0
    %349 = vmatpush1.bf16.msra.mxu0 0
    %350 = vmatprep.subr.bf16.mxu0 0
    %351 = vmatpush1.bf16.msra.mxu0 0
    %352 = vmatprep.subr.bf16.mxu0 0
    %353 = vmatpush1.bf16.msra.mxu0 0
    %354 = vmatprep.subr.bf16.mxu0 0
    %355 = vmatpush1.bf16.msra.mxu0 0
    %356 = vmatprep.subr.bf16.mxu0 0
    %357 = vmatpush1.bf16.msra.mxu0 0
    %358 = vmatprep.subr.bf16.mxu0 0
    %359 = vmatpush1.bf16.msra.mxu0 0
    %360 = vmatprep.mubr.bf16.mxu0 0
    %361 = vmatmul.mubr.bf16.gmra.mrb[0].mxu0 %v326
    %v362 = vpop.f32.mrb[0].mxu0
    %v363 = vadd.f32 %v232, %v362
    %v364 = vpop.f32.mrb[0].mxu0
    %v365 = vadd.f32 %v236, %v364
    %v366 = vpop.f32.mrb[0].mxu0
    %v367 = vpop.f32.mrb[0].mxu0
    %368 = vdwg.mxu0
    %369 = vmatprep.subr.bf16.mxu0 0
    %370 = vmatpush1.bf16.msra.mxu0 %v296
    %371 = vmatprep.subr.bf16.mxu0 0
    %372 = vmatpush1.bf16.msra.mxu0 %v299
    %373 = vmatprep.subr.bf16.mxu0 0
    %374 = vmatpush1.bf16.msra.mxu0 %v302
    %375 = vmatprep.subr.bf16.mxu0 0
    %376 = vmatpush1.bf16.msra.mxu0 %v305
    %377 = vmatprep.subr.bf16.mxu0 0
    %378 = vmatpush1.bf16.msra.mxu0 %v308
    %379 = vmatprep.subr.bf16.mxu0 0
    %380 = vmatpush1.bf16.msra.mxu0 0
    %381 = vmatprep.subr.bf16.mxu0 0
    %382 = vmatpush1.bf16.msra.mxu0 0
    %383 = vmatprep.subr.bf16.mxu0 0
    %384 = vmatpush1.bf16.msra.mxu0 0
    %385 = vmatprep.subr.bf16.mxu0 0
    %386 = vmatpush1.bf16.msra.mxu0 0
    %387 = vmatprep.subr.bf16.mxu0 0
    %388 = vmatpush1.bf16.msra.mxu0 0
    %389 = vmatprep.subr.bf16.mxu0 0
    %390 = vmatpush1.bf16.msra.mxu0 0
    %391 = vmatprep.subr.bf16.mxu0 0
    %392 = vmatpush1.bf16.msra.mxu0 0
    %393 = vmatprep.subr.bf16.mxu0 0
    %394 = vmatpush1.bf16.msra.mxu0 0
    %395 = vmatprep.subr.bf16.mxu0 0
    %396 = vmatpush1.bf16.msra.mxu0 0
    %397 = vmatprep.subr.bf16.mxu0 0
    %398 = vmatpush1.bf16.msra.mxu0 0
    %399 = vmatprep.subr.bf16.mxu0 0
    %400 = vmatpush1.bf16.msra.mxu0 0
    %401 = vmatprep.mubr.bf16.mxu0 0
    %402 = vmatmul.mubr.bf16.gmra.mrb[0].mxu0 %v326
    %v403 = vpop.f32.mrb[0].mxu0
    %v404 = vadd.f32 %v240, %v403
    %v405 = vpop.f32.mrb[0].mxu0
    %v406 = vpop.f32.mrb[0].mxu0
    %v407 = vpop.f32.mrb[0].mxu0
    %408 = vdwg.mxu0
    %v409 = vmax.f32 %v363, 0.0
    %v410 = vmax.f32 %v365, 0.0
    %v411 = vmax.f32 %v404, 0.0
    %v412 = vpack.c.bf16 %v409, %v409
    %v413 = vpack.c.bf16 %v410, %v410
    %v414 = vpack.c.bf16 %v411, %v411
    %v415 = vld [vmem:[#allocation10] sm:$0xff]
    %v416 = vld [vmem:[#allocation10 + $0x8] sm:$0xff]
    %v417 = vld [vmem:[#allocation10 + $0x10] sm:$0xff]
    %v418 = vld [vmem:[#allocation10 + $0x18] sm:$0xff]
    %v419 = vld [vmem:[#allocation10 + $0x20] sm:$0xff]
    %v420 = vld [vmem:[#allocation10 + $0x28] sm:$0xff]
    %v421 = vld [vmem:[#allocation10 + $0x30] sm:$0xff]
    %v422 = vld [vmem:[#allocation10 + $0x38] sm:$0xff]
    %v423 = vld [vmem:[#allocation10 + $0x40] sm:$0xff]
    %v424 = vld [vmem:[#allocation10 + $0x48] sm:$0xff]
    %v425 = vld [vmem:[#allocation10 + $0x50] sm:$0xff]
    %v426 = vld [vmem:[#allocation10 + $0x58] sm:$0xff]
    %v427 = vld [vmem:[#allocation10 + $0x60] sm:$0xff]
    %v428 = vld [vmem:[#allocation10 + $0x68] sm:$0xff]
    %v429 = vld [vmem:[#allocation10 + $0x70] sm:$0xff]
    %v430 = vld [vmem:[#allocation10 + $0x78] sm:$0xff]
    %v431 = vld [vmem:[#allocation10 + $0x80] sm:$0xff]
    %v432 = vld [vmem:[#allocation10 + $0x88] sm:$0xff]
    %v433 = vld [vmem:[#allocation10 + $0x90] sm:$0xff]
    %v434 = vld [vmem:[#allocation10 + $0x98] sm:$0xff]
    %v435 = vld [vmem:[#allocation10 + $0xa0] sm:$0xff]
    %v436 = vld [vmem:[#allocation10 + $0xa8] sm:$0xff]
    %v437 = vld [vmem:[#allocation10 + $0xb0] sm:$0xff]
    %v438 = vld [vmem:[#allocation10 + $0xb8] sm:$0xff]
    %v439 = vld [vmem:[#allocation10 + $0xc0] sm:$0xff]
    %v440 = vld [vmem:[#allocation10 + $0xc8] sm:$0xff]
    %v441 = vld [vmem:[#allocation10 + $0xd0] sm:$0xff]
    %v442 = vld [vmem:[#allocation10 + $0xd8] sm:$0xff]
    %v443 = vld [vmem:[#allocation10 + $0xe0] sm:$0xff]
    %v444 = vld [vmem:[#allocation10 + $0xe8] sm:$0xff]
    %v445 = vld [vmem:[#allocation10 + $0xf0] sm:$0xff]
    %v446 = vld [vmem:[#allocation10 + $0xf8] sm:$0xff]
    %v447 = vld [vmem:[#allocation10 + $0x100] sm:$0xff]
    %v448 = vld [vmem:[#allocation10 + $0x108] sm:$0xff]
    %v449 = vld [vmem:[#allocation10 + $0x110] sm:$0xff]
    %v450 = vld [vmem:[#allocation10 + $0x118] sm:$0xff]
    %v451 = vld [vmem:[#allocation10 + $0x120] sm:$0xff]
    %v452 = vld [vmem:[#allocation10 + $0x128] sm:$0xff]
    %v453 = vld [vmem:[#allocation10 + $0x130] sm:$0xff]
    %v454 = vld [vmem:[#allocation10 + $0x138] sm:$0xff]
    %v455 = vld [vmem:[#allocation10 + $0x140] sm:$0xff]
    %v456 = vld [vmem:[#allocation10 + $0x148] sm:$0xff]
    %v457 = vld [vmem:[#allocation10 + $0x150] sm:$0xff]
    %v458 = vld [vmem:[#allocation10 + $0x158] sm:$0xff]
    %v459 = vld [vmem:[#allocation10 + $0x160] sm:$0xff]
    %v460 = vld [vmem:[#allocation10 + $0x168] sm:$0xff]
    %v461 = vld [vmem:[#allocation10 + $0x170] sm:$0xff]
    %v462 = vld [vmem:[#allocation10 + $0x178] sm:$0xff]
    %v463 = vld [vmem:[#allocation10 + $0x180] sm:$0xff]
    %v464 = vld [vmem:[#allocation10 + $0x188] sm:$0xff]
    %v465 = vld [vmem:[#allocation10 + $0x190] sm:$0xff]
    %v466 = vld [vmem:[#allocation10 + $0x198] sm:$0xff]
    %v467 = vld [vmem:[#allocation10 + $0x1a0] sm:$0xff]
    %v468 = vld [vmem:[#allocation10 + $0x1a8] sm:$0xff]
    %v469 = vld [vmem:[#allocation10 + $0x1b0] sm:$0xff]
    %v470 = vld [vmem:[#allocation10 + $0x1b8] sm:$0xff]
    %v471 = vld [vmem:[#allocation10 + $0x1c0] sm:$0xff]
    %v472 = vld [vmem:[#allocation10 + $0x1c8] sm:$0xff]
    %v473 = vld [vmem:[#allocation10 + $0x1d0] sm:$0xff]
    %v474 = vld [vmem:[#allocation10 + $0x1d8] sm:$0xff]
    %v475 = vld [vmem:[#allocation10 + $0x1e0] sm:$0xff]
    %v476 = vld [vmem:[#allocation10 + $0x1e8] sm:$0xff]
    %v477 = vld [vmem:[#allocation10 + $0x1f0] sm:$0xff]
    %v478 = vld [vmem:[#allocation10 + $0x1f8] sm:$0xff]
    %v479 = vld [vmem:[#allocation10 + $0x200] sm:$0xff]
    %v480 = vld [vmem:[#allocation10 + $0x208] sm:$0xff]
    %v481 = vld [vmem:[#allocation10 + $0x210] sm:$0xff]
    %v482 = vld [vmem:[#allocation10 + $0x218] sm:$0xff]
    %v483 = vld [vmem:[#allocation10 + $0x220] sm:$0xff]
    %v484 = vld [vmem:[#allocation10 + $0x228] sm:$0xff]
    %v485 = vld [vmem:[#allocation10 + $0x230] sm:$0xff]
    %v486 = vld [vmem:[#allocation10 + $0x238] sm:$0xff]
    %v487 = vld [vmem:[#allocation10 + $0x240] sm:$0xff]
    %v488 = vld [vmem:[#allocation10 + $0x248] sm:$0xff]
    %v489 = vld [vmem:[#allocation10 + $0x250] sm:$0xff]
    %v490 = vld [vmem:[#allocation10 + $0x258] sm:$0xff]
    %v491 = vld [vmem:[#allocation10 + $0x260] sm:$0xff]
    %v492 = vld [vmem:[#allocation10 + $0x268] sm:$0xff]
    %v493 = vld [vmem:[#allocation10 + $0x270] sm:$0xff]
    %v494 = vld [vmem:[#allocation10 + $0x278] sm:$0xff]
    %v495 = vld [vmem:[%s6] sm:$0xf]
    %v497 = vlaneseq
    %v498 = vshrl.u32 %v497, 7
    %v499 = vsub.s32 0, %v498
    %v500 = vrot.slane %v495, %v499
    %v501 = vlaneseq
    %v502 = vshrl.u32 %v501, 7
    %v503 = vsub.s32 1, %v502
    %v504 = vrot.slane %v495, %v503
    %v505 = vlaneseq
    %v506 = vshrl.u32 %v505, 7
    %v507 = vsub.s32 2, %v506
    %v508 = vrot.slane %v495, %v507
    %v509 = vlaneseq
    %v510 = vshrl.u32 %v509, 7
    %v511 = vsub.s32 3, %v510
    %v512 = vrot.slane %v495, %v511
    %v597 = vunpack.c.l.b16 %v415
    %v598 = vunpack.c.h.b16 %v415
    %v599 = vunpack.c.l.b16 %v416
    %v600 = vunpack.c.h.b16 %v416
    %v601 = vunpack.c.l.b16 %v417
    %v602 = vunpack.c.h.b16 %v417
    %v603 = vunpack.c.l.b16 %v418
    %v604 = vunpack.c.h.b16 %v418
    %v605 = vunpack.c.l.b16 %v419
    %v606 = vunpack.c.h.b16 %v419
    %v607 = vunpack.c.l.b16 %v420
    %v608 = vunpack.c.h.b16 %v420
    %v609 = vunpack.c.l.b16 %v421
    %v610 = vunpack.c.h.b16 %v421
    %v611 = vunpack.c.l.b16 %v422
    %v612 = vunpack.c.h.b16 %v422
    %v613 = vunpack.c.l.b16 %v423
    %v614 = vunpack.c.h.b16 %v423
    %v615 = vunpack.c.l.b16 %v424
    %v616 = vunpack.c.h.b16 %v424
    %v617 = vunpack.c.l.b16 %v425
    %v618 = vunpack.c.h.b16 %v425
    %v619 = vunpack.c.l.b16 %v426
    %v620 = vunpack.c.h.b16 %v426
    %v621 = vunpack.c.l.b16 %v427
    %v622 = vunpack.c.h.b16 %v427
    %v623 = vunpack.c.l.b16 %v428
    %v624 = vunpack.c.h.b16 %v428
    %v625 = vunpack.c.l.b16 %v429
    %v626 = vunpack.c.h.b16 %v429
    %v627 = vunpack.c.l.b16 %v430
    %v628 = vunpack.c.h.b16 %v430
    %v629 = vunpack.c.l.b16 %v431
    %v630 = vunpack.c.h.b16 %v431
    %v631 = vunpack.c.l.b16 %v432
    %v632 = vunpack.c.h.b16 %v432
    %v633 = vunpack.c.l.b16 %v433
    %v634 = vunpack.c.h.b16 %v433
    %v635 = vunpack.c.l.b16 %v434
    %v636 = vunpack.c.h.b16 %v434
    %v637 = vunpack.c.l.b16 %v435
    %v638 = vunpack.c.h.b16 %v435
    %v639 = vunpack.c.l.b16 %v436
    %v640 = vunpack.c.h.b16 %v436
    %v641 = vunpack.c.l.b16 %v437
    %v642 = vunpack.c.h.b16 %v437
    %v643 = vunpack.c.l.b16 %v438
    %v644 = vunpack.c.h.b16 %v438
    %v645 = vunpack.c.l.b16 %v439
    %v646 = vunpack.c.h.b16 %v439
    %v647 = vunpack.c.l.b16 %v440
    %v648 = vunpack.c.h.b16 %v440
    %v649 = vunpack.c.l.b16 %v441
    %v650 = vunpack.c.h.b16 %v441
    %v651 = vunpack.c.l.b16 %v442
    %v652 = vunpack.c.h.b16 %v442
    %v653 = vunpack.c.l.b16 %v443
    %v654 = vunpack.c.h.b16 %v443
    %v655 = vunpack.c.l.b16 %v444
    %v656 = vunpack.c.h.b16 %v444
    %v657 = vunpack.c.l.b16 %v445
    %v658 = vunpack.c.h.b16 %v445
    %v659 = vunpack.c.l.b16 %v446
    %v660 = vunpack.c.h.b16 %v446
    %v661 = vunpack.c.l.b16 %v447
    %v662 = vunpack.c.h.b16 %v447
    %v663 = vunpack.c.l.b16 %v448
    %v664 = vunpack.c.h.b16 %v448
    %v665 = vunpack.c.l.b16 %v449
    %v666 = vunpack.c.h.b16 %v449
    %v667 = vunpack.c.l.b16 %v450
    %v668 = vunpack.c.h.b16 %v450
    %v669 = vunpack.c.l.b16 %v451
    %v670 = vunpack.c.h.b16 %v451
    %v671 = vunpack.c.l.b16 %v452
    %v672 = vunpack.c.h.b16 %v452
    %v673 = vunpack.c.l.b16 %v453
    %v674 = vunpack.c.h.b16 %v453
    %v675 = vunpack.c.l.b16 %v454
    %v676 = vunpack.c.h.b16 %v454
    %v677 = vunpack.c.l.b16 %v455
    %v678 = vunpack.c.h.b16 %v455
    %v679 = vunpack.c.l.b16 %v456
    %v680 = vunpack.c.h.b16 %v456
    %v681 = vunpack.c.l.b16 %v457
    %v682 = vunpack.c.h.b16 %v457
    %v683 = vunpack.c.l.b16 %v458
    %v684 = vunpack.c.h.b16 %v458
    %v685 = vunpack.c.l.b16 %v459
    %v686 = vunpack.c.h.b16 %v459
    %v687 = vunpack.c.l.b16 %v460
    %v688 = vunpack.c.h.b16 %v460
    %v689 = vunpack.c.l.b16 %v461
    %v690 = vunpack.c.h.b16 %v461
    %v691 = vunpack.c.l.b16 %v462
    %v692 = vunpack.c.h.b16 %v462
    %v693 = vunpack.c.l.b16 %v463
    %v694 = vunpack.c.h.b16 %v463
    %v695 = vunpack.c.l.b16 %v464
    %v696 = vunpack.c.h.b16 %v464
    %v697 = vunpack.c.l.b16 %v465
    %v698 = vunpack.c.h.b16 %v465
    %v699 = vunpack.c.l.b16 %v466
    %v700 = vunpack.c.h.b16 %v466
    %v701 = vunpack.c.l.b16 %v467
    %v702 = vunpack.c.h.b16 %v467
    %v703 = vunpack.c.l.b16 %v468
    %v704 = vunpack.c.h.b16 %v468
    %v705 = vunpack.c.l.b16 %v469
    %v706 = vunpack.c.h.b16 %v469
    %v707 = vunpack.c.l.b16 %v470
    %v708 = vunpack.c.h.b16 %v470
    %v709 = vunpack.c.l.b16 %v471
    %v710 = vunpack.c.h.b16 %v471
    %v711 = vunpack.c.l.b16 %v472
    %v712 = vunpack.c.h.b16 %v472
    %v713 = vunpack.c.l.b16 %v473
    %v714 = vunpack.c.h.b16 %v473
    %v715 = vunpack.c.l.b16 %v474
    %v716 = vunpack.c.h.b16 %v474
    %v717 = vunpack.c.l.b16 %v475
    %v718 = vunpack.c.h.b16 %v475
    %v719 = vunpack.c.l.b16 %v476
    %v720 = vunpack.c.h.b16 %v476
    %v721 = vunpack.c.l.b16 %v477
    %v722 = vunpack.c.h.b16 %v477
    %v723 = vunpack.c.l.b16 %v478
    %v724 = vunpack.c.h.b16 %v478
    %v725 = vunpack.c.l.b16 %v479
    %v726 = vunpack.c.h.b16 %v479
    %v727 = vunpack.c.l.b16 %v480
    %v728 = vunpack.c.h.b16 %v480
    %v729 = vunpack.c.l.b16 %v481
    %v730 = vunpack.c.h.b16 %v481
    %v731 = vunpack.c.l.b16 %v482
    %v732 = vunpack.c.h.b16 %v482
    %v733 = vunpack.c.l.b16 %v483
    %v734 = vunpack.c.h.b16 %v483
    %v735 = vunpack.c.l.b16 %v484
    %v736 = vunpack.c.h.b16 %v484
    %v737 = vunpack.c.l.b16 %v485
    %v738 = vunpack.c.h.b16 %v485
    %v739 = vunpack.c.l.b16 %v486
    %v740 = vunpack.c.h.b16 %v486
    %v741 = vunpack.c.l.b16 %v487
    %v742 = vunpack.c.h.b16 %v487
    %v743 = vunpack.c.l.b16 %v488
    %v744 = vunpack.c.h.b16 %v488
    %v745 = vunpack.c.l.b16 %v489
    %v746 = vunpack.c.h.b16 %v489
    %v747 = vunpack.c.l.b16 %v490
    %v748 = vunpack.c.h.b16 %v490
    %v749 = vunpack.c.l.b16 %v491
    %v750 = vunpack.c.h.b16 %v491
    %v751 = vunpack.c.l.b16 %v492
    %v752 = vunpack.c.h.b16 %v492
    %v753 = vunpack.c.l.b16 %v493
    %v754 = vunpack.c.h.b16 %v493
    %v755 = vunpack.c.l.b16 %v494
    %v756 = vunpack.c.h.b16 %v494
    %v757 = vpack.c.b16 %v601, %v597
    %v758 = vpack.c.b16 %v602, %v598
    %v759 = vpack.c.b16 %v603, %v599
    %v760 = vpack.c.b16 %v604, %v600
    %v761 = vpack.c.b16 %v609, %v605
    %v762 = vpack.c.b16 %v610, %v606
    %v763 = vpack.c.b16 %v611, %v607
    %v764 = vpack.c.b16 %v612, %v608
    %v765 = vpack.c.b16 %v617, %v613
    %v766 = vpack.c.b16 %v618, %v614
    %v767 = vpack.c.b16 %v619, %v615
    %v768 = vpack.c.b16 %v620, %v616
    %v769 = vpack.c.b16 %v625, %v621
    %v770 = vpack.c.b16 %v626, %v622
    %v771 = vpack.c.b16 %v627, %v623
    %v772 = vpack.c.b16 %v628, %v624
    %v773 = vpack.c.b16 %v633, %v629
    %v774 = vpack.c.b16 %v634, %v630
    %v775 = vpack.c.b16 %v635, %v631
    %v776 = vpack.c.b16 %v636, %v632
    %v777 = vpack.c.b16 %v641, %v637
    %v778 = vpack.c.b16 %v642, %v638
    %v779 = vpack.c.b16 %v643, %v639
    %v780 = vpack.c.b16 %v644, %v640
    %v781 = vpack.c.b16 %v649, %v645
    %v782 = vpack.c.b16 %v650, %v646
    %v783 = vpack.c.b16 %v651, %v647
    %v784 = vpack.c.b16 %v652, %v648
    %v785 = vpack.c.b16 %v657, %v653
    %v786 = vpack.c.b16 %v658, %v654
    %v787 = vpack.c.b16 %v659, %v655
    %v788 = vpack.c.b16 %v660, %v656
    %v789 = vpack.c.b16 %v665, %v661
    %v790 = vpack.c.b16 %v666, %v662
    %v791 = vpack.c.b16 %v667, %v663
    %v792 = vpack.c.b16 %v668, %v664
    %v793 = vpack.c.b16 %v673, %v669
    %v794 = vpack.c.b16 %v674, %v670
    %v795 = vpack.c.b16 %v675, %v671
    %v796 = vpack.c.b16 %v676, %v672
    %v797 = vpack.c.b16 %v681, %v677
    %v798 = vpack.c.b16 %v682, %v678
    %v799 = vpack.c.b16 %v683, %v679
    %v800 = vpack.c.b16 %v684, %v680
    %v801 = vpack.c.b16 %v689, %v685
    %v802 = vpack.c.b16 %v690, %v686
    %v803 = vpack.c.b16 %v691, %v687
    %v804 = vpack.c.b16 %v692, %v688
    %v805 = vpack.c.b16 %v697, %v693
    %v806 = vpack.c.b16 %v698, %v694
    %v807 = vpack.c.b16 %v699, %v695
    %v808 = vpack.c.b16 %v700, %v696
    %v809 = vpack.c.b16 %v705, %v701
    %v810 = vpack.c.b16 %v706, %v702
    %v811 = vpack.c.b16 %v707, %v703
    %v812 = vpack.c.b16 %v708, %v704
    %v813 = vpack.c.b16 %v713, %v709
    %v814 = vpack.c.b16 %v714, %v710
    %v815 = vpack.c.b16 %v715, %v711
    %v816 = vpack.c.b16 %v716, %v712
    %v817 = vpack.c.b16 %v721, %v717
    %v818 = vpack.c.b16 %v722, %v718
    %v819 = vpack.c.b16 %v723, %v719
    %v820 = vpack.c.b16 %v724, %v720
    %v821 = vpack.c.b16 %v729, %v725
    %v822 = vpack.c.b16 %v730, %v726
    %v823 = vpack.c.b16 %v731, %v727
    %v824 = vpack.c.b16 %v732, %v728
    %v825 = vpack.c.b16 %v737, %v733
    %v826 = vpack.c.b16 %v738, %v734
    %v827 = vpack.c.b16 %v739, %v735
    %v828 = vpack.c.b16 %v740, %v736
    %v829 = vpack.c.b16 %v745, %v741
    %v830 = vpack.c.b16 %v746, %v742
    %v831 = vpack.c.b16 %v747, %v743
    %v832 = vpack.c.b16 %v748, %v744
    %v833 = vpack.c.b16 %v753, %v749
    %v834 = vpack.c.b16 %v754, %v750
    %v835 = vpack.c.b16 %v755, %v751
    %v836 = vpack.c.b16 %v756, %v752
    %vm917 = vcmask 523264
    %v919 = vsel %vm917, %v414, 0
    %921 = vmatprep.subr.bf16.mxu0 %v758
    %922 = vmatpush1.bf16.msra.mxu0 %v757
    %923 = vmatprep.subr.bf16.mxu0 %v762
    %924 = vmatpush1.bf16.msra.mxu0 %v761
    %925 = vmatprep.subr.bf16.mxu0 %v766
    %926 = vmatpush1.bf16.msra.mxu0 %v765
    %927 = vmatprep.subr.bf16.mxu0 %v770
    %928 = vmatpush1.bf16.msra.mxu0 %v769
    %929 = vmatprep.subr.bf16.mxu0 %v774
    %930 = vmatpush1.bf16.msra.mxu0 %v773
    %931 = vmatprep.subr.bf16.mxu0 %v778
    %932 = vmatpush1.bf16.msra.mxu0 %v777
    %933 = vmatprep.subr.bf16.mxu0 %v782
    %934 = vmatpush1.bf16.msra.mxu0 %v781
    %935 = vmatprep.subr.bf16.mxu0 %v786
    %936 = vmatpush1.bf16.msra.mxu0 %v785
    %937 = vmatprep.subr.bf16.mxu0 %v790
    %938 = vmatpush1.bf16.msra.mxu0 %v789
    %939 = vmatprep.subr.bf16.mxu0 %v794
    %940 = vmatpush1.bf16.msra.mxu0 %v793
    %941 = vmatprep.subr.bf16.mxu0 %v798
    %942 = vmatpush1.bf16.msra.mxu0 %v797
    %943 = vmatprep.subr.bf16.mxu0 %v802
    %944 = vmatpush1.bf16.msra.mxu0 %v801
    %945 = vmatprep.subr.bf16.mxu0 %v806
    %946 = vmatpush1.bf16.msra.mxu0 %v805
    %947 = vmatprep.subr.bf16.mxu0 %v810
    %948 = vmatpush1.bf16.msra.mxu0 %v809
    %949 = vmatprep.subr.bf16.mxu0 %v814
    %950 = vmatpush1.bf16.msra.mxu0 %v813
    %951 = vmatprep.subr.bf16.mxu0 %v818
    %952 = vmatpush1.bf16.msra.mxu0 %v817
    %953 = vmatprep.mubr.bf16.mxu0 %v413
    %954 = vmatmul.mubr.bf16.gmra.mrb[0].mxu0 %v412
    %v955 = vpop.f32.mrb[0].mxu0
    %v956 = vadd.f32 %v500, %v955
    %v957 = vpop.f32.mrb[0].mxu0
    %v958 = vadd.f32 %v504, %v957
    %v959 = vpop.f32.mrb[0].mxu0
    %v960 = vpop.f32.mrb[0].mxu0
    %961 = vdwg.mxu0
    %962 = vmatprep.subr.bf16.mxu0 %v822
    %963 = vmatpush1.bf16.msra.mxu0 %v821
    %964 = vmatprep.subr.bf16.mxu0 %v826
    %965 = vmatpush1.bf16.msra.mxu0 %v825
    %966 = vmatprep.subr.bf16.mxu0 %v830
    %967 = vmatpush1.bf16.msra.mxu0 %v829
    %968 = vmatprep.subr.bf16.mxu0 %v834
    %969 = vmatpush1.bf16.msra.mxu0 %v833
    %970 = vmatprep.subr.bf16.mxu0 0
    %971 = vmatpush1.bf16.msra.mxu0 0
    %972 = vmatprep.subr.bf16.mxu0 0
    %973 = vmatpush1.bf16.msra.mxu0 0
    %974 = vmatprep.subr.bf16.mxu0 0
    %975 = vmatpush1.bf16.msra.mxu0 0
    %976 = vmatprep.subr.bf16.mxu0 0
    %977 = vmatpush1.bf16.msra.mxu0 0
    %978 = vmatprep.subr.bf16.mxu0 0
    %979 = vmatpush1.bf16.msra.mxu0 0
    %980 = vmatprep.subr.bf16.mxu0 0
    %981 = vmatpush1.bf16.msra.mxu0 0
    %982 = vmatprep.subr.bf16.mxu0 0
    %983 = vmatpush1.bf16.msra.mxu0 0
    %984 = vmatprep.subr.bf16.mxu0 0
    %985 = vmatpush1.bf16.msra.mxu0 0
    %986 = vmatprep.subr.bf16.mxu0 0
    %987 = vmatpush1.bf16.msra.mxu0 0
    %988 = vmatprep.subr.bf16.mxu0 0
    %989 = vmatpush1.bf16.msra.mxu0 0
    %990 = vmatprep.subr.bf16.mxu0 0
    %991 = vmatpush1.bf16.msra.mxu0 0
    %992 = vmatprep.subr.bf16.mxu0 0
    %993 = vmatpush1.bf16.msra.mxu0 0
    %994 = vmatprep.mubr.bf16.mxu0 0
    %995 = vmatmul.mubr.bf16.gmra.mrb[0].mxu0 %v919
    %v996 = vpop.f32.mrb[0].mxu0
    %v997 = vadd.f32 %v956, %v996
    %v998 = vpop.f32.mrb[0].mxu0
    %v999 = vadd.f32 %v958, %v998
    %v1000 = vpop.f32.mrb[0].mxu0
    %v1001 = vpop.f32.mrb[0].mxu0
    %1002 = vdwg.mxu0
    %1003 = vmatprep.subr.bf16.mxu0 %v760
    %1004 = vmatpush1.bf16.msra.mxu0 %v759
    %1005 = vmatprep.subr.bf16.mxu0 %v764
    %1006 = vmatpush1.bf16.msra.mxu0 %v763
    %1007 = vmatprep.subr.bf16.mxu0 %v768
    %1008 = vmatpush1.bf16.msra.mxu0 %v767
    %1009 = vmatprep.subr.bf16.mxu0 %v772
    %1010 = vmatpush1.bf16.msra.mxu0 %v771
    %1011 = vmatprep.subr.bf16.mxu0 %v776
    %1012 = vmatpush1.bf16.msra.mxu0 %v775
    %1013 = vmatprep.subr.bf16.mxu0 %v780
    %1014 = vmatpush1.bf16.msra.mxu0 %v779
    %1015 = vmatprep.subr.bf16.mxu0 %v784
    %1016 = vmatpush1.bf16.msra.mxu0 %v783
    %1017 = vmatprep.subr.bf16.mxu0 %v788
    %1018 = vmatpush1.bf16.msra.mxu0 %v787
    %1019 = vmatprep.subr.bf16.mxu0 %v792
    %1020 = vmatpush1.bf16.msra.mxu0 %v791
    %1021 = vmatprep.subr.bf16.mxu0 %v796
    %1022 = vmatpush1.bf16.msra.mxu0 %v795
    %1023 = vmatprep.subr.bf16.mxu0 %v800
    %1024 = vmatpush1.bf16.msra.mxu0 %v799
    %1025 = vmatprep.subr.bf16.mxu0 %v804
    %1026 = vmatpush1.bf16.msra.mxu0 %v803
    %1027 = vmatprep.subr.bf16.mxu0 %v808
    %1028 = vmatpush1.bf16.msra.mxu0 %v807
    %1029 = vmatprep.subr.bf16.mxu0 %v812
    %1030 = vmatpush1.bf16.msra.mxu0 %v811
    %1031 = vmatprep.subr.bf16.mxu0 %v816
    %1032 = vmatpush1.bf16.msra.mxu0 %v815
    %1033 = vmatprep.subr.bf16.mxu0 %v820
    %1034 = vmatpush1.bf16.msra.mxu0 %v819
    %1035 = vmatprep.mubr.bf16.mxu0 %v413
    %1036 = vmatmul.mubr.bf16.gmra.mrb[0].mxu0 %v412
    %v1037 = vpop.f32.mrb[0].mxu0
    %v1038 = vadd.f32 %v508, %v1037
    %v1039 = vpop.f32.mrb[0].mxu0
    %v1040 = vadd.f32 %v512, %v1039
    %v1041 = vpop.f32.mrb[0].mxu0
    %v1042 = vpop.f32.mrb[0].mxu0
    %1043 = vdwg.mxu0
    %1044 = vmatprep.subr.bf16.mxu0 %v824
    %1045 = vmatpush1.bf16.msra.mxu0 %v823
    %1046 = vmatprep.subr.bf16.mxu0 %v828
    %1047 = vmatpush1.bf16.msra.mxu0 %v827
    %1048 = vmatprep.subr.bf16.mxu0 %v832
    %1049 = vmatpush1.bf16.msra.mxu0 %v831
    %1050 = vmatprep.subr.bf16.mxu0 %v836
    %1051 = vmatpush1.bf16.msra.mxu0 %v835
    %1052 = vmatprep.subr.bf16.mxu0 0
    %1053 = vmatpush1.bf16.msra.mxu0 0
    %1054 = vmatprep.subr.bf16.mxu0 0
    %1055 = vmatpush1.bf16.msra.mxu0 0
    %1056 = vmatprep.subr.bf16.mxu0 0
    %1057 = vmatpush1.bf16.msra.mxu0 0
    %1058 = vmatprep.subr.bf16.mxu0 0
    %1059 = vmatpush1.bf16.msra.mxu0 0
    %1060 = vmatprep.subr.bf16.mxu0 0
    %1061 = vmatpush1.bf16.msra.mxu0 0
    %1062 = vmatprep.subr.bf16.mxu0 0
    %1063 = vmatpush1.bf16.msra.mxu0 0
    %1064 = vmatprep.subr.bf16.mxu0 0
    %1065 = vmatpush1.bf16.msra.mxu0 0
    %1066 = vmatprep.subr.bf16.mxu0 0
    %1067 = vmatpush1.bf16.msra.mxu0 0
    %1068 = vmatprep.subr.bf16.mxu0 0
    %1069 = vmatpush1.bf16.msra.mxu0 0
    %1070 = vmatprep.subr.bf16.mxu0 0
    %1071 = vmatpush1.bf16.msra.mxu0 0
    %1072 = vmatprep.subr.bf16.mxu0 0
    %1073 = vmatpush1.bf16.msra.mxu0 0
    %1074 = vmatprep.subr.bf16.mxu0 0
    %1075 = vmatpush1.bf16.msra.mxu0 0
    %1076 = vmatprep.mubr.bf16.mxu0 0
    %1077 = vmatmul.mubr.bf16.gmra.mrb[0].mxu0 %v919
    %v1078 = vpop.f32.mrb[0].mxu0
    %v1079 = vadd.f32 %v1038, %v1078
    %v1080 = vpop.f32.mrb[0].mxu0
    %v1081 = vadd.f32 %v1040, %v1080
    %v1082 = vpop.f32.mrb[0].mxu0
    %v1083 = vpop.f32.mrb[0].mxu0
    %1084 = vdwg.mxu0
    %v1085 = vmax.f32 %v997, 0.0
    %v1086 = vmax.f32 %v999, 0.0
    %v1087 = vmax.f32 %v1079, 0.0
    %v1088 = vmax.f32 %v1081, 0.0
    %v1089 = vpack.c.bf16 %v1085, %v1085
    %v1090 = vpack.c.bf16 %v1086, %v1086
    %v1091 = vpack.c.bf16 %v1087, %v1087
    %v1092 = vpack.c.bf16 %v1088, %v1088
    %v1093 = vld [vmem:[#allocation11] sm:$0xff]
    %v1094 = vld [vmem:[#allocation11 + $0x8] sm:$0xff]
    %v1095 = vld [vmem:[#allocation11 + $0x10] sm:$0xff]
    %v1096 = vld [vmem:[#allocation11 + $0x18] sm:$0xff]
    %v1097 = vld [vmem:[#allocation11 + $0x20] sm:$0xff]
    %v1098 = vld [vmem:[#allocation11 + $0x28] sm:$0xff]
    %v1099 = vld [vmem:[#allocation11 + $0x30] sm:$0xff]
    %v1100 = vld [vmem:[#allocation11 + $0x38] sm:$0xff]
    %v1101 = vld [vmem:[#allocation11 + $0x40] sm:$0xff]
    %v1102 = vld [vmem:[#allocation11 + $0x48] sm:$0xff]
    %v1103 = vld [vmem:[#allocation11 + $0x50] sm:$0xff]
    %v1104 = vld [vmem:[#allocation11 + $0x58] sm:$0xff]
    %v1105 = vld [vmem:[#allocation11 + $0x60] sm:$0xff]
    %v1106 = vld [vmem:[#allocation11 + $0x68] sm:$0xff]
    %v1107 = vld [vmem:[#allocation11 + $0x70] sm:$0xff]
    %v1108 = vld [vmem:[#allocation11 + $0x78] sm:$0xff]
    %v1109 = vld [vmem:[#allocation11 + $0x80] sm:$0xff]
    %v1110 = vld [vmem:[#allocation11 + $0x88] sm:$0xff]
    %v1111 = vld [vmem:[#allocation11 + $0x90] sm:$0xff]
    %v1112 = vld [vmem:[#allocation11 + $0x98] sm:$0xff]
    %v1113 = vld [vmem:[#allocation11 + $0xa0] sm:$0xff]
    %v1114 = vld [vmem:[#allocation11 + $0xa8] sm:$0xff]
    %v1115 = vld [vmem:[#allocation11 + $0xb0] sm:$0xff]
    %v1116 = vld [vmem:[#allocation11 + $0xb8] sm:$0xff]
    %v1117 = vld [vmem:[#allocation11 + $0xc0] sm:$0xff]
    %v1118 = vld [vmem:[#allocation11 + $0xc8] sm:$0xff]
    %v1119 = vld [vmem:[#allocation11 + $0xd0] sm:$0xff]
    %v1120 = vld [vmem:[#allocation11 + $0xd8] sm:$0xff]
    %v1121 = vld [vmem:[#allocation11 + $0xe0] sm:$0xff]
    %v1122 = vld [vmem:[#allocation11 + $0xe8] sm:$0xff]
    %v1123 = vld [vmem:[#allocation11 + $0xf0] sm:$0xff]
    %v1124 = vld [vmem:[#allocation11 + $0xf8] sm:$0xff]
    %v1125 = vld [vmem:[#allocation11 + $0x100] sm:$0xff]
    %v1126 = vld [vmem:[#allocation11 + $0x108] sm:$0xff]
    %v1127 = vld [vmem:[#allocation11 + $0x110] sm:$0xff]
    %v1128 = vld [vmem:[#allocation11 + $0x118] sm:$0xff]
    %v1129 = vld [vmem:[#allocation11 + $0x120] sm:$0xff]
    %v1130 = vld [vmem:[#allocation11 + $0x128] sm:$0xff]
    %v1131 = vld [vmem:[#allocation11 + $0x130] sm:$0xff]
    %v1132 = vld [vmem:[#allocation11 + $0x138] sm:$0xff]
    %v1133 = vld [vmem:[#allocation11 + $0x140] sm:$0xff]
    %v1134 = vld [vmem:[#allocation11 + $0x148] sm:$0xff]
    %v1135 = vld [vmem:[#allocation11 + $0x150] sm:$0xff]
    %v1136 = vld [vmem:[#allocation11 + $0x158] sm:$0xff]
    %v1137 = vld [vmem:[#allocation11 + $0x160] sm:$0xff]
    %v1138 = vld [vmem:[#allocation11 + $0x168] sm:$0xff]
    %v1139 = vld [vmem:[#allocation11 + $0x170] sm:$0xff]
    %v1140 = vld [vmem:[#allocation11 + $0x178] sm:$0xff]
    %v1141 = vld [vmem:[#allocation11 + $0x180] sm:$0xff]
    %v1142 = vld [vmem:[#allocation11 + $0x188] sm:$0xff]
    %v1143 = vld [vmem:[#allocation11 + $0x190] sm:$0xff]
    %v1144 = vld [vmem:[#allocation11 + $0x198] sm:$0xff]
    %v1145 = vld [vmem:[#allocation11 + $0x1a0] sm:$0xff]
    %v1146 = vld [vmem:[#allocation11 + $0x1a8] sm:$0xff]
    %v1147 = vld [vmem:[#allocation11 + $0x1b0] sm:$0xff]
    %v1148 = vld [vmem:[#allocation11 + $0x1b8] sm:$0xff]
    %v1149 = vld [vmem:[#allocation11 + $0x1c0] sm:$0xff]
    %v1150 = vld [vmem:[#allocation11 + $0x1c8] sm:$0xff]
    %v1151 = vld [vmem:[#allocation11 + $0x1d0] sm:$0xff]
    %v1152 = vld [vmem:[#allocation11 + $0x1d8] sm:$0xff]
    %v1153 = vld [vmem:[#allocation11 + $0x1e0] sm:$0xff]
    %v1154 = vld [vmem:[#allocation11 + $0x1e8] sm:$0xff]
    %v1155 = vld [vmem:[#allocation11 + $0x1f0] sm:$0xff]
    %v1156 = vld [vmem:[#allocation11 + $0x1f8] sm:$0xff]
    %v1157 = vld [vmem:[#allocation11 + $0x200] sm:$0xff]
    %v1158 = vld [vmem:[#allocation11 + $0x208] sm:$0xff]
    %v1159 = vld [vmem:[#allocation11 + $0x210] sm:$0xff]
    %v1160 = vld [vmem:[#allocation11 + $0x218] sm:$0xff]
    %v1161 = vld [vmem:[#allocation11 + $0x220] sm:$0xff]
    %v1162 = vld [vmem:[#allocation11 + $0x228] sm:$0xff]
    %v1163 = vld [vmem:[#allocation11 + $0x230] sm:$0xff]
    %v1164 = vld [vmem:[#allocation11 + $0x238] sm:$0xff]
    %v1165 = vld [vmem:[#allocation11 + $0x240] sm:$0xff]
    %v1166 = vld [vmem:[#allocation11 + $0x248] sm:$0xff]
    %v1167 = vld [vmem:[#allocation11 + $0x250] sm:$0xff]
    %v1168 = vld [vmem:[#allocation11 + $0x258] sm:$0xff]
    %v1169 = vld [vmem:[#allocation11 + $0x260] sm:$0xff]
    %v1170 = vld [vmem:[#allocation11 + $0x268] sm:$0xff]
    %v1171 = vld [vmem:[#allocation11 + $0x270] sm:$0xff]
    %v1172 = vld [vmem:[#allocation11 + $0x278] sm:$0xff]
    %v1173 = vld [vmem:[#allocation11 + $0x280] sm:$0xff]
    %v1174 = vld [vmem:[#allocation11 + $0x288] sm:$0xff]
    %v1175 = vld [vmem:[#allocation11 + $0x290] sm:$0xff]
    %v1176 = vld [vmem:[#allocation11 + $0x298] sm:$0xff]
    %v1177 = vld [vmem:[#allocation11 + $0x2a0] sm:$0xff]
    %v1178 = vld [vmem:[#allocation11 + $0x2a8] sm:$0xff]
    %v1179 = vld [vmem:[#allocation11 + $0x2b0] sm:$0xff]
    %v1180 = vld [vmem:[#allocation11 + $0x2b8] sm:$0xff]
    %v1181 = vld [vmem:[#allocation11 + $0x2c0] sm:$0xff]
    %v1182 = vld [vmem:[#allocation11 + $0x2c8] sm:$0xff]
    %v1183 = vld [vmem:[#allocation11 + $0x2d0] sm:$0xff]
    %v1184 = vld [vmem:[#allocation11 + $0x2d8] sm:$0xff]
    %v1185 = vld [vmem:[#allocation11 + $0x2e0] sm:$0xff]
    %v1186 = vld [vmem:[#allocation11 + $0x2e8] sm:$0xff]
    %v1187 = vld [vmem:[#allocation11 + $0x2f0] sm:$0xff]
    %v1188 = vld [vmem:[#allocation11 + $0x2f8] sm:$0xff]
    %v1189 = vld [vmem:[#allocation11 + $0x300] sm:$0xff]
    %v1190 = vld [vmem:[#allocation11 + $0x308] sm:$0xff]
    %v1191 = vld [vmem:[#allocation11 + $0x310] sm:$0xff]
    %v1192 = vld [vmem:[#allocation11 + $0x318] sm:$0xff]
    %v1193 = vld [vmem:[#allocation11 + $0x320] sm:$0xff]
    %v1194 = vld [vmem:[#allocation11 + $0x328] sm:$0xff]
    %v1195 = vld [vmem:[#allocation11 + $0x330] sm:$0xff]
    %v1196 = vld [vmem:[#allocation11 + $0x338] sm:$0xff]
    %v1197 = vld [vmem:[#allocation11 + $0x340] sm:$0xff]
    %v1198 = vld [vmem:[#allocation11 + $0x348] sm:$0xff]
    %v1199 = vld [vmem:[#allocation11 + $0x350] sm:$0xff]
    %v1200 = vld [vmem:[#allocation11 + $0x358] sm:$0xff]
    %v1201 = vld [vmem:[#allocation11 + $0x360] sm:$0xff]
    %v1202 = vld [vmem:[#allocation11 + $0x368] sm:$0xff]
    %v1203 = vld [vmem:[#allocation11 + $0x370] sm:$0xff]
    %v1204 = vld [vmem:[#allocation11 + $0x378] sm:$0xff]
    %v1205 = vld [vmem:[#allocation11 + $0x380] sm:$0xff]
    %v1206 = vld [vmem:[#allocation11 + $0x388] sm:$0xff]
    %v1207 = vld [vmem:[#allocation11 + $0x390] sm:$0xff]
    %v1208 = vld [vmem:[#allocation11 + $0x398] sm:$0xff]
    %v1209 = vld [vmem:[#allocation11 + $0x3a0] sm:$0xff]
    %v1210 = vld [vmem:[#allocation11 + $0x3a8] sm:$0xff]
    %v1211 = vld [vmem:[#allocation11 + $0x3b0] sm:$0xff]
    %v1212 = vld [vmem:[#allocation11 + $0x3b8] sm:$0xff]
    %v1213 = vld [vmem:[#allocation11 + $0x3c0] sm:$0xff]
    %v1214 = vld [vmem:[#allocation11 + $0x3c8] sm:$0xff]
    %v1215 = vld [vmem:[#allocation11 + $0x3d0] sm:$0xff]
    %v1216 = vld [vmem:[#allocation11 + $0x3d8] sm:$0xff]
    %v1217 = vld [vmem:[#allocation11 + $0x3e0] sm:$0xff]
    %v1218 = vld [vmem:[#allocation11 + $0x3e8] sm:$0xff]
    %v1219 = vld [vmem:[#allocation11 + $0x3f0] sm:$0xff]
    %v1220 = vld [vmem:[#allocation11 + $0x3f8] sm:$0xff]
    %v1221 = vld [vmem:[%s8] sm:$0xf]
    %v1223 = vlaneseq
    %v1224 = vshrl.u32 %v1223, 7
    %v1225 = vsub.s32 0, %v1224
    %v1226 = vrot.slane %v1221, %v1225
    %v1227 = vlaneseq
    %v1228 = vshrl.u32 %v1227, 7
    %v1229 = vsub.s32 1, %v1228
    %v1230 = vrot.slane %v1221, %v1229
    %v1231 = vlaneseq
    %v1232 = vshrl.u32 %v1231, 7
    %v1233 = vsub.s32 2, %v1232
    %v1234 = vrot.slane %v1221, %v1233
    %v1235 = vlaneseq
    %v1236 = vshrl.u32 %v1235, 7
    %v1237 = vsub.s32 3, %v1236
    %v1238 = vrot.slane %v1221, %v1237
    %v1371 = vunpack.c.l.b16 %v1093
    %v1372 = vunpack.c.h.b16 %v1093
    %v1373 = vunpack.c.l.b16 %v1094
    %v1374 = vunpack.c.h.b16 %v1094
    %v1375 = vunpack.c.l.b16 %v1095
    %v1376 = vunpack.c.h.b16 %v1095
    %v1377 = vunpack.c.l.b16 %v1096
    %v1378 = vunpack.c.h.b16 %v1096
    %v1379 = vunpack.c.l.b16 %v1097
    %v1380 = vunpack.c.h.b16 %v1097
    %v1381 = vunpack.c.l.b16 %v1098
    %v1382 = vunpack.c.h.b16 %v1098
    %v1383 = vunpack.c.l.b16 %v1099
    %v1384 = vunpack.c.h.b16 %v1099
    %v1385 = vunpack.c.l.b16 %v1100
    %v1386 = vunpack.c.h.b16 %v1100
    %v1387 = vunpack.c.l.b16 %v1101
    %v1388 = vunpack.c.h.b16 %v1101
    %v1389 = vunpack.c.l.b16 %v1102
    %v1390 = vunpack.c.h.b16 %v1102
    %v1391 = vunpack.c.l.b16 %v1103
    %v1392 = vunpack.c.h.b16 %v1103
    %v1393 = vunpack.c.l.b16 %v1104
    %v1394 = vunpack.c.h.b16 %v1104
    %v1395 = vunpack.c.l.b16 %v1105
    %v1396 = vunpack.c.h.b16 %v1105
    %v1397 = vunpack.c.l.b16 %v1106
    %v1398 = vunpack.c.h.b16 %v1106
    %v1399 = vunpack.c.l.b16 %v1107
    %v1400 = vunpack.c.h.b16 %v1107
    %v1401 = vunpack.c.l.b16 %v1108
    %v1402 = vunpack.c.h.b16 %v1108
    %v1403 = vunpack.c.l.b16 %v1109
    %v1404 = vunpack.c.h.b16 %v1109
    %v1405 = vunpack.c.l.b16 %v1110
    %v1406 = vunpack.c.h.b16 %v1110
    %v1407 = vunpack.c.l.b16 %v1111
    %v1408 = vunpack.c.h.b16 %v1111
    %v1409 = vunpack.c.l.b16 %v1112
    %v1410 = vunpack.c.h.b16 %v1112
    %v1411 = vunpack.c.l.b16 %v1113
    %v1412 = vunpack.c.h.b16 %v1113
    %v1413 = vunpack.c.l.b16 %v1114
    %v1414 = vunpack.c.h.b16 %v1114
    %v1415 = vunpack.c.l.b16 %v1115
    %v1416 = vunpack.c.h.b16 %v1115
    %v1417 = vunpack.c.l.b16 %v1116
    %v1418 = vunpack.c.h.b16 %v1116
    %v1419 = vunpack.c.l.b16 %v1117
    %v1420 = vunpack.c.h.b16 %v1117
    %v1421 = vunpack.c.l.b16 %v1118
    %v1422 = vunpack.c.h.b16 %v1118
    %v1423 = vunpack.c.l.b16 %v1119
    %v1424 = vunpack.c.h.b16 %v1119
    %v1425 = vunpack.c.l.b16 %v1120
    %v1426 = vunpack.c.h.b16 %v1120
    %v1427 = vunpack.c.l.b16 %v1121
    %v1428 = vunpack.c.h.b16 %v1121
    %v1429 = vunpack.c.l.b16 %v1122
    %v1430 = vunpack.c.h.b16 %v1122
    %v1431 = vunpack.c.l.b16 %v1123
    %v1432 = vunpack.c.h.b16 %v1123
    %v1433 = vunpack.c.l.b16 %v1124
    %v1434 = vunpack.c.h.b16 %v1124
    %v1435 = vunpack.c.l.b16 %v1125
    %v1436 = vunpack.c.h.b16 %v1125
    %v1437 = vunpack.c.l.b16 %v1126
    %v1438 = vunpack.c.h.b16 %v1126
    %v1439 = vunpack.c.l.b16 %v1127
    %v1440 = vunpack.c.h.b16 %v1127
    %v1441 = vunpack.c.l.b16 %v1128
    %v1442 = vunpack.c.h.b16 %v1128
    %v1443 = vunpack.c.l.b16 %v1129
    %v1444 = vunpack.c.h.b16 %v1129
    %v1445 = vunpack.c.l.b16 %v1130
    %v1446 = vunpack.c.h.b16 %v1130
    %v1447 = vunpack.c.l.b16 %v1131
    %v1448 = vunpack.c.h.b16 %v1131
    %v1449 = vunpack.c.l.b16 %v1132
    %v1450 = vunpack.c.h.b16 %v1132
    %v1451 = vunpack.c.l.b16 %v1133
    %v1452 = vunpack.c.h.b16 %v1133
    %v1453 = vunpack.c.l.b16 %v1134
    %v1454 = vunpack.c.h.b16 %v1134
    %v1455 = vunpack.c.l.b16 %v1135
    %v1456 = vunpack.c.h.b16 %v1135
    %v1457 = vunpack.c.l.b16 %v1136
    %v1458 = vunpack.c.h.b16 %v1136
    %v1459 = vunpack.c.l.b16 %v1137
    %v1460 = vunpack.c.h.b16 %v1137
    %v1461 = vunpack.c.l.b16 %v1138
    %v1462 = vunpack.c.h.b16 %v1138
    %v1463 = vunpack.c.l.b16 %v1139
    %v1464 = vunpack.c.h.b16 %v1139
    %v1465 = vunpack.c.l.b16 %v1140
    %v1466 = vunpack.c.h.b16 %v1140
    %v1467 = vunpack.c.l.b16 %v1141
    %v1468 = vunpack.c.h.b16 %v1141
    %v1469 = vunpack.c.l.b16 %v1142
    %v1470 = vunpack.c.h.b16 %v1142
    %v1471 = vunpack.c.l.b16 %v1143
    %v1472 = vunpack.c.h.b16 %v1143
    %v1473 = vunpack.c.l.b16 %v1144
    %v1474 = vunpack.c.h.b16 %v1144
    %v1475 = vunpack.c.l.b16 %v1145
    %v1476 = vunpack.c.h.b16 %v1145
    %v1477 = vunpack.c.l.b16 %v1146
    %v1478 = vunpack.c.h.b16 %v1146
    %v1479 = vunpack.c.l.b16 %v1147
    %v1480 = vunpack.c.h.b16 %v1147
    %v1481 = vunpack.c.l.b16 %v1148
    %v1482 = vunpack.c.h.b16 %v1148
    %v1483 = vunpack.c.l.b16 %v1149
    %v1484 = vunpack.c.h.b16 %v1149
    %v1485 = vunpack.c.l.b16 %v1150
    %v1486 = vunpack.c.h.b16 %v1150
    %v1487 = vunpack.c.l.b16 %v1151
    %v1488 = vunpack.c.h.b16 %v1151
    %v1489 = vunpack.c.l.b16 %v1152
    %v1490 = vunpack.c.h.b16 %v1152
    %v1491 = vunpack.c.l.b16 %v1153
    %v1492 = vunpack.c.h.b16 %v1153
    %v1493 = vunpack.c.l.b16 %v1154
    %v1494 = vunpack.c.h.b16 %v1154
    %v1495 = vunpack.c.l.b16 %v1155
    %v1496 = vunpack.c.h.b16 %v1155
    %v1497 = vunpack.c.l.b16 %v1156
    %v1498 = vunpack.c.h.b16 %v1156
    %v1499 = vunpack.c.l.b16 %v1157
    %v1500 = vunpack.c.h.b16 %v1157
    %v1501 = vunpack.c.l.b16 %v1158
    %v1502 = vunpack.c.h.b16 %v1158
    %v1503 = vunpack.c.l.b16 %v1159
    %v1504 = vunpack.c.h.b16 %v1159
    %v1505 = vunpack.c.l.b16 %v1160
    %v1506 = vunpack.c.h.b16 %v1160
    %v1507 = vunpack.c.l.b16 %v1161
    %v1508 = vunpack.c.h.b16 %v1161
    %v1509 = vunpack.c.l.b16 %v1162
    %v1510 = vunpack.c.h.b16 %v1162
    %v1511 = vunpack.c.l.b16 %v1163
    %v1512 = vunpack.c.h.b16 %v1163
    %v1513 = vunpack.c.l.b16 %v1164
    %v1514 = vunpack.c.h.b16 %v1164
    %v1515 = vunpack.c.l.b16 %v1165
    %v1516 = vunpack.c.h.b16 %v1165
    %v1517 = vunpack.c.l.b16 %v1166
    %v1518 = vunpack.c.h.b16 %v1166
    %v1519 = vunpack.c.l.b16 %v1167
    %v1520 = vunpack.c.h.b16 %v1167
    %v1521 = vunpack.c.l.b16 %v1168
    %v1522 = vunpack.c.h.b16 %v1168
    %v1523 = vunpack.c.l.b16 %v1169
    %v1524 = vunpack.c.h.b16 %v1169
    %v1525 = vunpack.c.l.b16 %v1170
    %v1526 = vunpack.c.h.b16 %v1170
    %v1527 = vunpack.c.l.b16 %v1171
    %v1528 = vunpack.c.h.b16 %v1171
    %v1529 = vunpack.c.l.b16 %v1172
    %v1530 = vunpack.c.h.b16 %v1172
    %v1531 = vunpack.c.l.b16 %v1173
    %v1532 = vunpack.c.h.b16 %v1173
    %v1533 = vunpack.c.l.b16 %v1174
    %v1534 = vunpack.c.h.b16 %v1174
    %v1535 = vunpack.c.l.b16 %v1175
    %v1536 = vunpack.c.h.b16 %v1175
    %v1537 = vunpack.c.l.b16 %v1176
    %v1538 = vunpack.c.h.b16 %v1176
    %v1539 = vunpack.c.l.b16 %v1177
    %v1540 = vunpack.c.h.b16 %v1177
    %v1541 = vunpack.c.l.b16 %v1178
    %v1542 = vunpack.c.h.b16 %v1178
    %v1543 = vunpack.c.l.b16 %v1179
    %v1544 = vunpack.c.h.b16 %v1179
    %v1545 = vunpack.c.l.b16 %v1180
    %v1546 = vunpack.c.h.b16 %v1180
    %v1547 = vunpack.c.l.b16 %v1181
    %v1548 = vunpack.c.h.b16 %v1181
    %v1549 = vunpack.c.l.b16 %v1182
    %v1550 = vunpack.c.h.b16 %v1182
    %v1551 = vunpack.c.l.b16 %v1183
    %v1552 = vunpack.c.h.b16 %v1183
    %v1553 = vunpack.c.l.b16 %v1184
    %v1554 = vunpack.c.h.b16 %v1184
    %v1555 = vunpack.c.l.b16 %v1185
    %v1556 = vunpack.c.h.b16 %v1185
    %v1557 = vunpack.c.l.b16 %v1186
    %v1558 = vunpack.c.h.b16 %v1186
    %v1559 = vunpack.c.l.b16 %v1187
    %v1560 = vunpack.c.h.b16 %v1187
    %v1561 = vunpack.c.l.b16 %v1188
    %v1562 = vunpack.c.h.b16 %v1188
    %v1563 = vunpack.c.l.b16 %v1189
    %v1564 = vunpack.c.h.b16 %v1189
    %v1565 = vunpack.c.l.b16 %v1190
    %v1566 = vunpack.c.h.b16 %v1190
    %v1567 = vunpack.c.l.b16 %v1191
    %v1568 = vunpack.c.h.b16 %v1191
    %v1569 = vunpack.c.l.b16 %v1192
    %v1570 = vunpack.c.h.b16 %v1192
    %v1571 = vunpack.c.l.b16 %v1193
    %v1572 = vunpack.c.h.b16 %v1193
    %v1573 = vunpack.c.l.b16 %v1194
    %v1574 = vunpack.c.h.b16 %v1194
    %v1575 = vunpack.c.l.b16 %v1195
    %v1576 = vunpack.c.h.b16 %v1195
    %v1577 = vunpack.c.l.b16 %v1196
    %v1578 = vunpack.c.h.b16 %v1196
    %v1579 = vunpack.c.l.b16 %v1197
    %v1580 = vunpack.c.h.b16 %v1197
    %v1581 = vunpack.c.l.b16 %v1198
    %v1582 = vunpack.c.h.b16 %v1198
    %v1583 = vunpack.c.l.b16 %v1199
    %v1584 = vunpack.c.h.b16 %v1199
    %v1585 = vunpack.c.l.b16 %v1200
    %v1586 = vunpack.c.h.b16 %v1200
    %v1587 = vunpack.c.l.b16 %v1201
    %v1588 = vunpack.c.h.b16 %v1201
    %v1589 = vunpack.c.l.b16 %v1202
    %v1590 = vunpack.c.h.b16 %v1202
    %v1591 = vunpack.c.l.b16 %v1203
    %v1592 = vunpack.c.h.b16 %v1203
    %v1593 = vunpack.c.l.b16 %v1204
    %v1594 = vunpack.c.h.b16 %v1204
    %v1595 = vunpack.c.l.b16 %v1205
    %v1596 = vunpack.c.h.b16 %v1205
    %v1597 = vunpack.c.l.b16 %v1206
    %v1598 = vunpack.c.h.b16 %v1206
    %v1599 = vunpack.c.l.b16 %v1207
    %v1600 = vunpack.c.h.b16 %v1207
    %v1601 = vunpack.c.l.b16 %v1208
    %v1602 = vunpack.c.h.b16 %v1208
    %v1603 = vunpack.c.l.b16 %v1209
    %v1604 = vunpack.c.h.b16 %v1209
    %v1605 = vunpack.c.l.b16 %v1210
    %v1606 = vunpack.c.h.b16 %v1210
    %v1607 = vunpack.c.l.b16 %v1211
    %v1608 = vunpack.c.h.b16 %v1211
    %v1609 = vunpack.c.l.b16 %v1212
    %v1610 = vunpack.c.h.b16 %v1212
    %v1611 = vunpack.c.l.b16 %v1213
    %v1612 = vunpack.c.h.b16 %v1213
    %v1613 = vunpack.c.l.b16 %v1214
    %v1614 = vunpack.c.h.b16 %v1214
    %v1615 = vunpack.c.l.b16 %v1215
    %v1616 = vunpack.c.h.b16 %v1215
    %v1617 = vunpack.c.l.b16 %v1216
    %v1618 = vunpack.c.h.b16 %v1216
    %v1619 = vunpack.c.l.b16 %v1217
    %v1620 = vunpack.c.h.b16 %v1217
    %v1621 = vunpack.c.l.b16 %v1218
    %v1622 = vunpack.c.h.b16 %v1218
    %v1623 = vunpack.c.l.b16 %v1219
    %v1624 = vunpack.c.h.b16 %v1219
    %v1625 = vunpack.c.l.b16 %v1220
    %v1626 = vunpack.c.h.b16 %v1220
    %v1627 = vpack.c.b16 %v1375, %v1371
    %v1628 = vpack.c.b16 %v1376, %v1372
    %v1629 = vpack.c.b16 %v1377, %v1373
    %v1630 = vpack.c.b16 %v1378, %v1374
    %v1631 = vpack.c.b16 %v1383, %v1379
    %v1632 = vpack.c.b16 %v1384, %v1380
    %v1633 = vpack.c.b16 %v1385, %v1381
    %v1634 = vpack.c.b16 %v1386, %v1382
    %v1635 = vpack.c.b16 %v1391, %v1387
    %v1636 = vpack.c.b16 %v1392, %v1388
    %v1637 = vpack.c.b16 %v1393, %v1389
    %v1638 = vpack.c.b16 %v1394, %v1390
    %v1639 = vpack.c.b16 %v1399, %v1395
    %v1640 = vpack.c.b16 %v1400, %v1396
    %v1641 = vpack.c.b16 %v1401, %v1397
    %v1642 = vpack.c.b16 %v1402, %v1398
    %v1643 = vpack.c.b16 %v1407, %v1403
    %v1644 = vpack.c.b16 %v1408, %v1404
    %v1645 = vpack.c.b16 %v1409, %v1405
    %v1646 = vpack.c.b16 %v1410, %v1406
    %v1647 = vpack.c.b16 %v1415, %v1411
    %v1648 = vpack.c.b16 %v1416, %v1412
    %v1649 = vpack.c.b16 %v1417, %v1413
    %v1650 = vpack.c.b16 %v1418, %v1414
    %v1651 = vpack.c.b16 %v1423, %v1419
    %v1652 = vpack.c.b16 %v1424, %v1420
    %v1653 = vpack.c.b16 %v1425, %v1421
    %v1654 = vpack.c.b16 %v1426, %v1422
    %v1655 = vpack.c.b16 %v1431, %v1427
    %v1656 = vpack.c.b16 %v1432, %v1428
    %v1657 = vpack.c.b16 %v1433, %v1429
    %v1658 = vpack.c.b16 %v1434, %v1430
    %v1659 = vpack.c.b16 %v1439, %v1435
    %v1660 = vpack.c.b16 %v1440, %v1436
    %v1661 = vpack.c.b16 %v1441, %v1437
    %v1662 = vpack.c.b16 %v1442, %v1438
    %v1663 = vpack.c.b16 %v1447, %v1443
    %v1664 = vpack.c.b16 %v1448, %v1444
    %v1665 = vpack.c.b16 %v1449, %v1445
    %v1666 = vpack.c.b16 %v1450, %v1446
    %v1667 = vpack.c.b16 %v1455, %v1451
    %v1668 = vpack.c.b16 %v1456, %v1452
    %v1669 = vpack.c.b16 %v1457, %v1453
    %v1670 = vpack.c.b16 %v1458, %v1454
    %v1671 = vpack.c.b16 %v1463, %v1459
    %v1672 = vpack.c.b16 %v1464, %v1460
    %v1673 = vpack.c.b16 %v1465, %v1461
    %v1674 = vpack.c.b16 %v1466, %v1462
    %v1675 = vpack.c.b16 %v1471, %v1467
    %v1676 = vpack.c.b16 %v1472, %v1468
    %v1677 = vpack.c.b16 %v1473, %v1469
    %v1678 = vpack.c.b16 %v1474, %v1470
    %v1679 = vpack.c.b16 %v1479, %v1475
    %v1680 = vpack.c.b16 %v1480, %v1476
    %v1681 = vpack.c.b16 %v1481, %v1477
    %v1682 = vpack.c.b16 %v1482, %v1478
    %v1683 = vpack.c.b16 %v1487, %v1483
    %v1684 = vpack.c.b16 %v1488, %v1484
    %v1685 = vpack.c.b16 %v1489, %v1485
    %v1686 = vpack.c.b16 %v1490, %v1486
    %v1687 = vpack.c.b16 %v1495, %v1491
    %v1688 = vpack.c.b16 %v1496, %v1492
    %v1689 = vpack.c.b16 %v1497, %v1493
    %v1690 = vpack.c.b16 %v1498, %v1494
    %v1691 = vpack.c.b16 %v1503, %v1499
    %v1692 = vpack.c.b16 %v1504, %v1500
    %v1693 = vpack.c.b16 %v1505, %v1501
    %v1694 = vpack.c.b16 %v1506, %v1502
    %v1695 = vpack.c.b16 %v1511, %v1507
    %v1696 = vpack.c.b16 %v1512, %v1508
    %v1697 = vpack.c.b16 %v1513, %v1509
    %v1698 = vpack.c.b16 %v1514, %v1510
    %v1699 = vpack.c.b16 %v1519, %v1515
    %v1700 = vpack.c.b16 %v1520, %v1516
    %v1701 = vpack.c.b16 %v1521, %v1517
    %v1702 = vpack.c.b16 %v1522, %v1518
    %v1703 = vpack.c.b16 %v1527, %v1523
    %v1704 = vpack.c.b16 %v1528, %v1524
    %v1705 = vpack.c.b16 %v1529, %v1525
    %v1706 = vpack.c.b16 %v1530, %v1526
    %v1707 = vpack.c.b16 %v1535, %v1531
    %v1708 = vpack.c.b16 %v1536, %v1532
    %v1709 = vpack.c.b16 %v1537, %v1533
    %v1710 = vpack.c.b16 %v1538, %v1534
    %v1711 = vpack.c.b16 %v1543, %v1539
    %v1712 = vpack.c.b16 %v1544, %v1540
    %v1713 = vpack.c.b16 %v1545, %v1541
    %v1714 = vpack.c.b16 %v1546, %v1542
    %v1715 = vpack.c.b16 %v1551, %v1547
    %v1716 = vpack.c.b16 %v1552, %v1548
    %v1717 = vpack.c.b16 %v1553, %v1549
    %v1718 = vpack.c.b16 %v1554, %v1550
    %v1719 = vpack.c.b16 %v1559, %v1555
    %v1720 = vpack.c.b16 %v1560, %v1556
    %v1721 = vpack.c.b16 %v1561, %v1557
    %v1722 = vpack.c.b16 %v1562, %v1558
    %v1723 = vpack.c.b16 %v1567, %v1563
    %v1724 = vpack.c.b16 %v1568, %v1564
    %v1725 = vpack.c.b16 %v1569, %v1565
    %v1726 = vpack.c.b16 %v1570, %v1566
    %v1727 = vpack.c.b16 %v1575, %v1571
    %v1728 = vpack.c.b16 %v1576, %v1572
    %v1729 = vpack.c.b16 %v1577, %v1573
    %v1730 = vpack.c.b16 %v1578, %v1574
    %v1731 = vpack.c.b16 %v1583, %v1579
    %v1732 = vpack.c.b16 %v1584, %v1580
    %v1733 = vpack.c.b16 %v1585, %v1581
    %v1734 = vpack.c.b16 %v1586, %v1582
    %v1735 = vpack.c.b16 %v1591, %v1587
    %v1736 = vpack.c.b16 %v1592, %v1588
    %v1737 = vpack.c.b16 %v1593, %v1589
    %v1738 = vpack.c.b16 %v1594, %v1590
    %v1739 = vpack.c.b16 %v1599, %v1595
    %v1740 = vpack.c.b16 %v1600, %v1596
    %v1741 = vpack.c.b16 %v1601, %v1597
    %v1742 = vpack.c.b16 %v1602, %v1598
    %v1743 = vpack.c.b16 %v1607, %v1603
    %v1744 = vpack.c.b16 %v1608, %v1604
    %v1745 = vpack.c.b16 %v1609, %v1605
    %v1746 = vpack.c.b16 %v1610, %v1606
    %v1747 = vpack.c.b16 %v1615, %v1611
    %v1748 = vpack.c.b16 %v1616, %v1612
    %v1749 = vpack.c.b16 %v1617, %v1613
    %v1750 = vpack.c.b16 %v1618, %v1614
    %v1751 = vpack.c.b16 %v1623, %v1619
    %v1752 = vpack.c.b16 %v1624, %v1620
    %v1753 = vpack.c.b16 %v1625, %v1621
    %v1754 = vpack.c.b16 %v1626, %v1622
    %1883 = vmatprep.subr.bf16.mxu0 %v1628
    %1884 = vmatpush1.bf16.msra.mxu0 %v1627
    %1885 = vmatprep.subr.bf16.mxu0 %v1632
    %1886 = vmatpush1.bf16.msra.mxu0 %v1631
    %1887 = vmatprep.subr.bf16.mxu0 %v1636
    %1888 = vmatpush1.bf16.msra.mxu0 %v1635
    %1889 = vmatprep.subr.bf16.mxu0 %v1640
    %1890 = vmatpush1.bf16.msra.mxu0 %v1639
    %1891 = vmatprep.subr.bf16.mxu0 %v1644
    %1892 = vmatpush1.bf16.msra.mxu0 %v1643
    %1893 = vmatprep.subr.bf16.mxu0 %v1648
    %1894 = vmatpush1.bf16.msra.mxu0 %v1647
    %1895 = vmatprep.subr.bf16.mxu0 %v1652
    %1896 = vmatpush1.bf16.msra.mxu0 %v1651
    %1897 = vmatprep.subr.bf16.mxu0 %v1656
    %1898 = vmatpush1.bf16.msra.mxu0 %v1655
    %1899 = vmatprep.subr.bf16.mxu0 %v1660
    %1900 = vmatpush1.bf16.msra.mxu0 %v1659
    %1901 = vmatprep.subr.bf16.mxu0 %v1664
    %1902 = vmatpush1.bf16.msra.mxu0 %v1663
    %1903 = vmatprep.subr.bf16.mxu0 %v1668
    %1904 = vmatpush1.bf16.msra.mxu0 %v1667
    %1905 = vmatprep.subr.bf16.mxu0 %v1672
    %1906 = vmatpush1.bf16.msra.mxu0 %v1671
    %1907 = vmatprep.subr.bf16.mxu0 %v1676
    %1908 = vmatpush1.bf16.msra.mxu0 %v1675
    %1909 = vmatprep.subr.bf16.mxu0 %v1680
    %1910 = vmatpush1.bf16.msra.mxu0 %v1679
    %1911 = vmatprep.subr.bf16.mxu0 %v1684
    %1912 = vmatpush1.bf16.msra.mxu0 %v1683
    %1913 = vmatprep.subr.bf16.mxu0 %v1688
    %1914 = vmatpush1.bf16.msra.mxu0 %v1687
    %1915 = vmatprep.mubr.bf16.mxu0 %v1090
    %1916 = vmatmul.mubr.bf16.gmra.mrb[0].mxu0 %v1089
    %v1917 = vpop.f32.mrb[0].mxu0
    %v1918 = vadd.f32 %v1226, %v1917
    %v1919 = vpop.f32.mrb[0].mxu0
    %v1920 = vadd.f32 %v1230, %v1919
    %v1921 = vpop.f32.mrb[0].mxu0
    %v1922 = vpop.f32.mrb[0].mxu0
    %1923 = vdwg.mxu0
    %1924 = vmatprep.subr.bf16.mxu0 %v1692
    %1925 = vmatpush1.bf16.msra.mxu0 %v1691
    %1926 = vmatprep.subr.bf16.mxu0 %v1696
    %1927 = vmatpush1.bf16.msra.mxu0 %v1695
    %1928 = vmatprep.subr.bf16.mxu0 %v1700
    %1929 = vmatpush1.bf16.msra.mxu0 %v1699
    %1930 = vmatprep.subr.bf16.mxu0 %v1704
    %1931 = vmatpush1.bf16.msra.mxu0 %v1703
    %1932 = vmatprep.subr.bf16.mxu0 %v1708
    %1933 = vmatpush1.bf16.msra.mxu0 %v1707
    %1934 = vmatprep.subr.bf16.mxu0 %v1712
    %1935 = vmatpush1.bf16.msra.mxu0 %v1711
    %1936 = vmatprep.subr.bf16.mxu0 %v1716
    %1937 = vmatpush1.bf16.msra.mxu0 %v1715
    %1938 = vmatprep.subr.bf16.mxu0 %v1720
    %1939 = vmatpush1.bf16.msra.mxu0 %v1719
    %1940 = vmatprep.subr.bf16.mxu0 %v1724
    %1941 = vmatpush1.bf16.msra.mxu0 %v1723
    %1942 = vmatprep.subr.bf16.mxu0 %v1728
    %1943 = vmatpush1.bf16.msra.mxu0 %v1727
    %1944 = vmatprep.subr.bf16.mxu0 %v1732
    %1945 = vmatpush1.bf16.msra.mxu0 %v1731
    %1946 = vmatprep.subr.bf16.mxu0 %v1736
    %1947 = vmatpush1.bf16.msra.mxu0 %v1735
    %1948 = vmatprep.subr.bf16.mxu0 %v1740
    %1949 = vmatpush1.bf16.msra.mxu0 %v1739
    %1950 = vmatprep.subr.bf16.mxu0 %v1744
    %1951 = vmatpush1.bf16.msra.mxu0 %v1743
    %1952 = vmatprep.subr.bf16.mxu0 %v1748
    %1953 = vmatpush1.bf16.msra.mxu0 %v1747
    %1954 = vmatprep.subr.bf16.mxu0 %v1752
    %1955 = vmatpush1.bf16.msra.mxu0 %v1751
    %1956 = vmatprep.mubr.bf16.mxu0 %v1092
    %1957 = vmatmul.mubr.bf16.gmra.mrb[0].mxu0 %v1091
    %v1958 = vpop.f32.mrb[0].mxu0
    %v1959 = vadd.f32 %v1918, %v1958
    %v1960 = vpop.f32.mrb[0].mxu0
    %v1961 = vadd.f32 %v1920, %v1960
    %v1962 = vpop.f32.mrb[0].mxu0
    %v1963 = vpop.f32.mrb[0].mxu0
    %1964 = vdwg.mxu0
    %1965 = vmatprep.subr.bf16.mxu0 %v1630
    %1966 = vmatpush1.bf16.msra.mxu0 %v1629
    %1967 = vmatprep.subr.bf16.mxu0 %v1634
    %1968 = vmatpush1.bf16.msra.mxu0 %v1633
    %1969 = vmatprep.subr.bf16.mxu0 %v1638
    %1970 = vmatpush1.bf16.msra.mxu0 %v1637
    %1971 = vmatprep.subr.bf16.mxu0 %v1642
    %1972 = vmatpush1.bf16.msra.mxu0 %v1641
    %1973 = vmatprep.subr.bf16.mxu0 %v1646
    %1974 = vmatpush1.bf16.msra.mxu0 %v1645
    %1975 = vmatprep.subr.bf16.mxu0 %v1650
    %1976 = vmatpush1.bf16.msra.mxu0 %v1649
    %1977 = vmatprep.subr.bf16.mxu0 %v1654
    %1978 = vmatpush1.bf16.msra.mxu0 %v1653
    %1979 = vmatprep.subr.bf16.mxu0 %v1658
    %1980 = vmatpush1.bf16.msra.mxu0 %v1657
    %1981 = vmatprep.subr.bf16.mxu0 %v1662
    %1982 = vmatpush1.bf16.msra.mxu0 %v1661
    %1983 = vmatprep.subr.bf16.mxu0 %v1666
    %1984 = vmatpush1.bf16.msra.mxu0 %v1665
    %1985 = vmatprep.subr.bf16.mxu0 %v1670
    %1986 = vmatpush1.bf16.msra.mxu0 %v1669
    %1987 = vmatprep.subr.bf16.mxu0 %v1674
    %1988 = vmatpush1.bf16.msra.mxu0 %v1673
    %1989 = vmatprep.subr.bf16.mxu0 %v1678
    %1990 = vmatpush1.bf16.msra.mxu0 %v1677
    %1991 = vmatprep.subr.bf16.mxu0 %v1682
    %1992 = vmatpush1.bf16.msra.mxu0 %v1681
    %1993 = vmatprep.subr.bf16.mxu0 %v1686
    %1994 = vmatpush1.bf16.msra.mxu0 %v1685
    %1995 = vmatprep.subr.bf16.mxu0 %v1690
    %1996 = vmatpush1.bf16.msra.mxu0 %v1689
    %1997 = vmatprep.mubr.bf16.mxu0 %v1090
    %1998 = vmatmul.mubr.bf16.gmra.mrb[0].mxu0 %v1089
    %v1999 = vpop.f32.mrb[0].mxu0
    %v2000 = vadd.f32 %v1234, %v1999
    %v2001 = vpop.f32.mrb[0].mxu0
    %v2002 = vadd.f32 %v1238, %v2001
    %v2003 = vpop.f32.mrb[0].mxu0
    %v2004 = vpop.f32.mrb[0].mxu0
    %2005 = vdwg.mxu0
    %2006 = vmatprep.subr.bf16.mxu0 %v1694
    %2007 = vmatpush1.bf16.msra.mxu0 %v1693
    %2008 = vmatprep.subr.bf16.mxu0 %v1698
    %2009 = vmatpush1.bf16.msra.mxu0 %v1697
    %2010 = vmatprep.subr.bf16.mxu0 %v1702
    %2011 = vmatpush1.bf16.msra.mxu0 %v1701
    %2012 = vmatprep.subr.bf16.mxu0 %v1706
    %2013 = vmatpush1.bf16.msra.mxu0 %v1705
    %2014 = vmatprep.subr.bf16.mxu0 %v1710
    %2015 = vmatpush1.bf16.msra.mxu0 %v1709
    %2016 = vmatprep.subr.bf16.mxu0 %v1714
    %2017 = vmatpush1.bf16.msra.mxu0 %v1713
    %2018 = vmatprep.subr.bf16.mxu0 %v1718
    %2019 = vmatpush1.bf16.msra.mxu0 %v1717
    %2020 = vmatprep.subr.bf16.mxu0 %v1722
    %2021 = vmatpush1.bf16.msra.mxu0 %v1721
    %2022 = vmatprep.subr.bf16.mxu0 %v1726
    %2023 = vmatpush1.bf16.msra.mxu0 %v1725
    %2024 = vmatprep.subr.bf16.mxu0 %v1730
    %2025 = vmatpush1.bf16.msra.mxu0 %v1729
    %2026 = vmatprep.subr.bf16.mxu0 %v1734
    %2027 = vmatpush1.bf16.msra.mxu0 %v1733
    %2028 = vmatprep.subr.bf16.mxu0 %v1738
    %2029 = vmatpush1.bf16.msra.mxu0 %v1737
    %2030 = vmatprep.subr.bf16.mxu0 %v1742
    %2031 = vmatpush1.bf16.msra.mxu0 %v1741
    %2032 = vmatprep.subr.bf16.mxu0 %v1746
    %2033 = vmatpush1.bf16.msra.mxu0 %v1745
    %2034 = vmatprep.subr.bf16.mxu0 %v1750
    %2035 = vmatpush1.bf16.msra.mxu0 %v1749
    %2036 = vmatprep.subr.bf16.mxu0 %v1754
    %2037 = vmatpush1.bf16.msra.mxu0 %v1753
    %2038 = vmatprep.mubr.bf16.mxu0 %v1092
    %2039 = vmatmul.mubr.bf16.gmra.mrb[0].mxu0 %v1091
    %v2040 = vpop.f32.mrb[0].mxu0
    %v2041 = vadd.f32 %v2000, %v2040
    %v2042 = vpop.f32.mrb[0].mxu0
    %v2043 = vadd.f32 %v2002, %v2042
    %v2044 = vpop.f32.mrb[0].mxu0
    %v2045 = vpop.f32.mrb[0].mxu0
    %2046 = vdwg.mxu0
    %v2047 = vmax.f32 %v1959, 0.0
    %v2048 = vmax.f32 %v1961, 0.0
    %v2049 = vmax.f32 %v2041, 0.0
    %v2050 = vmax.f32 %v2043, 0.0
    %v2051 = vpack.c.bf16 %v2047, %v2047
    %v2052 = vpack.c.bf16 %v2048, %v2048
    %v2053 = vpack.c.bf16 %v2049, %v2049
    %v2054 = vpack.c.bf16 %v2050, %v2050
    %v2055 = vld [vmem:[#allocation13] sm:$0xff]
    %v2056 = vld [vmem:[#allocation13 + $0x8] sm:$0xff]
    %v2057 = vld [vmem:[#allocation13 + $0x10] sm:$0xff]
    %v2058 = vld [vmem:[#allocation13 + $0x18] sm:$0xff]
    %v2059 = vld [vmem:[#allocation13 + $0x20] sm:$0xff]
    %v2060 = vld [vmem:[#allocation13 + $0x28] sm:$0xff]
    %v2061 = vld [vmem:[#allocation13 + $0x30] sm:$0xff]
    %v2062 = vld [vmem:[#allocation13 + $0x38] sm:$0xff]
    %v2063 = vld [vmem:[#allocation13 + $0x40] sm:$0xff]
    %v2064 = vld [vmem:[#allocation13 + $0x48] sm:$0xff]
    %v2065 = vld [vmem:[#allocation13 + $0x50] sm:$0xff]
    %v2066 = vld [vmem:[#allocation13 + $0x58] sm:$0xff]
    %v2067 = vld [vmem:[#allocation13 + $0x60] sm:$0xff]
    %v2068 = vld [vmem:[#allocation13 + $0x68] sm:$0xff]
    %v2069 = vld [vmem:[#allocation13 + $0x70] sm:$0xff]
    %v2070 = vld [vmem:[#allocation13 + $0x78] sm:$0xff]
    %v2071 = vld [vmem:[#allocation13 + $0x80] sm:$0xff]
    %v2072 = vld [vmem:[#allocation13 + $0x88] sm:$0xff]
    %v2073 = vld [vmem:[#allocation13 + $0x90] sm:$0xff]
    %v2074 = vld [vmem:[#allocation13 + $0x98] sm:$0xff]
    %v2075 = vld [vmem:[#allocation13 + $0xa0] sm:$0xff]
    %v2076 = vld [vmem:[#allocation13 + $0xa8] sm:$0xff]
    %v2077 = vld [vmem:[#allocation13 + $0xb0] sm:$0xff]
    %v2078 = vld [vmem:[#allocation13 + $0xb8] sm:$0xff]
    %v2079 = vld [vmem:[#allocation13 + $0xc0] sm:$0xff]
    %v2080 = vld [vmem:[#allocation13 + $0xc8] sm:$0xff]
    %v2081 = vld [vmem:[#allocation13 + $0xd0] sm:$0xff]
    %v2082 = vld [vmem:[#allocation13 + $0xd8] sm:$0xff]
    %v2083 = vld [vmem:[#allocation13 + $0xe0] sm:$0xff]
    %v2084 = vld [vmem:[#allocation13 + $0xe8] sm:$0xff]
    %v2085 = vld [vmem:[#allocation13 + $0xf0] sm:$0xff]
    %v2086 = vld [vmem:[#allocation13 + $0xf8] sm:$0xff]
    %v2087 = vld [vmem:[#allocation13 + $0x100] sm:$0xff]
    %v2088 = vld [vmem:[#allocation13 + $0x108] sm:$0xff]
    %v2089 = vld [vmem:[#allocation13 + $0x110] sm:$0xff]
    %v2090 = vld [vmem:[#allocation13 + $0x118] sm:$0xff]
    %v2091 = vld [vmem:[#allocation13 + $0x120] sm:$0xff]
    %v2092 = vld [vmem:[#allocation13 + $0x128] sm:$0xff]
    %v2093 = vld [vmem:[#allocation13 + $0x130] sm:$0xff]
    %v2094 = vld [vmem:[#allocation13 + $0x138] sm:$0xff]
    %v2095 = vld [vmem:[#allocation13 + $0x140] sm:$0xff]
    %v2096 = vld [vmem:[#allocation13 + $0x148] sm:$0xff]
    %v2097 = vld [vmem:[#allocation13 + $0x150] sm:$0xff]
    %v2098 = vld [vmem:[#allocation13 + $0x158] sm:$0xff]
    %v2099 = vld [vmem:[#allocation13 + $0x160] sm:$0xff]
    %v2100 = vld [vmem:[#allocation13 + $0x168] sm:$0xff]
    %v2101 = vld [vmem:[#allocation13 + $0x170] sm:$0xff]
    %v2102 = vld [vmem:[#allocation13 + $0x178] sm:$0xff]
    %v2103 = vld [vmem:[#allocation13 + $0x180] sm:$0xff]
    %v2104 = vld [vmem:[#allocation13 + $0x188] sm:$0xff]
    %v2105 = vld [vmem:[#allocation13 + $0x190] sm:$0xff]
    %v2106 = vld [vmem:[#allocation13 + $0x198] sm:$0xff]
    %v2107 = vld [vmem:[#allocation13 + $0x1a0] sm:$0xff]
    %v2108 = vld [vmem:[#allocation13 + $0x1a8] sm:$0xff]
    %v2109 = vld [vmem:[#allocation13 + $0x1b0] sm:$0xff]
    %v2110 = vld [vmem:[#allocation13 + $0x1b8] sm:$0xff]
    %v2111 = vld [vmem:[#allocation13 + $0x1c0] sm:$0xff]
    %v2112 = vld [vmem:[#allocation13 + $0x1c8] sm:$0xff]
    %v2113 = vld [vmem:[#allocation13 + $0x1d0] sm:$0xff]
    %v2114 = vld [vmem:[#allocation13 + $0x1d8] sm:$0xff]
    %v2115 = vld [vmem:[#allocation13 + $0x1e0] sm:$0xff]
    %v2116 = vld [vmem:[#allocation13 + $0x1e8] sm:$0xff]
    %v2117 = vld [vmem:[#allocation13 + $0x1f0] sm:$0xff]
    %v2118 = vld [vmem:[#allocation13 + $0x1f8] sm:$0xff]
    %v2119 = vld [vmem:[#allocation13 + $0x200] sm:$0xff]
    %v2120 = vld [vmem:[#allocation13 + $0x208] sm:$0xff]
    %v2121 = vld [vmem:[#allocation13 + $0x210] sm:$0xff]
    %v2122 = vld [vmem:[#allocation13 + $0x218] sm:$0xff]
    %v2123 = vld [vmem:[#allocation13 + $0x220] sm:$0xff]
    %v2124 = vld [vmem:[#allocation13 + $0x228] sm:$0xff]
    %v2125 = vld [vmem:[#allocation13 + $0x230] sm:$0xff]
    %v2126 = vld [vmem:[#allocation13 + $0x238] sm:$0xff]
    %v2127 = vld [vmem:[#allocation13 + $0x240] sm:$0xff]
    %v2128 = vld [vmem:[#allocation13 + $0x248] sm:$0xff]
    %v2129 = vld [vmem:[#allocation13 + $0x250] sm:$0xff]
    %v2130 = vld [vmem:[#allocation13 + $0x258] sm:$0xff]
    %v2131 = vld [vmem:[#allocation13 + $0x260] sm:$0xff]
    %v2132 = vld [vmem:[#allocation13 + $0x268] sm:$0xff]
    %v2133 = vld [vmem:[#allocation13 + $0x270] sm:$0xff]
    %v2134 = vld [vmem:[#allocation13 + $0x278] sm:$0xff]
    %v2135 = vld [vmem:[#allocation13 + $0x280] sm:$0xff]
    %v2136 = vld [vmem:[#allocation13 + $0x288] sm:$0xff]
    %v2137 = vld [vmem:[#allocation13 + $0x290] sm:$0xff]
    %v2138 = vld [vmem:[#allocation13 + $0x298] sm:$0xff]
    %v2139 = vld [vmem:[#allocation13 + $0x2a0] sm:$0xff]
    %v2140 = vld [vmem:[#allocation13 + $0x2a8] sm:$0xff]
    %v2141 = vld [vmem:[#allocation13 + $0x2b0] sm:$0xff]
    %v2142 = vld [vmem:[#allocation13 + $0x2b8] sm:$0xff]
    %v2143 = vld [vmem:[#allocation13 + $0x2c0] sm:$0xff]
    %v2144 = vld [vmem:[#allocation13 + $0x2c8] sm:$0xff]
    %v2145 = vld [vmem:[#allocation13 + $0x2d0] sm:$0xff]
    %v2146 = vld [vmem:[#allocation13 + $0x2d8] sm:$0xff]
    %v2147 = vld [vmem:[#allocation13 + $0x2e0] sm:$0xff]
    %v2148 = vld [vmem:[#allocation13 + $0x2e8] sm:$0xff]
    %v2149 = vld [vmem:[#allocation13 + $0x2f0] sm:$0xff]
    %v2150 = vld [vmem:[#allocation13 + $0x2f8] sm:$0xff]
    %v2151 = vld [vmem:[#allocation13 + $0x300] sm:$0xff]
    %v2152 = vld [vmem:[#allocation13 + $0x308] sm:$0xff]
    %v2153 = vld [vmem:[#allocation13 + $0x310] sm:$0xff]
    %v2154 = vld [vmem:[#allocation13 + $0x318] sm:$0xff]
    %v2155 = vld [vmem:[#allocation13 + $0x320] sm:$0xff]
    %v2156 = vld [vmem:[#allocation13 + $0x328] sm:$0xff]
    %v2157 = vld [vmem:[#allocation13 + $0x330] sm:$0xff]
    %v2158 = vld [vmem:[#allocation13 + $0x338] sm:$0xff]
    %v2159 = vld [vmem:[#allocation13 + $0x340] sm:$0xff]
    %v2160 = vld [vmem:[#allocation13 + $0x348] sm:$0xff]
    %v2161 = vld [vmem:[#allocation13 + $0x350] sm:$0xff]
    %v2162 = vld [vmem:[#allocation13 + $0x358] sm:$0xff]
    %v2163 = vld [vmem:[#allocation13 + $0x360] sm:$0xff]
    %v2164 = vld [vmem:[#allocation13 + $0x368] sm:$0xff]
    %v2165 = vld [vmem:[#allocation13 + $0x370] sm:$0xff]
    %v2166 = vld [vmem:[#allocation13 + $0x378] sm:$0xff]
    %v2167 = vld [vmem:[#allocation13 + $0x380] sm:$0xff]
    %v2168 = vld [vmem:[#allocation13 + $0x388] sm:$0xff]
    %v2169 = vld [vmem:[#allocation13 + $0x390] sm:$0xff]
    %v2170 = vld [vmem:[#allocation13 + $0x398] sm:$0xff]
    %v2171 = vld [vmem:[#allocation13 + $0x3a0] sm:$0xff]
    %v2172 = vld [vmem:[#allocation13 + $0x3a8] sm:$0xff]
    %v2173 = vld [vmem:[#allocation13 + $0x3b0] sm:$0xff]
    %v2174 = vld [vmem:[#allocation13 + $0x3b8] sm:$0xff]
    %v2175 = vld [vmem:[#allocation13 + $0x3c0] sm:$0xff]
    %v2176 = vld [vmem:[#allocation13 + $0x3c8] sm:$0xff]
    %v2177 = vld [vmem:[#allocation13 + $0x3d0] sm:$0xff]
    %v2178 = vld [vmem:[#allocation13 + $0x3d8] sm:$0xff]
    %v2179 = vld [vmem:[#allocation13 + $0x3e0] sm:$0xff]
    %v2180 = vld [vmem:[#allocation13 + $0x3e8] sm:$0xff]
    %v2181 = vld [vmem:[#allocation13 + $0x3f0] sm:$0xff]
    %v2182 = vld [vmem:[#allocation13 + $0x3f8] sm:$0xff]
    %v2183 = vld [vmem:[%s10] sm:$0xf]
    %v2185 = vlaneseq
    %v2186 = vshrl.u32 %v2185, 7
    %v2187 = vsub.s32 0, %v2186
    %v2188 = vrot.slane %v2183, %v2187
    %v2189 = vlaneseq
    %v2190 = vshrl.u32 %v2189, 7
    %v2191 = vsub.s32 1, %v2190
    %v2192 = vrot.slane %v2183, %v2191
    %v2193 = vlaneseq
    %v2194 = vshrl.u32 %v2193, 7
    %v2195 = vsub.s32 2, %v2194
    %v2196 = vrot.slane %v2183, %v2195
    %v2197 = vlaneseq
    %v2198 = vshrl.u32 %v2197, 7
    %v2199 = vsub.s32 3, %v2198
    %v2200 = vrot.slane %v2183, %v2199
    %v2333 = vunpack.c.l.b16 %v2055
    %v2334 = vunpack.c.h.b16 %v2055
    %v2335 = vunpack.c.l.b16 %v2056
    %v2336 = vunpack.c.h.b16 %v2056
    %v2337 = vunpack.c.l.b16 %v2057
    %v2338 = vunpack.c.h.b16 %v2057
    %v2339 = vunpack.c.l.b16 %v2058
    %v2340 = vunpack.c.h.b16 %v2058
    %v2341 = vunpack.c.l.b16 %v2059
    %v2342 = vunpack.c.h.b16 %v2059
    %v2343 = vunpack.c.l.b16 %v2060
    %v2344 = vunpack.c.h.b16 %v2060
    %v2345 = vunpack.c.l.b16 %v2061
    %v2346 = vunpack.c.h.b16 %v2061
    %v2347 = vunpack.c.l.b16 %v2062
    %v2348 = vunpack.c.h.b16 %v2062
    %v2349 = vunpack.c.l.b16 %v2063
    %v2350 = vunpack.c.h.b16 %v2063
    %v2351 = vunpack.c.l.b16 %v2064
    %v2352 = vunpack.c.h.b16 %v2064
    %v2353 = vunpack.c.l.b16 %v2065
    %v2354 = vunpack.c.h.b16 %v2065
    %v2355 = vunpack.c.l.b16 %v2066
    %v2356 = vunpack.c.h.b16 %v2066
    %v2357 = vunpack.c.l.b16 %v2067
    %v2358 = vunpack.c.h.b16 %v2067
    %v2359 = vunpack.c.l.b16 %v2068
    %v2360 = vunpack.c.h.b16 %v2068
    %v2361 = vunpack.c.l.b16 %v2069
    %v2362 = vunpack.c.h.b16 %v2069
    %v2363 = vunpack.c.l.b16 %v2070
    %v2364 = vunpack.c.h.b16 %v2070
    %v2365 = vunpack.c.l.b16 %v2071
    %v2366 = vunpack.c.h.b16 %v2071
    %v2367 = vunpack.c.l.b16 %v2072
    %v2368 = vunpack.c.h.b16 %v2072
    %v2369 = vunpack.c.l.b16 %v2073
    %v2370 = vunpack.c.h.b16 %v2073
    %v2371 = vunpack.c.l.b16 %v2074
    %v2372 = vunpack.c.h.b16 %v2074
    %v2373 = vunpack.c.l.b16 %v2075
    %v2374 = vunpack.c.h.b16 %v2075
    %v2375 = vunpack.c.l.b16 %v2076
    %v2376 = vunpack.c.h.b16 %v2076
    %v2377 = vunpack.c.l.b16 %v2077
    %v2378 = vunpack.c.h.b16 %v2077
    %v2379 = vunpack.c.l.b16 %v2078
    %v2380 = vunpack.c.h.b16 %v2078
    %v2381 = vunpack.c.l.b16 %v2079
    %v2382 = vunpack.c.h.b16 %v2079
    %v2383 = vunpack.c.l.b16 %v2080
    %v2384 = vunpack.c.h.b16 %v2080
    %v2385 = vunpack.c.l.b16 %v2081
    %v2386 = vunpack.c.h.b16 %v2081
    %v2387 = vunpack.c.l.b16 %v2082
    %v2388 = vunpack.c.h.b16 %v2082
    %v2389 = vunpack.c.l.b16 %v2083
    %v2390 = vunpack.c.h.b16 %v2083
    %v2391 = vunpack.c.l.b16 %v2084
    %v2392 = vunpack.c.h.b16 %v2084
    %v2393 = vunpack.c.l.b16 %v2085
    %v2394 = vunpack.c.h.b16 %v2085
    %v2395 = vunpack.c.l.b16 %v2086
    %v2396 = vunpack.c.h.b16 %v2086
    %v2397 = vunpack.c.l.b16 %v2087
    %v2398 = vunpack.c.h.b16 %v2087
    %v2399 = vunpack.c.l.b16 %v2088
    %v2400 = vunpack.c.h.b16 %v2088
    %v2401 = vunpack.c.l.b16 %v2089
    %v2402 = vunpack.c.h.b16 %v2089
    %v2403 = vunpack.c.l.b16 %v2090
    %v2404 = vunpack.c.h.b16 %v2090
    %v2405 = vunpack.c.l.b16 %v2091
    %v2406 = vunpack.c.h.b16 %v2091
    %v2407 = vunpack.c.l.b16 %v2092
    %v2408 = vunpack.c.h.b16 %v2092
    %v2409 = vunpack.c.l.b16 %v2093
    %v2410 = vunpack.c.h.b16 %v2093
    %v2411 = vunpack.c.l.b16 %v2094
    %v2412 = vunpack.c.h.b16 %v2094
    %v2413 = vunpack.c.l.b16 %v2095
    %v2414 = vunpack.c.h.b16 %v2095
    %v2415 = vunpack.c.l.b16 %v2096
    %v2416 = vunpack.c.h.b16 %v2096
    %v2417 = vunpack.c.l.b16 %v2097
    %v2418 = vunpack.c.h.b16 %v2097
    %v2419 = vunpack.c.l.b16 %v2098
    %v2420 = vunpack.c.h.b16 %v2098
    %v2421 = vunpack.c.l.b16 %v2099
    %v2422 = vunpack.c.h.b16 %v2099
    %v2423 = vunpack.c.l.b16 %v2100
    %v2424 = vunpack.c.h.b16 %v2100
    %v2425 = vunpack.c.l.b16 %v2101
    %v2426 = vunpack.c.h.b16 %v2101
    %v2427 = vunpack.c.l.b16 %v2102
    %v2428 = vunpack.c.h.b16 %v2102
    %v2429 = vunpack.c.l.b16 %v2103
    %v2430 = vunpack.c.h.b16 %v2103
    %v2431 = vunpack.c.l.b16 %v2104
    %v2432 = vunpack.c.h.b16 %v2104
    %v2433 = vunpack.c.l.b16 %v2105
    %v2434 = vunpack.c.h.b16 %v2105
    %v2435 = vunpack.c.l.b16 %v2106
    %v2436 = vunpack.c.h.b16 %v2106
    %v2437 = vunpack.c.l.b16 %v2107
    %v2438 = vunpack.c.h.b16 %v2107
    %v2439 = vunpack.c.l.b16 %v2108
    %v2440 = vunpack.c.h.b16 %v2108
    %v2441 = vunpack.c.l.b16 %v2109
    %v2442 = vunpack.c.h.b16 %v2109
    %v2443 = vunpack.c.l.b16 %v2110
    %v2444 = vunpack.c.h.b16 %v2110
    %v2445 = vunpack.c.l.b16 %v2111
    %v2446 = vunpack.c.h.b16 %v2111
    %v2447 = vunpack.c.l.b16 %v2112
    %v2448 = vunpack.c.h.b16 %v2112
    %v2449 = vunpack.c.l.b16 %v2113
    %v2450 = vunpack.c.h.b16 %v2113
    %v2451 = vunpack.c.l.b16 %v2114
    %v2452 = vunpack.c.h.b16 %v2114
    %v2453 = vunpack.c.l.b16 %v2115
    %v2454 = vunpack.c.h.b16 %v2115
    %v2455 = vunpack.c.l.b16 %v2116
    %v2456 = vunpack.c.h.b16 %v2116
    %v2457 = vunpack.c.l.b16 %v2117
    %v2458 = vunpack.c.h.b16 %v2117
    %v2459 = vunpack.c.l.b16 %v2118
    %v2460 = vunpack.c.h.b16 %v2118
    %v2461 = vunpack.c.l.b16 %v2119
    %v2462 = vunpack.c.h.b16 %v2119
    %v2463 = vunpack.c.l.b16 %v2120
    %v2464 = vunpack.c.h.b16 %v2120
    %v2465 = vunpack.c.l.b16 %v2121
    %v2466 = vunpack.c.h.b16 %v2121
    %v2467 = vunpack.c.l.b16 %v2122
    %v2468 = vunpack.c.h.b16 %v2122
    %v2469 = vunpack.c.l.b16 %v2123
    %v2470 = vunpack.c.h.b16 %v2123
    %v2471 = vunpack.c.l.b16 %v2124
    %v2472 = vunpack.c.h.b16 %v2124
    %v2473 = vunpack.c.l.b16 %v2125
    %v2474 = vunpack.c.h.b16 %v2125
    %v2475 = vunpack.c.l.b16 %v2126
    %v2476 = vunpack.c.h.b16 %v2126
    %v2477 = vunpack.c.l.b16 %v2127
    %v2478 = vunpack.c.h.b16 %v2127
    %v2479 = vunpack.c.l.b16 %v2128
    %v2480 = vunpack.c.h.b16 %v2128
    %v2481 = vunpack.c.l.b16 %v2129
    %v2482 = vunpack.c.h.b16 %v2129
    %v2483 = vunpack.c.l.b16 %v2130
    %v2484 = vunpack.c.h.b16 %v2130
    %v2485 = vunpack.c.l.b16 %v2131
    %v2486 = vunpack.c.h.b16 %v2131
    %v2487 = vunpack.c.l.b16 %v2132
    %v2488 = vunpack.c.h.b16 %v2132
    %v2489 = vunpack.c.l.b16 %v2133
    %v2490 = vunpack.c.h.b16 %v2133
    %v2491 = vunpack.c.l.b16 %v2134
    %v2492 = vunpack.c.h.b16 %v2134
    %v2493 = vunpack.c.l.b16 %v2135
    %v2494 = vunpack.c.h.b16 %v2135
    %v2495 = vunpack.c.l.b16 %v2136
    %v2496 = vunpack.c.h.b16 %v2136
    %v2497 = vunpack.c.l.b16 %v2137
    %v2498 = vunpack.c.h.b16 %v2137
    %v2499 = vunpack.c.l.b16 %v2138
    %v2500 = vunpack.c.h.b16 %v2138
    %v2501 = vunpack.c.l.b16 %v2139
    %v2502 = vunpack.c.h.b16 %v2139
    %v2503 = vunpack.c.l.b16 %v2140
    %v2504 = vunpack.c.h.b16 %v2140
    %v2505 = vunpack.c.l.b16 %v2141
    %v2506 = vunpack.c.h.b16 %v2141
    %v2507 = vunpack.c.l.b16 %v2142
    %v2508 = vunpack.c.h.b16 %v2142
    %v2509 = vunpack.c.l.b16 %v2143
    %v2510 = vunpack.c.h.b16 %v2143
    %v2511 = vunpack.c.l.b16 %v2144
    %v2512 = vunpack.c.h.b16 %v2144
    %v2513 = vunpack.c.l.b16 %v2145
    %v2514 = vunpack.c.h.b16 %v2145
    %v2515 = vunpack.c.l.b16 %v2146
    %v2516 = vunpack.c.h.b16 %v2146
    %v2517 = vunpack.c.l.b16 %v2147
    %v2518 = vunpack.c.h.b16 %v2147
    %v2519 = vunpack.c.l.b16 %v2148
    %v2520 = vunpack.c.h.b16 %v2148
    %v2521 = vunpack.c.l.b16 %v2149
    %v2522 = vunpack.c.h.b16 %v2149
    %v2523 = vunpack.c.l.b16 %v2150
    %v2524 = vunpack.c.h.b16 %v2150
    %v2525 = vunpack.c.l.b16 %v2151
    %v2526 = vunpack.c.h.b16 %v2151
    %v2527 = vunpack.c.l.b16 %v2152
    %v2528 = vunpack.c.h.b16 %v2152
    %v2529 = vunpack.c.l.b16 %v2153
    %v2530 = vunpack.c.h.b16 %v2153
    %v2531 = vunpack.c.l.b16 %v2154
    %v2532 = vunpack.c.h.b16 %v2154
    %v2533 = vunpack.c.l.b16 %v2155
    %v2534 = vunpack.c.h.b16 %v2155
    %v2535 = vunpack.c.l.b16 %v2156
    %v2536 = vunpack.c.h.b16 %v2156
    %v2537 = vunpack.c.l.b16 %v2157
    %v2538 = vunpack.c.h.b16 %v2157
    %v2539 = vunpack.c.l.b16 %v2158
    %v2540 = vunpack.c.h.b16 %v2158
    %v2541 = vunpack.c.l.b16 %v2159
    %v2542 = vunpack.c.h.b16 %v2159
    %v2543 = vunpack.c.l.b16 %v2160
    %v2544 = vunpack.c.h.b16 %v2160
    %v2545 = vunpack.c.l.b16 %v2161
    %v2546 = vunpack.c.h.b16 %v2161
    %v2547 = vunpack.c.l.b16 %v2162
    %v2548 = vunpack.c.h.b16 %v2162
    %v2549 = vunpack.c.l.b16 %v2163
    %v2550 = vunpack.c.h.b16 %v2163
    %v2551 = vunpack.c.l.b16 %v2164
    %v2552 = vunpack.c.h.b16 %v2164
    %v2553 = vunpack.c.l.b16 %v2165
    %v2554 = vunpack.c.h.b16 %v2165
    %v2555 = vunpack.c.l.b16 %v2166
    %v2556 = vunpack.c.h.b16 %v2166
    %v2557 = vunpack.c.l.b16 %v2167
    %v2558 = vunpack.c.h.b16 %v2167
    %v2559 = vunpack.c.l.b16 %v2168
    %v2560 = vunpack.c.h.b16 %v2168
    %v2561 = vunpack.c.l.b16 %v2169
    %v2562 = vunpack.c.h.b16 %v2169
    %v2563 = vunpack.c.l.b16 %v2170
    %v2564 = vunpack.c.h.b16 %v2170
    %v2565 = vunpack.c.l.b16 %v2171
    %v2566 = vunpack.c.h.b16 %v2171
    %v2567 = vunpack.c.l.b16 %v2172
    %v2568 = vunpack.c.h.b16 %v2172
    %v2569 = vunpack.c.l.b16 %v2173
    %v2570 = vunpack.c.h.b16 %v2173
    %v2571 = vunpack.c.l.b16 %v2174
    %v2572 = vunpack.c.h.b16 %v2174
    %v2573 = vunpack.c.l.b16 %v2175
    %v2574 = vunpack.c.h.b16 %v2175
    %v2575 = vunpack.c.l.b16 %v2176
    %v2576 = vunpack.c.h.b16 %v2176
    %v2577 = vunpack.c.l.b16 %v2177
    %v2578 = vunpack.c.h.b16 %v2177
    %v2579 = vunpack.c.l.b16 %v2178
    %v2580 = vunpack.c.h.b16 %v2178
    %v2581 = vunpack.c.l.b16 %v2179
    %v2582 = vunpack.c.h.b16 %v2179
    %v2583 = vunpack.c.l.b16 %v2180
    %v2584 = vunpack.c.h.b16 %v2180
    %v2585 = vunpack.c.l.b16 %v2181
    %v2586 = vunpack.c.h.b16 %v2181
    %v2587 = vunpack.c.l.b16 %v2182
    %v2588 = vunpack.c.h.b16 %v2182
    %v2589 = vpack.c.b16 %v2337, %v2333
    %v2590 = vpack.c.b16 %v2338, %v2334
    %v2591 = vpack.c.b16 %v2339, %v2335
    %v2592 = vpack.c.b16 %v2340, %v2336
    %v2593 = vpack.c.b16 %v2345, %v2341
    %v2594 = vpack.c.b16 %v2346, %v2342
    %v2595 = vpack.c.b16 %v2347, %v2343
    %v2596 = vpack.c.b16 %v2348, %v2344
    %v2597 = vpack.c.b16 %v2353, %v2349
    %v2598 = vpack.c.b16 %v2354, %v2350
    %v2599 = vpack.c.b16 %v2355, %v2351
    %v2600 = vpack.c.b16 %v2356, %v2352
    %v2601 = vpack.c.b16 %v2361, %v2357
    %v2602 = vpack.c.b16 %v2362, %v2358
    %v2603 = vpack.c.b16 %v2363, %v2359
    %v2604 = vpack.c.b16 %v2364, %v2360
    %v2605 = vpack.c.b16 %v2369, %v2365
    %v2606 = vpack.c.b16 %v2370, %v2366
    %v2607 = vpack.c.b16 %v2371, %v2367
    %v2608 = vpack.c.b16 %v2372, %v2368
    %v2609 = vpack.c.b16 %v2377, %v2373
    %v2610 = vpack.c.b16 %v2378, %v2374
    %v2611 = vpack.c.b16 %v2379, %v2375
    %v2612 = vpack.c.b16 %v2380, %v2376
    %v2613 = vpack.c.b16 %v2385, %v2381
    %v2614 = vpack.c.b16 %v2386, %v2382
    %v2615 = vpack.c.b16 %v2387, %v2383
    %v2616 = vpack.c.b16 %v2388, %v2384
    %v2617 = vpack.c.b16 %v2393, %v2389
    %v2618 = vpack.c.b16 %v2394, %v2390
    %v2619 = vpack.c.b16 %v2395, %v2391
    %v2620 = vpack.c.b16 %v2396, %v2392
    %v2621 = vpack.c.b16 %v2401, %v2397
    %v2622 = vpack.c.b16 %v2402, %v2398
    %v2623 = vpack.c.b16 %v2403, %v2399
    %v2624 = vpack.c.b16 %v2404, %v2400
    %v2625 = vpack.c.b16 %v2409, %v2405
    %v2626 = vpack.c.b16 %v2410, %v2406
    %v2627 = vpack.c.b16 %v2411, %v2407
    %v2628 = vpack.c.b16 %v2412, %v2408
    %v2629 = vpack.c.b16 %v2417, %v2413
    %v2630 = vpack.c.b16 %v2418, %v2414
    %v2631 = vpack.c.b16 %v2419, %v2415
    %v2632 = vpack.c.b16 %v2420, %v2416
    %v2633 = vpack.c.b16 %v2425, %v2421
    %v2634 = vpack.c.b16 %v2426, %v2422
    %v2635 = vpack.c.b16 %v2427, %v2423
    %v2636 = vpack.c.b16 %v2428, %v2424
    %v2637 = vpack.c.b16 %v2433, %v2429
    %v2638 = vpack.c.b16 %v2434, %v2430
    %v2639 = vpack.c.b16 %v2435, %v2431
    %v2640 = vpack.c.b16 %v2436, %v2432
    %v2641 = vpack.c.b16 %v2441, %v2437
    %v2642 = vpack.c.b16 %v2442, %v2438
    %v2643 = vpack.c.b16 %v2443, %v2439
    %v2644 = vpack.c.b16 %v2444, %v2440
    %v2645 = vpack.c.b16 %v2449, %v2445
    %v2646 = vpack.c.b16 %v2450, %v2446
    %v2647 = vpack.c.b16 %v2451, %v2447
    %v2648 = vpack.c.b16 %v2452, %v2448
    %v2649 = vpack.c.b16 %v2457, %v2453
    %v2650 = vpack.c.b16 %v2458, %v2454
    %v2651 = vpack.c.b16 %v2459, %v2455
    %v2652 = vpack.c.b16 %v2460, %v2456
    %v2653 = vpack.c.b16 %v2465, %v2461
    %v2654 = vpack.c.b16 %v2466, %v2462
    %v2655 = vpack.c.b16 %v2467, %v2463
    %v2656 = vpack.c.b16 %v2468, %v2464
    %v2657 = vpack.c.b16 %v2473, %v2469
    %v2658 = vpack.c.b16 %v2474, %v2470
    %v2659 = vpack.c.b16 %v2475, %v2471
    %v2660 = vpack.c.b16 %v2476, %v2472
    %v2661 = vpack.c.b16 %v2481, %v2477
    %v2662 = vpack.c.b16 %v2482, %v2478
    %v2663 = vpack.c.b16 %v2483, %v2479
    %v2664 = vpack.c.b16 %v2484, %v2480
    %v2665 = vpack.c.b16 %v2489, %v2485
    %v2666 = vpack.c.b16 %v2490, %v2486
    %v2667 = vpack.c.b16 %v2491, %v2487
    %v2668 = vpack.c.b16 %v2492, %v2488
    %v2669 = vpack.c.b16 %v2497, %v2493
    %v2670 = vpack.c.b16 %v2498, %v2494
    %v2671 = vpack.c.b16 %v2499, %v2495
    %v2672 = vpack.c.b16 %v2500, %v2496
    %v2673 = vpack.c.b16 %v2505, %v2501
    %v2674 = vpack.c.b16 %v2506, %v2502
    %v2675 = vpack.c.b16 %v2507, %v2503
    %v2676 = vpack.c.b16 %v2508, %v2504
    %v2677 = vpack.c.b16 %v2513, %v2509
    %v2678 = vpack.c.b16 %v2514, %v2510
    %v2679 = vpack.c.b16 %v2515, %v2511
    %v2680 = vpack.c.b16 %v2516, %v2512
    %v2681 = vpack.c.b16 %v2521, %v2517
    %v2682 = vpack.c.b16 %v2522, %v2518
    %v2683 = vpack.c.b16 %v2523, %v2519
    %v2684 = vpack.c.b16 %v2524, %v2520
    %v2685 = vpack.c.b16 %v2529, %v2525
    %v2686 = vpack.c.b16 %v2530, %v2526
    %v2687 = vpack.c.b16 %v2531, %v2527
    %v2688 = vpack.c.b16 %v2532, %v2528
    %v2689 = vpack.c.b16 %v2537, %v2533
    %v2690 = vpack.c.b16 %v2538, %v2534
    %v2691 = vpack.c.b16 %v2539, %v2535
    %v2692 = vpack.c.b16 %v2540, %v2536
    %v2693 = vpack.c.b16 %v2545, %v2541
    %v2694 = vpack.c.b16 %v2546, %v2542
    %v2695 = vpack.c.b16 %v2547, %v2543
    %v2696 = vpack.c.b16 %v2548, %v2544
    %v2697 = vpack.c.b16 %v2553, %v2549
    %v2698 = vpack.c.b16 %v2554, %v2550
    %v2699 = vpack.c.b16 %v2555, %v2551
    %v2700 = vpack.c.b16 %v2556, %v2552
    %v2701 = vpack.c.b16 %v2561, %v2557
    %v2702 = vpack.c.b16 %v2562, %v2558
    %v2703 = vpack.c.b16 %v2563, %v2559
    %v2704 = vpack.c.b16 %v2564, %v2560
    %v2705 = vpack.c.b16 %v2569, %v2565
    %v2706 = vpack.c.b16 %v2570, %v2566
    %v2707 = vpack.c.b16 %v2571, %v2567
    %v2708 = vpack.c.b16 %v2572, %v2568
    %v2709 = vpack.c.b16 %v2577, %v2573
    %v2710 = vpack.c.b16 %v2578, %v2574
    %v2711 = vpack.c.b16 %v2579, %v2575
    %v2712 = vpack.c.b16 %v2580, %v2576
    %v2713 = vpack.c.b16 %v2585, %v2581
    %v2714 = vpack.c.b16 %v2586, %v2582
    %v2715 = vpack.c.b16 %v2587, %v2583
    %v2716 = vpack.c.b16 %v2588, %v2584
    %2845 = vmatprep.subr.bf16.mxu0 %v2590
    %2846 = vmatpush1.bf16.msra.mxu0 %v2589
    %2847 = vmatprep.subr.bf16.mxu0 %v2594
    %2848 = vmatpush1.bf16.msra.mxu0 %v2593
    %2849 = vmatprep.subr.bf16.mxu0 %v2598
    %2850 = vmatpush1.bf16.msra.mxu0 %v2597
    %2851 = vmatprep.subr.bf16.mxu0 %v2602
    %2852 = vmatpush1.bf16.msra.mxu0 %v2601
    %2853 = vmatprep.subr.bf16.mxu0 %v2606
    %2854 = vmatpush1.bf16.msra.mxu0 %v2605
    %2855 = vmatprep.subr.bf16.mxu0 %v2610
    %2856 = vmatpush1.bf16.msra.mxu0 %v2609
    %2857 = vmatprep.subr.bf16.mxu0 %v2614
    %2858 = vmatpush1.bf16.msra.mxu0 %v2613
    %2859 = vmatprep.subr.bf16.mxu0 %v2618
    %2860 = vmatpush1.bf16.msra.mxu0 %v2617
    %2861 = vmatprep.subr.bf16.mxu0 %v2622
    %2862 = vmatpush1.bf16.msra.mxu0 %v2621
    %2863 = vmatprep.subr.bf16.mxu0 %v2626
    %2864 = vmatpush1.bf16.msra.mxu0 %v2625
    %2865 = vmatprep.subr.bf16.mxu0 %v2630
    %2866 = vmatpush1.bf16.msra.mxu0 %v2629
    %2867 = vmatprep.subr.bf16.mxu0 %v2634
    %2868 = vmatpush1.bf16.msra.mxu0 %v2633
    %2869 = vmatprep.subr.bf16.mxu0 %v2638
    %2870 = vmatpush1.bf16.msra.mxu0 %v2637
    %2871 = vmatprep.subr.bf16.mxu0 %v2642
    %2872 = vmatpush1.bf16.msra.mxu0 %v2641
    %2873 = vmatprep.subr.bf16.mxu0 %v2646
    %2874 = vmatpush1.bf16.msra.mxu0 %v2645
    %2875 = vmatprep.subr.bf16.mxu0 %v2650
    %2876 = vmatpush1.bf16.msra.mxu0 %v2649
    %2877 = vmatprep.mubr.bf16.mxu0 %v2052
    %2878 = vmatmul.mubr.bf16.gmra.mrb[0].mxu0 %v2051
    %v2879 = vpop.f32.mrb[0].mxu0
    %v2880 = vadd.f32 %v2188, %v2879
    %v2881 = vpop.f32.mrb[0].mxu0
    %v2882 = vadd.f32 %v2192, %v2881
    %v2883 = vpop.f32.mrb[0].mxu0
    %v2884 = vpop.f32.mrb[0].mxu0
    %2885 = vdwg.mxu0
    %2886 = vmatprep.subr.bf16.mxu0 %v2654
    %2887 = vmatpush1.bf16.msra.mxu0 %v2653
    %2888 = vmatprep.subr.bf16.mxu0 %v2658
    %2889 = vmatpush1.bf16.msra.mxu0 %v2657
    %2890 = vmatprep.subr.bf16.mxu0 %v2662
    %2891 = vmatpush1.bf16.msra.mxu0 %v2661
    %2892 = vmatprep.subr.bf16.mxu0 %v2666
    %2893 = vmatpush1.bf16.msra.mxu0 %v2665
    %2894 = vmatprep.subr.bf16.mxu0 %v2670
    %2895 = vmatpush1.bf16.msra.mxu0 %v2669
    %2896 = vmatprep.subr.bf16.mxu0 %v2674
    %2897 = vmatpush1.bf16.msra.mxu0 %v2673
    %2898 = vmatprep.subr.bf16.mxu0 %v2678
    %2899 = vmatpush1.bf16.msra.mxu0 %v2677
    %2900 = vmatprep.subr.bf16.mxu0 %v2682
    %2901 = vmatpush1.bf16.msra.mxu0 %v2681
    %2902 = vmatprep.subr.bf16.mxu0 %v2686
    %2903 = vmatpush1.bf16.msra.mxu0 %v2685
    %2904 = vmatprep.subr.bf16.mxu0 %v2690
    %2905 = vmatpush1.bf16.msra.mxu0 %v2689
    %2906 = vmatprep.subr.bf16.mxu0 %v2694
    %2907 = vmatpush1.bf16.msra.mxu0 %v2693
    %2908 = vmatprep.subr.bf16.mxu0 %v2698
    %2909 = vmatpush1.bf16.msra.mxu0 %v2697
    %2910 = vmatprep.subr.bf16.mxu0 %v2702
    %2911 = vmatpush1.bf16.msra.mxu0 %v2701
    %2912 = vmatprep.subr.bf16.mxu0 %v2706
    %2913 = vmatpush1.bf16.msra.mxu0 %v2705
    %2914 = vmatprep.subr.bf16.mxu0 %v2710
    %2915 = vmatpush1.bf16.msra.mxu0 %v2709
    %2916 = vmatprep.subr.bf16.mxu0 %v2714
    %2917 = vmatpush1.bf16.msra.mxu0 %v2713
    %2918 = vmatprep.mubr.bf16.mxu0 %v2054
    %2919 = vmatmul.mubr.bf16.gmra.mrb[0].mxu0 %v2053
    %v2920 = vpop.f32.mrb[0].mxu0
    %v2921 = vadd.f32 %v2880, %v2920
    %v2922 = vpop.f32.mrb[0].mxu0
    %v2923 = vadd.f32 %v2882, %v2922
    %v2924 = vpop.f32.mrb[0].mxu0
    %v2925 = vpop.f32.mrb[0].mxu0
    %2926 = vdwg.mxu0
    %2927 = vmatprep.subr.bf16.mxu0 %v2592
    %2928 = vmatpush1.bf16.msra.mxu0 %v2591
    %2929 = vmatprep.subr.bf16.mxu0 %v2596
    %2930 = vmatpush1.bf16.msra.mxu0 %v2595
    %2931 = vmatprep.subr.bf16.mxu0 %v2600
    %2932 = vmatpush1.bf16.msra.mxu0 %v2599
    %2933 = vmatprep.subr.bf16.mxu0 %v2604
    %2934 = vmatpush1.bf16.msra.mxu0 %v2603
    %2935 = vmatprep.subr.bf16.mxu0 %v2608
    %2936 = vmatpush1.bf16.msra.mxu0 %v2607
    %2937 = vmatprep.subr.bf16.mxu0 %v2612
    %2938 = vmatpush1.bf16.msra.mxu0 %v2611
    %2939 = vmatprep.subr.bf16.mxu0 %v2616
    %2940 = vmatpush1.bf16.msra.mxu0 %v2615
    %2941 = vmatprep.subr.bf16.mxu0 %v2620
    %2942 = vmatpush1.bf16.msra.mxu0 %v2619
    %2943 = vmatprep.subr.bf16.mxu0 %v2624
    %2944 = vmatpush1.bf16.msra.mxu0 %v2623
    %2945 = vmatprep.subr.bf16.mxu0 %v2628
    %2946 = vmatpush1.bf16.msra.mxu0 %v2627
    %2947 = vmatprep.subr.bf16.mxu0 %v2632
    %2948 = vmatpush1.bf16.msra.mxu0 %v2631
    %2949 = vmatprep.subr.bf16.mxu0 %v2636
    %2950 = vmatpush1.bf16.msra.mxu0 %v2635
    %2951 = vmatprep.subr.bf16.mxu0 %v2640
    %2952 = vmatpush1.bf16.msra.mxu0 %v2639
    %2953 = vmatprep.subr.bf16.mxu0 %v2644
    %2954 = vmatpush1.bf16.msra.mxu0 %v2643
    %2955 = vmatprep.subr.bf16.mxu0 %v2648
    %2956 = vmatpush1.bf16.msra.mxu0 %v2647
    %2957 = vmatprep.subr.bf16.mxu0 %v2652
    %2958 = vmatpush1.bf16.msra.mxu0 %v2651
    %2959 = vmatprep.mubr.bf16.mxu0 %v2052
    %2960 = vmatmul.mubr.bf16.gmra.mrb[0].mxu0 %v2051
    %v2961 = vpop.f32.mrb[0].mxu0
    %v2962 = vadd.f32 %v2196, %v2961
    %v2963 = vpop.f32.mrb[0].mxu0
    %v2964 = vadd.f32 %v2200, %v2963
    %v2965 = vpop.f32.mrb[0].mxu0
    %v2966 = vpop.f32.mrb[0].mxu0
    %2967 = vdwg.mxu0
    %2968 = vmatprep.subr.bf16.mxu0 %v2656
    %2969 = vmatpush1.bf16.msra.mxu0 %v2655
    %2970 = vmatprep.subr.bf16.mxu0 %v2660
    %2971 = vmatpush1.bf16.msra.mxu0 %v2659
    %2972 = vmatprep.subr.bf16.mxu0 %v2664
    %2973 = vmatpush1.bf16.msra.mxu0 %v2663
    %2974 = vmatprep.subr.bf16.mxu0 %v2668
    %2975 = vmatpush1.bf16.msra.mxu0 %v2667
    %2976 = vmatprep.subr.bf16.mxu0 %v2672
    %2977 = vmatpush1.bf16.msra.mxu0 %v2671
    %2978 = vmatprep.subr.bf16.mxu0 %v2676
    %2979 = vmatpush1.bf16.msra.mxu0 %v2675
    %2980 = vmatprep.subr.bf16.mxu0 %v2680
    %2981 = vmatpush1.bf16.msra.mxu0 %v2679
    %2982 = vmatprep.subr.bf16.mxu0 %v2684
    %2983 = vmatpush1.bf16.msra.mxu0 %v2683
    %2984 = vmatprep.subr.bf16.mxu0 %v2688
    %2985 = vmatpush1.bf16.msra.mxu0 %v2687
    %2986 = vmatprep.subr.bf16.mxu0 %v2692
    %2987 = vmatpush1.bf16.msra.mxu0 %v2691
    %2988 = vmatprep.subr.bf16.mxu0 %v2696
    %2989 = vmatpush1.bf16.msra.mxu0 %v2695
    %2990 = vmatprep.subr.bf16.mxu0 %v2700
    %2991 = vmatpush1.bf16.msra.mxu0 %v2699
    %2992 = vmatprep.subr.bf16.mxu0 %v2704
    %2993 = vmatpush1.bf16.msra.mxu0 %v2703
    %2994 = vmatprep.subr.bf16.mxu0 %v2708
    %2995 = vmatpush1.bf16.msra.mxu0 %v2707
    %2996 = vmatprep.subr.bf16.mxu0 %v2712
    %2997 = vmatpush1.bf16.msra.mxu0 %v2711
    %2998 = vmatprep.subr.bf16.mxu0 %v2716
    %2999 = vmatpush1.bf16.msra.mxu0 %v2715
    %3000 = vmatprep.mubr.bf16.mxu0 %v2054
    %3001 = vmatmul.mubr.bf16.gmra.mrb[0].mxu0 %v2053
    %v3002 = vpop.f32.mrb[0].mxu0
    %v3003 = vadd.f32 %v2962, %v3002
    %v3004 = vpop.f32.mrb[0].mxu0
    %v3005 = vadd.f32 %v2964, %v3004
    %v3006 = vpop.f32.mrb[0].mxu0
    %v3007 = vpop.f32.mrb[0].mxu0
    %3008 = vdwg.mxu0
    %v3009 = vmax.f32 %v2921, 0.0
    %v3010 = vmax.f32 %v2923, 0.0
    %v3011 = vmax.f32 %v3003, 0.0
    %v3012 = vmax.f32 %v3005, 0.0
    %v3013 = vld [vmem:[%s11] sm:$0xf]
    %v3014 = vld [vmem:[%s11 + $0x4] sm:$0xf]
    %v3015 = vld [vmem:[%s12] sm:$0x1]
    %v3016 = vpack.c.bf16 %v3009, %v3009
    %v3018 = vlaneseq
    %v3019 = vshrl.u32 %v3018, 7
    %v3020 = vsub.s32 0, %v3019
    %v3021 = vrot.slane %v3015, %v3020
    %v3025 = vunpack.c.l.b16 %v3013
    %v3026 = vunpack.c.l.b16 %v3014
    %v3027 = vpack.c.b16 %v3026, %v3025
    %vm3029 = vcmask 130048
    %v3031 = vsel %vm3029, %v3016, 0
    %3033 = vmatprep.subr.bf16.mxu0 0
    %3034 = vmatpush1.bf16.msra.mxu0 %v3027
    %3035 = vmatprep.subr.bf16.mxu0 0
    %3036 = vmatpush1.bf16.msra.mxu0 0
    %3037 = vmatprep.subr.bf16.mxu0 0
    %3038 = vmatpush1.bf16.msra.mxu0 0
    %3039 = vmatprep.subr.bf16.mxu0 0
    %3040 = vmatpush1.bf16.msra.mxu0 0
    %3041 = vmatprep.subr.bf16.mxu0 0
    %3042 = vmatpush1.bf16.msra.mxu0 0
    %3043 = vmatprep.subr.bf16.mxu0 0
    %3044 = vmatpush1.bf16.msra.mxu0 0
    %3045 = vmatprep.subr.bf16.mxu0 0
    %3046 = vmatpush1.bf16.msra.mxu0 0
    %3047 = vmatprep.subr.bf16.mxu0 0
    %3048 = vmatpush1.bf16.msra.mxu0 0
    %3049 = vmatprep.subr.bf16.mxu0 0
    %3050 = vmatpush1.bf16.msra.mxu0 0
    %3051 = vmatprep.subr.bf16.mxu0 0
    %3052 = vmatpush1.bf16.msra.mxu0 0
    %3053 = vmatprep.subr.bf16.mxu0 0
    %3054 = vmatpush1.bf16.msra.mxu0 0
    %3055 = vmatprep.subr.bf16.mxu0 0
    %3056 = vmatpush1.bf16.msra.mxu0 0
    %3057 = vmatprep.subr.bf16.mxu0 0
    %3058 = vmatpush1.bf16.msra.mxu0 0
    %3059 = vmatprep.subr.bf16.mxu0 0
    %3060 = vmatpush1.bf16.msra.mxu0 0
    %3061 = vmatprep.subr.bf16.mxu0 0
    %3062 = vmatpush1.bf16.msra.mxu0 0
    %3063 = vmatprep.subr.bf16.mxu0 0
    %3064 = vmatpush1.bf16.msra.mxu0 0
    %3065 = vmatprep.mubr.bf16.mxu0 0
    %3066 = vmatmul.mubr.bf16.gmra.mrb[0].mxu0 %v3031
    %v3067 = vpop.f32.mrb[0].mxu0
    %v3068 = vadd.f32 %v3021, %v3067
    %v3069 = vpop.f32.mrb[0].mxu0
    %v3070 = vpop.f32.mrb[0].mxu0
    %v3071 = vpop.f32.mrb[0].mxu0
    %3072 = vdwg.mxu0
    %vm3073 = vcmask 1041408
    %v3074 = vsel %vm3073, %v3068, -inf
    %3075 = vmax.xlane.f32.xlu0 %v3074
    %v3076 = vpop.xlane.xlu0 %3075
    %v3077 = vsub.f32 %v3068, %v3076
    %v3078 = vmul.f32 %v3077, 1.442695
    %v3079 = vpow.pop %v3078
    %v3080 = vsel %vm3073, %v3079, 0.0
    %3081 = vadd.xlane.f32.xlu0 %v3080
    %v3082 = vpop.xlane.xlu0 %3081
    %v3083 = vlog2.pop %v3082
    %v3084 = vmul.f32 %v3083, 0.6931472
    %v3085 = vsub.f32 %v3077, %v3084
    %3087 = vrot.lane.b32.xlu0 %v3016, 112
    %v3088 = vpop.permute.xlu0 %3087
    %v3090 = vsel %vm3029, %v3088, 0
    %3092 = vmatprep.subr.bf16.mxu0 0
    %3093 = vmatpush1.bf16.msra.mxu0 %v3027
    %3094 = vmatprep.subr.bf16.mxu0 0
    %3095 = vmatpush1.bf16.msra.mxu0 0
    %3096 = vmatprep.subr.bf16.mxu0 0
    %3097 = vmatpush1.bf16.msra.mxu0 0
    %3098 = vmatprep.subr.bf16.mxu0 0
    %3099 = vmatpush1.bf16.msra.mxu0 0
    %3100 = vmatprep.subr.bf16.mxu0 0
    %3101 = vmatpush1.bf16.msra.mxu0 0
    %3102 = vmatprep.subr.bf16.mxu0 0
    %3103 = vmatpush1.bf16.msra.mxu0 0
    %3104 = vmatprep.subr.bf16.mxu0 0
    %3105 = vmatpush1.bf16.msra.mxu0 0
    %3106 = vmatprep.subr.bf16.mxu0 0
    %3107 = vmatpush1.bf16.msra.mxu0 0
    %3108 = vmatprep.subr.bf16.mxu0 0
    %3109 = vmatpush1.bf16.msra.mxu0 0
    %3110 = vmatprep.subr.bf16.mxu0 0
    %3111 = vmatpush1.bf16.msra.mxu0 0
    %3112 = vmatprep.subr.bf16.mxu0 0
    %3113 = vmatpush1.bf16.msra.mxu0 0
    %3114 = vmatprep.subr.bf16.mxu0 0
    %3115 = vmatpush1.bf16.msra.mxu0 0
    %3116 = vmatprep.subr.bf16.mxu0 0
    %3117 = vmatpush1.bf16.msra.mxu0 0
    %3118 = vmatprep.subr.bf16.mxu0 0
    %3119 = vmatpush1.bf16.msra.mxu0 0
    %3120 = vmatprep.subr.bf16.mxu0 0
    %3121 = vmatpush1.bf16.msra.mxu0 0
    %3122 = vmatprep.subr.bf16.mxu0 0
    %3123 = vmatpush1.bf16.msra.mxu0 0
    %3124 = vmatprep.mubr.bf16.mxu0 0
    %3125 = vmatmul.mubr.bf16.gmra.mrb[0].mxu0 %v3090
    %v3126 = vpop.f32.mrb[0].mxu0
    %v3127 = vadd.f32 %v3021, %v3126
    %v3128 = vpop.f32.mrb[0].mxu0
    %v3129 = vpop.f32.mrb[0].mxu0
    %v3130 = vpop.f32.mrb[0].mxu0
    %3131 = vdwg.mxu0
    %v3132 = vsel %vm3073, %v3127, -inf
    %3133 = vmax.xlane.f32.xlu0 %v3132
    %v3134 = vpop.xlane.xlu0 %3133
    %v3135 = vsub.f32 %v3127, %v3134
    %v3136 = vmul.f32 %v3135, 1.442695
    %v3137 = vpow.pop %v3136
    %v3138 = vsel %vm3073, %v3137, 0.0
    %3139 = vadd.xlane.f32.xlu0 %v3138
    %v3140 = vpop.xlane.xlu0 %3139
    %v3141 = vlog2.pop %v3140
    %v3142 = vmul.f32 %v3141, 0.6931472
    %v3143 = vsub.f32 %v3135, %v3142
    %3144 = vrot.lane.b32.xlu0 %v3016, 96
    %v3145 = vpop.permute.xlu0 %3144
    %v3147 = vsel %vm3029, %v3145, 0
    %3149 = vmatprep.subr.bf16.mxu0 0
    %3150 = vmatpush1.bf16.msra.mxu0 %v3027
    %3151 = vmatprep.subr.bf16.mxu0 0
    %3152 = vmatpush1.bf16.msra.mxu0 0
    %3153 = vmatprep.subr.bf16.mxu0 0
    %3154 = vmatpush1.bf16.msra.mxu0 0
    %3155 = vmatprep.subr.bf16.mxu0 0
    %3156 = vmatpush1.bf16.msra.mxu0 0
    %3157 = vmatprep.subr.bf16.mxu0 0
    %3158 = vmatpush1.bf16.msra.mxu0 0
    %3159 = vmatprep.subr.bf16.mxu0 0
    %3160 = vmatpush1.bf16.msra.mxu0 0
    %3161 = vmatprep.subr.bf16.mxu0 0
    %3162 = vmatpush1.bf16.msra.mxu0 0
    %3163 = vmatprep.subr.bf16.mxu0 0
    %3164 = vmatpush1.bf16.msra.mxu0 0
    %3165 = vmatprep.subr.bf16.mxu0 0
    %3166 = vmatpush1.bf16.msra.mxu0 0
    %3167 = vmatprep.subr.bf16.mxu0 0
    %3168 = vmatpush1.bf16.msra.mxu0 0
    %3169 = vmatprep.subr.bf16.mxu0 0
    %3170 = vmatpush1.bf16.msra.mxu0 0
    %3171 = vmatprep.subr.bf16.mxu0 0
    %3172 = vmatpush1.bf16.msra.mxu0 0
    %3173 = vmatprep.subr.bf16.mxu0 0
    %3174 = vmatpush1.bf16.msra.mxu0 0
    %3175 = vmatprep.subr.bf16.mxu0 0
    %3176 = vmatpush1.bf16.msra.mxu0 0
    %3177 = vmatprep.subr.bf16.mxu0 0
    %3178 = vmatpush1.bf16.msra.mxu0 0
    %3179 = vmatprep.subr.bf16.mxu0 0
    %3180 = vmatpush1.bf16.msra.mxu0 0
    %3181 = vmatprep.mubr.bf16.mxu0 0
    %3182 = vmatmul.mubr.bf16.gmra.mrb[0].mxu0 %v3147
    %v3183 = vpop.f32.mrb[0].mxu0
    %v3184 = vadd.f32 %v3021, %v3183
    %v3185 = vpop.f32.mrb[0].mxu0
    %v3186 = vpop.f32.mrb[0].mxu0
    %v3187 = vpop.f32.mrb[0].mxu0
    %3188 = vdwg.mxu0
    %v3189 = vsel %vm3073, %v3184, -inf
    %3190 = vmax.xlane.f32.xlu0 %v3189
    %v3191 = vpop.xlane.xlu0 %3190
    %v3192 = vsub.f32 %v3184, %v3191
    %v3193 = vmul.f32 %v3192, 1.442695
    %v3194 = vpow.pop %v3193
    %v3195 = vsel %vm3073, %v3194, 0.0
    %3196 = vadd.xlane.f32.xlu0 %v3195
    %v3197 = vpop.xlane.xlu0 %3196
    %v3198 = vlog2.pop %v3197
    %v3199 = vmul.f32 %v3198, 0.6931472
    %v3200 = vsub.f32 %v3192, %v3199
    %3201 = vrot.lane.b32.xlu0 %v3016, 80
    %v3202 = vpop.permute.xlu0 %3201
    %v3204 = vsel %vm3029, %v3202, 0
    %3206 = vmatprep.subr.bf16.mxu0 0
    %3207 = vmatpush1.bf16.msra.mxu0 %v3027
    %3208 = vmatprep.subr.bf16.mxu0 0
    %3209 = vmatpush1.bf16.msra.mxu0 0
    %3210 = vmatprep.subr.bf16.mxu0 0
    %3211 = vmatpush1.bf16.msra.mxu0 0
    %3212 = vmatprep.subr.bf16.mxu0 0
    %3213 = vmatpush1.bf16.msra.mxu0 0
    %3214 = vmatprep.subr.bf16.mxu0 0
    %3215 = vmatpush1.bf16.msra.mxu0 0
    %3216 = vmatprep.subr.bf16.mxu0 0
    %3217 = vmatpush1.bf16.msra.mxu0 0
    %3218 = vmatprep.subr.bf16.mxu0 0
    %3219 = vmatpush1.bf16.msra.mxu0 0
    %3220 = vmatprep.subr.bf16.mxu0 0
    %3221 = vmatpush1.bf16.msra.mxu0 0
    %3222 = vmatprep.subr.bf16.mxu0 0
    %3223 = vmatpush1.bf16.msra.mxu0 0
    %3224 = vmatprep.subr.bf16.mxu0 0
    %3225 = vmatpush1.bf16.msra.mxu0 0
    %3226 = vmatprep.subr.bf16.mxu0 0
    %3227 = vmatpush1.bf16.msra.mxu0 0
    %3228 = vmatprep.subr.bf16.mxu0 0
    %3229 = vmatpush1.bf16.msra.mxu0 0
    %3230 = vmatprep.subr.bf16.mxu0 0
    %3231 = vmatpush1.bf16.msra.mxu0 0
    %3232 = vmatprep.subr.bf16.mxu0 0
    %3233 = vmatpush1.bf16.msra.mxu0 0
    %3234 = vmatprep.subr.bf16.mxu0 0
    %3235 = vmatpush1.bf16.msra.mxu0 0
    %3236 = vmatprep.subr.bf16.mxu0 0
    %3237 = vmatpush1.bf16.msra.mxu0 0
    %3238 = vmatprep.mubr.bf16.mxu0 0
    %3239 = vmatmul.mubr.bf16.gmra.mrb[0].mxu0 %v3204
    %v3240 = vpop.f32.mrb[0].mxu0
    %v3241 = vadd.f32 %v3021, %v3240
    %v3242 = vpop.f32.mrb[0].mxu0
    %v3243 = vpop.f32.mrb[0].mxu0
    %v3244 = vpop.f32.mrb[0].mxu0
    %3245 = vdwg.mxu0
    %v3246 = vsel %vm3073, %v3241, -inf
    %3247 = vmax.xlane.f32.xlu0 %v3246
    %v3248 = vpop.xlane.xlu0 %3247
    %v3249 = vsub.f32 %v3241, %v3248
    %v3250 = vmul.f32 %v3249, 1.442695
    %v3251 = vpow.pop %v3250
    %v3252 = vsel %vm3073, %v3251, 0.0
    %3253 = vadd.xlane.f32.xlu0 %v3252
    %v3254 = vpop.xlane.xlu0 %3253
    %v3255 = vlog2.pop %v3254
    %v3256 = vmul.f32 %v3255, 0.6931472
    %v3257 = vsub.f32 %v3249, %v3256
    %3258 = vrot.lane.b32.xlu0 %v3016, 64
    %v3259 = vpop.permute.xlu0 %3258
    %v3261 = vsel %vm3029, %v3259, 0
    %3263 = vmatprep.subr.bf16.mxu0 0
    %3264 = vmatpush1.bf16.msra.mxu0 %v3027
    %3265 = vmatprep.subr.bf16.mxu0 0
    %3266 = vmatpush1.bf16.msra.mxu0 0
    %3267 = vmatprep.subr.bf16.mxu0 0
    %3268 = vmatpush1.bf16.msra.mxu0 0
    %3269 = vmatprep.subr.bf16.mxu0 0
    %3270 = vmatpush1.bf16.msra.mxu0 0
    %3271 = vmatprep.subr.bf16.mxu0 0
    %3272 = vmatpush1.bf16.msra.mxu0 0
    %3273 = vmatprep.subr.bf16.mxu0 0
    %3274 = vmatpush1.bf16.msra.mxu0 0
    %3275 = vmatprep.subr.bf16.mxu0 0
    %3276 = vmatpush1.bf16.msra.mxu0 0
    %3277 = vmatprep.subr.bf16.mxu0 0
    %3278 = vmatpush1.bf16.msra.mxu0 0
    %3279 = vmatprep.subr.bf16.mxu0 0
    %3280 = vmatpush1.bf16.msra.mxu0 0
    %3281 = vmatprep.subr.bf16.mxu0 0
    %3282 = vmatpush1.bf16.msra.mxu0 0
    %3283 = vmatprep.subr.bf16.mxu0 0
    %3284 = vmatpush1.bf16.msra.mxu0 0
    %3285 = vmatprep.subr.bf16.mxu0 0
    %3286 = vmatpush1.bf16.msra.mxu0 0
    %3287 = vmatprep.subr.bf16.mxu0 0
    %3288 = vmatpush1.bf16.msra.mxu0 0
    %3289 = vmatprep.subr.bf16.mxu0 0
    %3290 = vmatpush1.bf16.msra.mxu0 0
    %3291 = vmatprep.subr.bf16.mxu0 0
    %3292 = vmatpush1.bf16.msra.mxu0 0
    %3293 = vmatprep.subr.bf16.mxu0 0
    %3294 = vmatpush1.bf16.msra.mxu0 0
    %3295 = vmatprep.mubr.bf16.mxu0 0
    %3296 = vmatmul.mubr.bf16.gmra.mrb[0].mxu0 %v3261
    %v3297 = vpop.f32.mrb[0].mxu0
    %v3298 = vadd.f32 %v3021, %v3297
    %v3299 = vpop.f32.mrb[0].mxu0
    %v3300 = vpop.f32.mrb[0].mxu0
    %v3301 = vpop.f32.mrb[0].mxu0
    %3302 = vdwg.mxu0
    %v3303 = vsel %vm3073, %v3298, -inf
    %3304 = vmax.xlane.f32.xlu0 %v3303
    %v3305 = vpop.xlane.xlu0 %3304
    %v3306 = vsub.f32 %v3298, %v3305
    %v3307 = vmul.f32 %v3306, 1.442695
    %v3308 = vpow.pop %v3307
    %v3309 = vsel %vm3073, %v3308, 0.0
    %3310 = vadd.xlane.f32.xlu0 %v3309
    %v3311 = vpop.xlane.xlu0 %3310
    %v3312 = vlog2.pop %v3311
    %v3313 = vmul.f32 %v3312, 0.6931472
    %v3314 = vsub.f32 %v3306, %v3313
    %3315 = vrot.lane.b32.xlu0 %v3016, 48
    %v3316 = vpop.permute.xlu0 %3315
    %v3318 = vsel %vm3029, %v3316, 0
    %3320 = vmatprep.subr.bf16.mxu0 0
    %3321 = vmatpush1.bf16.msra.mxu0 %v3027
    %3322 = vmatprep.subr.bf16.mxu0 0
    %3323 = vmatpush1.bf16.msra.mxu0 0
    %3324 = vmatprep.subr.bf16.mxu0 0
    %3325 = vmatpush1.bf16.msra.mxu0 0
    %3326 = vmatprep.subr.bf16.mxu0 0
    %3327 = vmatpush1.bf16.msra.mxu0 0
    %3328 = vmatprep.subr.bf16.mxu0 0
    %3329 = vmatpush1.bf16.msra.mxu0 0
    %3330 = vmatprep.subr.bf16.mxu0 0
    %3331 = vmatpush1.bf16.msra.mxu0 0
    %3332 = vmatprep.subr.bf16.mxu0 0
    %3333 = vmatpush1.bf16.msra.mxu0 0
    %3334 = vmatprep.subr.bf16.mxu0 0
    %3335 = vmatpush1.bf16.msra.mxu0 0
    %3336 = vmatprep.subr.bf16.mxu0 0
    %3337 = vmatpush1.bf16.msra.mxu0 0
    %3338 = vmatprep.subr.bf16.mxu0 0
    %3339 = vmatpush1.bf16.msra.mxu0 0
    %3340 = vmatprep.subr.bf16.mxu0 0
    %3341 = vmatpush1.bf16.msra.mxu0 0
    %3342 = vmatprep.subr.bf16.mxu0 0
    %3343 = vmatpush1.bf16.msra.mxu0 0
    %3344 = vmatprep.subr.bf16.mxu0 0
    %3345 = vmatpush1.bf16.msra.mxu0 0
    %3346 = vmatprep.subr.bf16.mxu0 0
    %3347 = vmatpush1.bf16.msra.mxu0 0
    %3348 = vmatprep.subr.bf16.mxu0 0
    %3349 = vmatpush1.bf16.msra.mxu0 0
    %3350 = vmatprep.subr.bf16.mxu0 0
    %3351 = vmatpush1.bf16.msra.mxu0 0
    %3352 = vmatprep.mubr.bf16.mxu0 0
    %3353 = vmatmul.mubr.bf16.gmra.mrb[0].mxu0 %v3318
    %v3354 = vpop.f32.mrb[0].mxu0
    %v3355 = vadd.f32 %v3021, %v3354
    %v3356 = vpop.f32.mrb[0].mxu0
    %v3357 = vpop.f32.mrb[0].mxu0
    %v3358 = vpop.f32.mrb[0].mxu0
    %3359 = vdwg.mxu0
    %v3360 = vsel %vm3073, %v3355, -inf
    %3361 = vmax.xlane.f32.xlu0 %v3360
    %v3362 = vpop.xlane.xlu0 %3361
    %v3363 = vsub.f32 %v3355, %v3362
    %v3364 = vmul.f32 %v3363, 1.442695
    %v3365 = vpow.pop %v3364
    %v3366 = vsel %vm3073, %v3365, 0.0
    %3367 = vadd.xlane.f32.xlu0 %v3366
    %v3368 = vpop.xlane.xlu0 %3367
    %v3369 = vlog2.pop %v3368
    %v3370 = vmul.f32 %v3369, 0.6931472
    %v3371 = vsub.f32 %v3363, %v3370
    %3372 = vrot.lane.b32.xlu0 %v3016, 32
    %v3373 = vpop.permute.xlu0 %3372
    %v3375 = vsel %vm3029, %v3373, 0
    %3377 = vmatprep.subr.bf16.mxu0 0
    %3378 = vmatpush1.bf16.msra.mxu0 %v3027
    %3379 = vmatprep.subr.bf16.mxu0 0
    %3380 = vmatpush1.bf16.msra.mxu0 0
    %3381 = vmatprep.subr.bf16.mxu0 0
    %3382 = vmatpush1.bf16.msra.mxu0 0
    %3383 = vmatprep.subr.bf16.mxu0 0
    %3384 = vmatpush1.bf16.msra.mxu0 0
    %3385 = vmatprep.subr.bf16.mxu0 0
    %3386 = vmatpush1.bf16.msra.mxu0 0
    %3387 = vmatprep.subr.bf16.mxu0 0
    %3388 = vmatpush1.bf16.msra.mxu0 0
    %3389 = vmatprep.subr.bf16.mxu0 0
    %3390 = vmatpush1.bf16.msra.mxu0 0
    %3391 = vmatprep.subr.bf16.mxu0 0
    %3392 = vmatpush1.bf16.msra.mxu0 0
    %3393 = vmatprep.subr.bf16.mxu0 0
    %3394 = vmatpush1.bf16.msra.mxu0 0
    %3395 = vmatprep.subr.bf16.mxu0 0
    %3396 = vmatpush1.bf16.msra.mxu0 0
    %3397 = vmatprep.subr.bf16.mxu0 0
    %3398 = vmatpush1.bf16.msra.mxu0 0
    %3399 = vmatprep.subr.bf16.mxu0 0
    %3400 = vmatpush1.bf16.msra.mxu0 0
    %3401 = vmatprep.subr.bf16.mxu0 0
    %3402 = vmatpush1.bf16.msra.mxu0 0
    %3403 = vmatprep.subr.bf16.mxu0 0
    %3404 = vmatpush1.bf16.msra.mxu0 0
    %3405 = vmatprep.subr.bf16.mxu0 0
    %3406 = vmatpush1.bf16.msra.mxu0 0
    %3407 = vmatprep.subr.bf16.mxu0 0
    %3408 = vmatpush1.bf16.msra.mxu0 0
    %3409 = vmatprep.mubr.bf16.mxu0 0
    %3410 = vmatmul.mubr.bf16.gmra.mrb[0].mxu0 %v3375
    %v3411 = vpop.f32.mrb[0].mxu0
    %v3412 = vadd.f32 %v3021, %v3411
    %v3413 = vpop.f32.mrb[0].mxu0
    %v3414 = vpop.f32.mrb[0].mxu0
    %v3415 = vpop.f32.mrb[0].mxu0
    %3416 = vdwg.mxu0
    %v3417 = vsel %vm3073, %v3412, -inf
    %3418 = vmax.xlane.f32.xlu0 %v3417
    %v3419 = vpop.xlane.xlu0 %3418
    %v3420 = vsub.f32 %v3412, %v3419
    %v3421 = vmul.f32 %v3420, 1.442695
    %v3422 = vpow.pop %v3421
    %v3423 = vsel %vm3073, %v3422, 0.0
    %3424 = vadd.xlane.f32.xlu0 %v3423
    %v3425 = vpop.xlane.xlu0 %3424
    %v3426 = vlog2.pop %v3425
    %v3427 = vmul.f32 %v3426, 0.6931472
    %v3428 = vsub.f32 %v3420, %v3427
    %3429 = vrot.lane.b32.xlu0 %v3016, 16
    %v3430 = vpop.permute.xlu0 %3429
    %v3432 = vsel %vm3029, %v3430, 0
    %3434 = vmatprep.subr.bf16.mxu0 0
    %3435 = vmatpush1.bf16.msra.mxu0 %v3027
    %3436 = vmatprep.subr.bf16.mxu0 0
    %3437 = vmatpush1.bf16.msra.mxu0 0
    %3438 = vmatprep.subr.bf16.mxu0 0
    %3439 = vmatpush1.bf16.msra.mxu0 0
    %3440 = vmatprep.subr.bf16.mxu0 0
    %3441 = vmatpush1.bf16.msra.mxu0 0
    %3442 = vmatprep.subr.bf16.mxu0 0
    %3443 = vmatpush1.bf16.msra.mxu0 0
    %3444 = vmatprep.subr.bf16.mxu0 0
    %3445 = vmatpush1.bf16.msra.mxu0 0
    %3446 = vmatprep.subr.bf16.mxu0 0
    %3447 = vmatpush1.bf16.msra.mxu0 0
    %3448 = vmatprep.subr.bf16.mxu0 0
    %3449 = vmatpush1.bf16.msra.mxu0 0
    %3450 = vmatprep.subr.bf16.mxu0 0
    %3451 = vmatpush1.bf16.msra.mxu0 0
    %3452 = vmatprep.subr.bf16.mxu0 0
    %3453 = vmatpush1.bf16.msra.mxu0 0
    %3454 = vmatprep.subr.bf16.mxu0 0
    %3455 = vmatpush1.bf16.msra.mxu0 0
    %3456 = vmatprep.subr.bf16.mxu0 0
    %3457 = vmatpush1.bf16.msra.mxu0 0
    %3458 = vmatprep.subr.bf16.mxu0 0
    %3459 = vmatpush1.bf16.msra.mxu0 0
    %3460 = vmatprep.subr.bf16.mxu0 0
    %3461 = vmatpush1.bf16.msra.mxu0 0
    %3462 = vmatprep.subr.bf16.mxu0 0
    %3463 = vmatpush1.bf16.msra.mxu0 0
    %3464 = vmatprep.subr.bf16.mxu0 0
    %3465 = vmatpush1.bf16.msra.mxu0 0
    %3466 = vmatprep.mubr.bf16.mxu0 0
    %3467 = vmatmul.mubr.bf16.gmra.mrb[0].mxu0 %v3432
    %v3468 = vpop.f32.mrb[0].mxu0
    %v3469 = vadd.f32 %v3021, %v3468
    %v3470 = vpop.f32.mrb[0].mxu0
    %v3471 = vpop.f32.mrb[0].mxu0
    %v3472 = vpop.f32.mrb[0].mxu0
    %3473 = vdwg.mxu0
    %v3474 = vsel %vm3073, %v3469, -inf
    %3475 = vmax.xlane.f32.xlu0 %v3474
    %v3476 = vpop.xlane.xlu0 %3475
    %v3477 = vsub.f32 %v3469, %v3476
    %v3478 = vmul.f32 %v3477, 1.442695
    %v3479 = vpow.pop %v3478
    %v3480 = vsel %vm3073, %v3479, 0.0
    %3481 = vadd.xlane.f32.xlu0 %v3480
    %v3482 = vpop.xlane.xlu0 %3481
    %v3483 = vlog2.pop %v3482
    %v3484 = vmul.f32 %v3483, 0.6931472
    %v3485 = vsub.f32 %v3477, %v3484
    %v3486 = vpack.c.bf16 %v3010, %v3010
    %v3488 = vsel %vm3029, %v3486, 0
    %3490 = vmatprep.subr.bf16.mxu0 0
    %3491 = vmatpush1.bf16.msra.mxu0 %v3027
    %3492 = vmatprep.subr.bf16.mxu0 0
    %3493 = vmatpush1.bf16.msra.mxu0 0
    %3494 = vmatprep.subr.bf16.mxu0 0
    %3495 = vmatpush1.bf16.msra.mxu0 0
    %3496 = vmatprep.subr.bf16.mxu0 0
    %3497 = vmatpush1.bf16.msra.mxu0 0
    %3498 = vmatprep.subr.bf16.mxu0 0
    %3499 = vmatpush1.bf16.msra.mxu0 0
    %3500 = vmatprep.subr.bf16.mxu0 0
    %3501 = vmatpush1.bf16.msra.mxu0 0
    %3502 = vmatprep.subr.bf16.mxu0 0
    %3503 = vmatpush1.bf16.msra.mxu0 0
    %3504 = vmatprep.subr.bf16.mxu0 0
    %3505 = vmatpush1.bf16.msra.mxu0 0
    %3506 = vmatprep.subr.bf16.mxu0 0
    %3507 = vmatpush1.bf16.msra.mxu0 0
    %3508 = vmatprep.subr.bf16.mxu0 0
    %3509 = vmatpush1.bf16.msra.mxu0 0
    %3510 = vmatprep.subr.bf16.mxu0 0
    %3511 = vmatpush1.bf16.msra.mxu0 0
    %3512 = vmatprep.subr.bf16.mxu0 0
    %3513 = vmatpush1.bf16.msra.mxu0 0
    %3514 = vmatprep.subr.bf16.mxu0 0
    %3515 = vmatpush1.bf16.msra.mxu0 0
    %3516 = vmatprep.subr.bf16.mxu0 0
    %3517 = vmatpush1.bf16.msra.mxu0 0
    %3518 = vmatprep.subr.bf16.mxu0 0
    %3519 = vmatpush1.bf16.msra.mxu0 0
    %3520 = vmatprep.subr.bf16.mxu0 0
    %3521 = vmatpush1.bf16.msra.mxu0 0
    %3522 = vmatprep.mubr.bf16.mxu0 0
    %3523 = vmatmul.mubr.bf16.gmra.mrb[0].mxu0 %v3488
    %v3524 = vpop.f32.mrb[0].mxu0
    %v3525 = vadd.f32 %v3021, %v3524
    %v3526 = vpop.f32.mrb[0].mxu0
    %v3527 = vpop.f32.mrb[0].mxu0
    %v3528 = vpop.f32.mrb[0].mxu0
    %3529 = vdwg.mxu0
    %v3530 = vsel %vm3073, %v3525, -inf
    %3531 = vmax.xlane.f32.xlu0 %v3530
    %v3532 = vpop.xlane.xlu0 %3531
    %v3533 = vsub.f32 %v3525, %v3532
    %v3534 = vmul.f32 %v3533, 1.442695
    %v3535 = vpow.pop %v3534
    %v3536 = vsel %vm3073, %v3535, 0.0
    %3537 = vadd.xlane.f32.xlu0 %v3536
    %v3538 = vpop.xlane.xlu0 %3537
    %v3539 = vlog2.pop %v3538
    %v3540 = vmul.f32 %v3539, 0.6931472
    %v3541 = vsub.f32 %v3533, %v3540
    %3543 = vrot.lane.b32.xlu0 %v3486, 112
    %v3544 = vpop.permute.xlu0 %3543
    %v3546 = vsel %vm3029, %v3544, 0
    %3548 = vmatprep.subr.bf16.mxu0 0
    %3549 = vmatpush1.bf16.msra.mxu0 %v3027
    %3550 = vmatprep.subr.bf16.mxu0 0
    %3551 = vmatpush1.bf16.msra.mxu0 0
    %3552 = vmatprep.subr.bf16.mxu0 0
    %3553 = vmatpush1.bf16.msra.mxu0 0
    %3554 = vmatprep.subr.bf16.mxu0 0
    %3555 = vmatpush1.bf16.msra.mxu0 0
    %3556 = vmatprep.subr.bf16.mxu0 0
    %3557 = vmatpush1.bf16.msra.mxu0 0
    %3558 = vmatprep.subr.bf16.mxu0 0
    %3559 = vmatpush1.bf16.msra.mxu0 0
    %3560 = vmatprep.subr.bf16.mxu0 0
    %3561 = vmatpush1.bf16.msra.mxu0 0
    %3562 = vmatprep.subr.bf16.mxu0 0
    %3563 = vmatpush1.bf16.msra.mxu0 0
    %3564 = vmatprep.subr.bf16.mxu0 0
    %3565 = vmatpush1.bf16.msra.mxu0 0
    %3566 = vmatprep.subr.bf16.mxu0 0
    %3567 = vmatpush1.bf16.msra.mxu0 0
    %3568 = vmatprep.subr.bf16.mxu0 0
    %3569 = vmatpush1.bf16.msra.mxu0 0
    %3570 = vmatprep.subr.bf16.mxu0 0
    %3571 = vmatpush1.bf16.msra.mxu0 0
    %3572 = vmatprep.subr.bf16.mxu0 0
    %3573 = vmatpush1.bf16.msra.mxu0 0
    %3574 = vmatprep.subr.bf16.mxu0 0
    %3575 = vmatpush1.bf16.msra.mxu0 0
    %3576 = vmatprep.subr.bf16.mxu0 0
    %3577 = vmatpush1.bf16.msra.mxu0 0
    %3578 = vmatprep.subr.bf16.mxu0 0
    %3579 = vmatpush1.bf16.msra.mxu0 0
    %3580 = vmatprep.mubr.bf16.mxu0 0
    %3581 = vmatmul.mubr.bf16.gmra.mrb[0].mxu0 %v3546
    %v3582 = vpop.f32.mrb[0].mxu0
    %v3583 = vadd.f32 %v3021, %v3582
    %v3584 = vpop.f32.mrb[0].mxu0
    %v3585 = vpop.f32.mrb[0].mxu0
    %v3586 = vpop.f32.mrb[0].mxu0
    %3587 = vdwg.mxu0
    %v3588 = vsel %vm3073, %v3583, -inf
    %3589 = vmax.xlane.f32.xlu0 %v3588
    %v3590 = vpop.xlane.xlu0 %3589
    %v3591 = vsub.f32 %v3583, %v3590
    %v3592 = vmul.f32 %v3591, 1.442695
    %v3593 = vpow.pop %v3592
    %v3594 = vsel %vm3073, %v3593, 0.0
    %3595 = vadd.xlane.f32.xlu0 %v3594
    %v3596 = vpop.xlane.xlu0 %3595
    %v3597 = vlog2.pop %v3596
    %v3598 = vmul.f32 %v3597, 0.6931472
    %v3599 = vsub.f32 %v3591, %v3598
    %3600 = vrot.lane.b32.xlu0 %v3486, 96
    %v3601 = vpop.permute.xlu0 %3600
    %v3603 = vsel %vm3029, %v3601, 0
    %3605 = vmatprep.subr.bf16.mxu0 0
    %3606 = vmatpush1.bf16.msra.mxu0 %v3027
    %3607 = vmatprep.subr.bf16.mxu0 0
    %3608 = vmatpush1.bf16.msra.mxu0 0
    %3609 = vmatprep.subr.bf16.mxu0 0
    %3610 = vmatpush1.bf16.msra.mxu0 0
    %3611 = vmatprep.subr.bf16.mxu0 0
    %3612 = vmatpush1.bf16.msra.mxu0 0
    %3613 = vmatprep.subr.bf16.mxu0 0
    %3614 = vmatpush1.bf16.msra.mxu0 0
    %3615 = vmatprep.subr.bf16.mxu0 0
    %3616 = vmatpush1.bf16.msra.mxu0 0
    %3617 = vmatprep.subr.bf16.mxu0 0
    %3618 = vmatpush1.bf16.msra.mxu0 0
    %3619 = vmatprep.subr.bf16.mxu0 0
    %3620 = vmatpush1.bf16.msra.mxu0 0
    %3621 = vmatprep.subr.bf16.mxu0 0
    %3622 = vmatpush1.bf16.msra.mxu0 0
    %3623 = vmatprep.subr.bf16.mxu0 0
    %3624 = vmatpush1.bf16.msra.mxu0 0
    %3625 = vmatprep.subr.bf16.mxu0 0
    %3626 = vmatpush1.bf16.msra.mxu0 0
    %3627 = vmatprep.subr.bf16.mxu0 0
    %3628 = vmatpush1.bf16.msra.mxu0 0
    %3629 = vmatprep.subr.bf16.mxu0 0
    %3630 = vmatpush1.bf16.msra.mxu0 0
    %3631 = vmatprep.subr.bf16.mxu0 0
    %3632 = vmatpush1.bf16.msra.mxu0 0
    %3633 = vmatprep.subr.bf16.mxu0 0
    %3634 = vmatpush1.bf16.msra.mxu0 0
    %3635 = vmatprep.subr.bf16.mxu0 0
    %3636 = vmatpush1.bf16.msra.mxu0 0
    %3637 = vmatprep.mubr.bf16.mxu0 0
    %3638 = vmatmul.mubr.bf16.gmra.mrb[0].mxu0 %v3603
    %v3639 = vpop.f32.mrb[0].mxu0
    %v3640 = vadd.f32 %v3021, %v3639
    %v3641 = vpop.f32.mrb[0].mxu0
    %v3642 = vpop.f32.mrb[0].mxu0
    %v3643 = vpop.f32.mrb[0].mxu0
    %3644 = vdwg.mxu0
    %v3645 = vsel %vm3073, %v3640, -inf
    %3646 = vmax.xlane.f32.xlu0 %v3645
    %v3647 = vpop.xlane.xlu0 %3646
    %v3648 = vsub.f32 %v3640, %v3647
    %v3649 = vmul.f32 %v3648, 1.442695
    %v3650 = vpow.pop %v3649
    %v3651 = vsel %vm3073, %v3650, 0.0
    %3652 = vadd.xlane.f32.xlu0 %v3651
    %v3653 = vpop.xlane.xlu0 %3652
    %v3654 = vlog2.pop %v3653
    %v3655 = vmul.f32 %v3654, 0.6931472
    %v3656 = vsub.f32 %v3648, %v3655
    %3657 = vrot.lane.b32.xlu0 %v3486, 80
    %v3658 = vpop.permute.xlu0 %3657
    %v3660 = vsel %vm3029, %v3658, 0
    %3662 = vmatprep.subr.bf16.mxu0 0
    %3663 = vmatpush1.bf16.msra.mxu0 %v3027
    %3664 = vmatprep.subr.bf16.mxu0 0
    %3665 = vmatpush1.bf16.msra.mxu0 0
    %3666 = vmatprep.subr.bf16.mxu0 0
    %3667 = vmatpush1.bf16.msra.mxu0 0
    %3668 = vmatprep.subr.bf16.mxu0 0
    %3669 = vmatpush1.bf16.msra.mxu0 0
    %3670 = vmatprep.subr.bf16.mxu0 0
    %3671 = vmatpush1.bf16.msra.mxu0 0
    %3672 = vmatprep.subr.bf16.mxu0 0
    %3673 = vmatpush1.bf16.msra.mxu0 0
    %3674 = vmatprep.subr.bf16.mxu0 0
    %3675 = vmatpush1.bf16.msra.mxu0 0
    %3676 = vmatprep.subr.bf16.mxu0 0
    %3677 = vmatpush1.bf16.msra.mxu0 0
    %3678 = vmatprep.subr.bf16.mxu0 0
    %3679 = vmatpush1.bf16.msra.mxu0 0
    %3680 = vmatprep.subr.bf16.mxu0 0
    %3681 = vmatpush1.bf16.msra.mxu0 0
    %3682 = vmatprep.subr.bf16.mxu0 0
    %3683 = vmatpush1.bf16.msra.mxu0 0
    %3684 = vmatprep.subr.bf16.mxu0 0
    %3685 = vmatpush1.bf16.msra.mxu0 0
    %3686 = vmatprep.subr.bf16.mxu0 0
    %3687 = vmatpush1.bf16.msra.mxu0 0
    %3688 = vmatprep.subr.bf16.mxu0 0
    %3689 = vmatpush1.bf16.msra.mxu0 0
    %3690 = vmatprep.subr.bf16.mxu0 0
    %3691 = vmatpush1.bf16.msra.mxu0 0
    %3692 = vmatprep.subr.bf16.mxu0 0
    %3693 = vmatpush1.bf16.msra.mxu0 0
    %3694 = vmatprep.mubr.bf16.mxu0 0
    %3695 = vmatmul.mubr.bf16.gmra.mrb[0].mxu0 %v3660
    %v3696 = vpop.f32.mrb[0].mxu0
    %v3697 = vadd.f32 %v3021, %v3696
    %v3698 = vpop.f32.mrb[0].mxu0
    %v3699 = vpop.f32.mrb[0].mxu0
    %v3700 = vpop.f32.mrb[0].mxu0
    %3701 = vdwg.mxu0
    %v3702 = vsel %vm3073, %v3697, -inf
    %3703 = vmax.xlane.f32.xlu0 %v3702
    %v3704 = vpop.xlane.xlu0 %3703
    %v3705 = vsub.f32 %v3697, %v3704
    %v3706 = vmul.f32 %v3705, 1.442695
    %v3707 = vpow.pop %v3706
    %v3708 = vsel %vm3073, %v3707, 0.0
    %3709 = vadd.xlane.f32.xlu0 %v3708
    %v3710 = vpop.xlane.xlu0 %3709
    %v3711 = vlog2.pop %v3710
    %v3712 = vmul.f32 %v3711, 0.6931472
    %v3713 = vsub.f32 %v3705, %v3712
    %3714 = vrot.lane.b32.xlu0 %v3486, 64
    %v3715 = vpop.permute.xlu0 %3714
    %v3717 = vsel %vm3029, %v3715, 0
    %3719 = vmatprep.subr.bf16.mxu0 0
    %3720 = vmatpush1.bf16.msra.mxu0 %v3027
    %3721 = vmatprep.subr.bf16.mxu0 0
    %3722 = vmatpush1.bf16.msra.mxu0 0
    %3723 = vmatprep.subr.bf16.mxu0 0
    %3724 = vmatpush1.bf16.msra.mxu0 0
    %3725 = vmatprep.subr.bf16.mxu0 0
    %3726 = vmatpush1.bf16.msra.mxu0 0
    %3727 = vmatprep.subr.bf16.mxu0 0
    %3728 = vmatpush1.bf16.msra.mxu0 0
    %3729 = vmatprep.subr.bf16.mxu0 0
    %3730 = vmatpush1.bf16.msra.mxu0 0
    %3731 = vmatprep.subr.bf16.mxu0 0
    %3732 = vmatpush1.bf16.msra.mxu0 0
    %3733 = vmatprep.subr.bf16.mxu0 0
    %3734 = vmatpush1.bf16.msra.mxu0 0
    %3735 = vmatprep.subr.bf16.mxu0 0
    %3736 = vmatpush1.bf16.msra.mxu0 0
    %3737 = vmatprep.subr.bf16.mxu0 0
    %3738 = vmatpush1.bf16.msra.mxu0 0
    %3739 = vmatprep.subr.bf16.mxu0 0
    %3740 = vmatpush1.bf16.msra.mxu0 0
    %3741 = vmatprep.subr.bf16.mxu0 0
    %3742 = vmatpush1.bf16.msra.mxu0 0
    %3743 = vmatprep.subr.bf16.mxu0 0
    %3744 = vmatpush1.bf16.msra.mxu0 0
    %3745 = vmatprep.subr.bf16.mxu0 0
    %3746 = vmatpush1.bf16.msra.mxu0 0
    %3747 = vmatprep.subr.bf16.mxu0 0
    %3748 = vmatpush1.bf16.msra.mxu0 0
    %3749 = vmatprep.subr.bf16.mxu0 0
    %3750 = vmatpush1.bf16.msra.mxu0 0
    %3751 = vmatprep.mubr.bf16.mxu0 0
    %3752 = vmatmul.mubr.bf16.gmra.mrb[0].mxu0 %v3717
    %v3753 = vpop.f32.mrb[0].mxu0
    %v3754 = vadd.f32 %v3021, %v3753
    %v3755 = vpop.f32.mrb[0].mxu0
    %v3756 = vpop.f32.mrb[0].mxu0
    %v3757 = vpop.f32.mrb[0].mxu0
    %3758 = vdwg.mxu0
    %v3759 = vsel %vm3073, %v3754, -inf
    %3760 = vmax.xlane.f32.xlu0 %v3759
    %v3761 = vpop.xlane.xlu0 %3760
    %v3762 = vsub.f32 %v3754, %v3761
    %v3763 = vmul.f32 %v3762, 1.442695
    %v3764 = vpow.pop %v3763
    %v3765 = vsel %vm3073, %v3764, 0.0
    %3766 = vadd.xlane.f32.xlu0 %v3765
    %v3767 = vpop.xlane.xlu0 %3766
    %v3768 = vlog2.pop %v3767
    %v3769 = vmul.f32 %v3768, 0.6931472
    %v3770 = vsub.f32 %v3762, %v3769
    %3771 = vrot.lane.b32.xlu0 %v3486, 48
    %v3772 = vpop.permute.xlu0 %3771
    %v3774 = vsel %vm3029, %v3772, 0
    %3776 = vmatprep.subr.bf16.mxu0 0
    %3777 = vmatpush1.bf16.msra.mxu0 %v3027
    %3778 = vmatprep.subr.bf16.mxu0 0
    %3779 = vmatpush1.bf16.msra.mxu0 0
    %3780 = vmatprep.subr.bf16.mxu0 0
    %3781 = vmatpush1.bf16.msra.mxu0 0
    %3782 = vmatprep.subr.bf16.mxu0 0
    %3783 = vmatpush1.bf16.msra.mxu0 0
    %3784 = vmatprep.subr.bf16.mxu0 0
    %3785 = vmatpush1.bf16.msra.mxu0 0
    %3786 = vmatprep.subr.bf16.mxu0 0
    %3787 = vmatpush1.bf16.msra.mxu0 0
    %3788 = vmatprep.subr.bf16.mxu0 0
    %3789 = vmatpush1.bf16.msra.mxu0 0
    %3790 = vmatprep.subr.bf16.mxu0 0
    %3791 = vmatpush1.bf16.msra.mxu0 0
    %3792 = vmatprep.subr.bf16.mxu0 0
    %3793 = vmatpush1.bf16.msra.mxu0 0
    %3794 = vmatprep.subr.bf16.mxu0 0
    %3795 = vmatpush1.bf16.msra.mxu0 0
    %3796 = vmatprep.subr.bf16.mxu0 0
    %3797 = vmatpush1.bf16.msra.mxu0 0
    %3798 = vmatprep.subr.bf16.mxu0 0
    %3799 = vmatpush1.bf16.msra.mxu0 0
    %3800 = vmatprep.subr.bf16.mxu0 0
    %3801 = vmatpush1.bf16.msra.mxu0 0
    %3802 = vmatprep.subr.bf16.mxu0 0
    %3803 = vmatpush1.bf16.msra.mxu0 0
    %3804 = vmatprep.subr.bf16.mxu0 0
    %3805 = vmatpush1.bf16.msra.mxu0 0
    %3806 = vmatprep.subr.bf16.mxu0 0
    %3807 = vmatpush1.bf16.msra.mxu0 0
    %3808 = vmatprep.mubr.bf16.mxu0 0
    %3809 = vmatmul.mubr.bf16.gmra.mrb[0].mxu0 %v3774
    %v3810 = vpop.f32.mrb[0].mxu0
    %v3811 = vadd.f32 %v3021, %v3810
    %v3812 = vpop.f32.mrb[0].mxu0
    %v3813 = vpop.f32.mrb[0].mxu0
    %v3814 = vpop.f32.mrb[0].mxu0
    %3815 = vdwg.mxu0
    %v3816 = vsel %vm3073, %v3811, -inf
    %3817 = vmax.xlane.f32.xlu0 %v3816
    %v3818 = vpop.xlane.xlu0 %3817
    %v3819 = vsub.f32 %v3811, %v3818
    %v3820 = vmul.f32 %v3819, 1.442695
    %v3821 = vpow.pop %v3820
    %v3822 = vsel %vm3073, %v3821, 0.0
    %3823 = vadd.xlane.f32.xlu0 %v3822
    %v3824 = vpop.xlane.xlu0 %3823
    %v3825 = vlog2.pop %v3824
    %v3826 = vmul.f32 %v3825, 0.6931472
    %v3827 = vsub.f32 %v3819, %v3826
    %3828 = vrot.lane.b32.xlu0 %v3486, 32
    %v3829 = vpop.permute.xlu0 %3828
    %v3831 = vsel %vm3029, %v3829, 0
    %3833 = vmatprep.subr.bf16.mxu0 0
    %3834 = vmatpush1.bf16.msra.mxu0 %v3027
    %3835 = vmatprep.subr.bf16.mxu0 0
    %3836 = vmatpush1.bf16.msra.mxu0 0
    %3837 = vmatprep.subr.bf16.mxu0 0
    %3838 = vmatpush1.bf16.msra.mxu0 0
    %3839 = vmatprep.subr.bf16.mxu0 0
    %3840 = vmatpush1.bf16.msra.mxu0 0
    %3841 = vmatprep.subr.bf16.mxu0 0
    %3842 = vmatpush1.bf16.msra.mxu0 0
    %3843 = vmatprep.subr.bf16.mxu0 0
    %3844 = vmatpush1.bf16.msra.mxu0 0
    %3845 = vmatprep.subr.bf16.mxu0 0
    %3846 = vmatpush1.bf16.msra.mxu0 0
    %3847 = vmatprep.subr.bf16.mxu0 0
    %3848 = vmatpush1.bf16.msra.mxu0 0
    %3849 = vmatprep.subr.bf16.mxu0 0
    %3850 = vmatpush1.bf16.msra.mxu0 0
    %3851 = vmatprep.subr.bf16.mxu0 0
    %3852 = vmatpush1.bf16.msra.mxu0 0
    %3853 = vmatprep.subr.bf16.mxu0 0
    %3854 = vmatpush1.bf16.msra.mxu0 0
    %3855 = vmatprep.subr.bf16.mxu0 0
    %3856 = vmatpush1.bf16.msra.mxu0 0
    %3857 = vmatprep.subr.bf16.mxu0 0
    %3858 = vmatpush1.bf16.msra.mxu0 0
    %3859 = vmatprep.subr.bf16.mxu0 0
    %3860 = vmatpush1.bf16.msra.mxu0 0
    %3861 = vmatprep.subr.bf16.mxu0 0
    %3862 = vmatpush1.bf16.msra.mxu0 0
    %3863 = vmatprep.subr.bf16.mxu0 0
    %3864 = vmatpush1.bf16.msra.mxu0 0
    %3865 = vmatprep.mubr.bf16.mxu0 0
    %3866 = vmatmul.mubr.bf16.gmra.mrb[0].mxu0 %v3831
    %v3867 = vpop.f32.mrb[0].mxu0
    %v3868 = vadd.f32 %v3021, %v3867
    %v3869 = vpop.f32.mrb[0].mxu0
    %v3870 = vpop.f32.mrb[0].mxu0
    %v3871 = vpop.f32.mrb[0].mxu0
    %3872 = vdwg.mxu0
    %v3873 = vsel %vm3073, %v3868, -inf
    %3874 = vmax.xlane.f32.xlu0 %v3873
    %v3875 = vpop.xlane.xlu0 %3874
    %v3876 = vsub.f32 %v3868, %v3875
    %v3877 = vmul.f32 %v3876, 1.442695
    %v3878 = vpow.pop %v3877
    %v3879 = vsel %vm3073, %v3878, 0.0
    %3880 = vadd.xlane.f32.xlu0 %v3879
    %v3881 = vpop.xlane.xlu0 %3880
    %v3882 = vlog2.pop %v3881
    %v3883 = vmul.f32 %v3882, 0.6931472
    %v3884 = vsub.f32 %v3876, %v3883
    %3885 = vrot.lane.b32.xlu0 %v3486, 16
    %v3886 = vpop.permute.xlu0 %3885
    %v3888 = vsel %vm3029, %v3886, 0
    %3890 = vmatprep.subr.bf16.mxu0 0
    %3891 = vmatpush1.bf16.msra.mxu0 %v3027
    %3892 = vmatprep.subr.bf16.mxu0 0
    %3893 = vmatpush1.bf16.msra.mxu0 0
    %3894 = vmatprep.subr.bf16.mxu0 0
    %3895 = vmatpush1.bf16.msra.mxu0 0
    %3896 = vmatprep.subr.bf16.mxu0 0
    %3897 = vmatpush1.bf16.msra.mxu0 0
    %3898 = vmatprep.subr.bf16.mxu0 0
    %3899 = vmatpush1.bf16.msra.mxu0 0
    %3900 = vmatprep.subr.bf16.mxu0 0
    %3901 = vmatpush1.bf16.msra.mxu0 0
    %3902 = vmatprep.subr.bf16.mxu0 0
    %3903 = vmatpush1.bf16.msra.mxu0 0
    %3904 = vmatprep.subr.bf16.mxu0 0
    %3905 = vmatpush1.bf16.msra.mxu0 0
    %3906 = vmatprep.subr.bf16.mxu0 0
    %3907 = vmatpush1.bf16.msra.mxu0 0
    %3908 = vmatprep.subr.bf16.mxu0 0
    %3909 = vmatpush1.bf16.msra.mxu0 0
    %3910 = vmatprep.subr.bf16.mxu0 0
    %3911 = vmatpush1.bf16.msra.mxu0 0
    %3912 = vmatprep.subr.bf16.mxu0 0
    %3913 = vmatpush1.bf16.msra.mxu0 0
    %3914 = vmatprep.subr.bf16.mxu0 0
    %3915 = vmatpush1.bf16.msra.mxu0 0
    %3916 = vmatprep.subr.bf16.mxu0 0
    %3917 = vmatpush1.bf16.msra.mxu0 0
    %3918 = vmatprep.subr.bf16.mxu0 0
    %3919 = vmatpush1.bf16.msra.mxu0 0
    %3920 = vmatprep.subr.bf16.mxu0 0
    %3921 = vmatpush1.bf16.msra.mxu0 0
    %3922 = vmatprep.mubr.bf16.mxu0 0
    %3923 = vmatmul.mubr.bf16.gmra.mrb[0].mxu0 %v3888
    %v3924 = vpop.f32.mrb[0].mxu0
    %v3925 = vadd.f32 %v3021, %v3924
    %v3926 = vpop.f32.mrb[0].mxu0
    %v3927 = vpop.f32.mrb[0].mxu0
    %v3928 = vpop.f32.mrb[0].mxu0
    %3929 = vdwg.mxu0
    %v3930 = vsel %vm3073, %v3925, -inf
    %3931 = vmax.xlane.f32.xlu0 %v3930
    %v3932 = vpop.xlane.xlu0 %3931
    %v3933 = vsub.f32 %v3925, %v3932
    %v3934 = vmul.f32 %v3933, 1.442695
    %v3935 = vpow.pop %v3934
    %v3936 = vsel %vm3073, %v3935, 0.0
    %3937 = vadd.xlane.f32.xlu0 %v3936
    %v3938 = vpop.xlane.xlu0 %3937
    %v3939 = vlog2.pop %v3938
    %v3940 = vmul.f32 %v3939, 0.6931472
    %v3941 = vsub.f32 %v3933, %v3940
    %v3942 = vpack.c.bf16 %v3011, %v3011
    %v3944 = vsel %vm3029, %v3942, 0
    %3946 = vmatprep.subr.bf16.mxu0 0
    %3947 = vmatpush1.bf16.msra.mxu0 %v3027
    %3948 = vmatprep.subr.bf16.mxu0 0
    %3949 = vmatpush1.bf16.msra.mxu0 0
    %3950 = vmatprep.subr.bf16.mxu0 0
    %3951 = vmatpush1.bf16.msra.mxu0 0
    %3952 = vmatprep.subr.bf16.mxu0 0
    %3953 = vmatpush1.bf16.msra.mxu0 0
    %3954 = vmatprep.subr.bf16.mxu0 0
    %3955 = vmatpush1.bf16.msra.mxu0 0
    %3956 = vmatprep.subr.bf16.mxu0 0
    %3957 = vmatpush1.bf16.msra.mxu0 0
    %3958 = vmatprep.subr.bf16.mxu0 0
    %3959 = vmatpush1.bf16.msra.mxu0 0
    %3960 = vmatprep.subr.bf16.mxu0 0
    %3961 = vmatpush1.bf16.msra.mxu0 0
    %3962 = vmatprep.subr.bf16.mxu0 0
    %3963 = vmatpush1.bf16.msra.mxu0 0
    %3964 = vmatprep.subr.bf16.mxu0 0
    %3965 = vmatpush1.bf16.msra.mxu0 0
    %3966 = vmatprep.subr.bf16.mxu0 0
    %3967 = vmatpush1.bf16.msra.mxu0 0
    %3968 = vmatprep.subr.bf16.mxu0 0
    %3969 = vmatpush1.bf16.msra.mxu0 0
    %3970 = vmatprep.subr.bf16.mxu0 0
    %3971 = vmatpush1.bf16.msra.mxu0 0
    %3972 = vmatprep.subr.bf16.mxu0 0
    %3973 = vmatpush1.bf16.msra.mxu0 0
    %3974 = vmatprep.subr.bf16.mxu0 0
    %3975 = vmatpush1.bf16.msra.mxu0 0
    %3976 = vmatprep.subr.bf16.mxu0 0
    %3977 = vmatpush1.bf16.msra.mxu0 0
    %3978 = vmatprep.mubr.bf16.mxu0 0
    %3979 = vmatmul.mubr.bf16.gmra.mrb[0].mxu0 %v3944
    %v3980 = vpop.f32.mrb[0].mxu0
    %v3981 = vadd.f32 %v3021, %v3980
    %v3982 = vpop.f32.mrb[0].mxu0
    %v3983 = vpop.f32.mrb[0].mxu0
    %v3984 = vpop.f32.mrb[0].mxu0
    %3985 = vdwg.mxu0
    %v3986 = vsel %vm3073, %v3981, -inf
    %3987 = vmax.xlane.f32.xlu0 %v3986
    %v3988 = vpop.xlane.xlu0 %3987
    %v3989 = vsub.f32 %v3981, %v3988
    %v3990 = vmul.f32 %v3989, 1.442695
    %v3991 = vpow.pop %v3990
    %v3992 = vsel %vm3073, %v3991, 0.0
    %3993 = vadd.xlane.f32.xlu0 %v3992
    %v3994 = vpop.xlane.xlu0 %3993
    %v3995 = vlog2.pop %v3994
    %v3996 = vmul.f32 %v3995, 0.6931472
    %v3997 = vsub.f32 %v3989, %v3996
    %3999 = vrot.lane.b32.xlu0 %v3942, 112
    %v4000 = vpop.permute.xlu0 %3999
    %v4002 = vsel %vm3029, %v4000, 0
    %4004 = vmatprep.subr.bf16.mxu0 0
    %4005 = vmatpush1.bf16.msra.mxu0 %v3027
    %4006 = vmatprep.subr.bf16.mxu0 0
    %4007 = vmatpush1.bf16.msra.mxu0 0
    %4008 = vmatprep.subr.bf16.mxu0 0
    %4009 = vmatpush1.bf16.msra.mxu0 0
    %4010 = vmatprep.subr.bf16.mxu0 0
    %4011 = vmatpush1.bf16.msra.mxu0 0
    %4012 = vmatprep.subr.bf16.mxu0 0
    %4013 = vmatpush1.bf16.msra.mxu0 0
    %4014 = vmatprep.subr.bf16.mxu0 0
    %4015 = vmatpush1.bf16.msra.mxu0 0
    %4016 = vmatprep.subr.bf16.mxu0 0
    %4017 = vmatpush1.bf16.msra.mxu0 0
    %4018 = vmatprep.subr.bf16.mxu0 0
    %4019 = vmatpush1.bf16.msra.mxu0 0
    %4020 = vmatprep.subr.bf16.mxu0 0
    %4021 = vmatpush1.bf16.msra.mxu0 0
    %4022 = vmatprep.subr.bf16.mxu0 0
    %4023 = vmatpush1.bf16.msra.mxu0 0
    %4024 = vmatprep.subr.bf16.mxu0 0
    %4025 = vmatpush1.bf16.msra.mxu0 0
    %4026 = vmatprep.subr.bf16.mxu0 0
    %4027 = vmatpush1.bf16.msra.mxu0 0
    %4028 = vmatprep.subr.bf16.mxu0 0
    %4029 = vmatpush1.bf16.msra.mxu0 0
    %4030 = vmatprep.subr.bf16.mxu0 0
    %4031 = vmatpush1.bf16.msra.mxu0 0
    %4032 = vmatprep.subr.bf16.mxu0 0
    %4033 = vmatpush1.bf16.msra.mxu0 0
    %4034 = vmatprep.subr.bf16.mxu0 0
    %4035 = vmatpush1.bf16.msra.mxu0 0
    %4036 = vmatprep.mubr.bf16.mxu0 0
    %4037 = vmatmul.mubr.bf16.gmra.mrb[0].mxu0 %v4002
    %v4038 = vpop.f32.mrb[0].mxu0
    %v4039 = vadd.f32 %v3021, %v4038
    %v4040 = vpop.f32.mrb[0].mxu0
    %v4041 = vpop.f32.mrb[0].mxu0
    %v4042 = vpop.f32.mrb[0].mxu0
    %4043 = vdwg.mxu0
    %v4044 = vsel %vm3073, %v4039, -inf
    %4045 = vmax.xlane.f32.xlu0 %v4044
    %v4046 = vpop.xlane.xlu0 %4045
    %v4047 = vsub.f32 %v4039, %v4046
    %v4048 = vmul.f32 %v4047, 1.442695
    %v4049 = vpow.pop %v4048
    %v4050 = vsel %vm3073, %v4049, 0.0
    %4051 = vadd.xlane.f32.xlu0 %v4050
    %v4052 = vpop.xlane.xlu0 %4051
    %v4053 = vlog2.pop %v4052
    %v4054 = vmul.f32 %v4053, 0.6931472
    %v4055 = vsub.f32 %v4047, %v4054
    %4056 = vrot.lane.b32.xlu0 %v3942, 96
    %v4057 = vpop.permute.xlu0 %4056
    %v4059 = vsel %vm3029, %v4057, 0
    %4061 = vmatprep.subr.bf16.mxu0 0
    %4062 = vmatpush1.bf16.msra.mxu0 %v3027
    %4063 = vmatprep.subr.bf16.mxu0 0
    %4064 = vmatpush1.bf16.msra.mxu0 0
    %4065 = vmatprep.subr.bf16.mxu0 0
    %4066 = vmatpush1.bf16.msra.mxu0 0
    %4067 = vmatprep.subr.bf16.mxu0 0
    %4068 = vmatpush1.bf16.msra.mxu0 0
    %4069 = vmatprep.subr.bf16.mxu0 0
    %4070 = vmatpush1.bf16.msra.mxu0 0
    %4071 = vmatprep.subr.bf16.mxu0 0
    %4072 = vmatpush1.bf16.msra.mxu0 0
    %4073 = vmatprep.subr.bf16.mxu0 0
    %4074 = vmatpush1.bf16.msra.mxu0 0
    %4075 = vmatprep.subr.bf16.mxu0 0
    %4076 = vmatpush1.bf16.msra.mxu0 0
    %4077 = vmatprep.subr.bf16.mxu0 0
    %4078 = vmatpush1.bf16.msra.mxu0 0
    %4079 = vmatprep.subr.bf16.mxu0 0
    %4080 = vmatpush1.bf16.msra.mxu0 0
    %4081 = vmatprep.subr.bf16.mxu0 0
    %4082 = vmatpush1.bf16.msra.mxu0 0
    %4083 = vmatprep.subr.bf16.mxu0 0
    %4084 = vmatpush1.bf16.msra.mxu0 0
    %4085 = vmatprep.subr.bf16.mxu0 0
    %4086 = vmatpush1.bf16.msra.mxu0 0
    %4087 = vmatprep.subr.bf16.mxu0 0
    %4088 = vmatpush1.bf16.msra.mxu0 0
    %4089 = vmatprep.subr.bf16.mxu0 0
    %4090 = vmatpush1.bf16.msra.mxu0 0
    %4091 = vmatprep.subr.bf16.mxu0 0
    %4092 = vmatpush1.bf16.msra.mxu0 0
    %4093 = vmatprep.mubr.bf16.mxu0 0
    %4094 = vmatmul.mubr.bf16.gmra.mrb[0].mxu0 %v4059
    %v4095 = vpop.f32.mrb[0].mxu0
    %v4096 = vadd.f32 %v3021, %v4095
    %v4097 = vpop.f32.mrb[0].mxu0
    %v4098 = vpop.f32.mrb[0].mxu0
    %v4099 = vpop.f32.mrb[0].mxu0
    %4100 = vdwg.mxu0
    %v4101 = vsel %vm3073, %v4096, -inf
    %4102 = vmax.xlane.f32.xlu0 %v4101
    %v4103 = vpop.xlane.xlu0 %4102
    %v4104 = vsub.f32 %v4096, %v4103
    %v4105 = vmul.f32 %v4104, 1.442695
    %v4106 = vpow.pop %v4105
    %v4107 = vsel %vm3073, %v4106, 0.0
    %4108 = vadd.xlane.f32.xlu0 %v4107
    %v4109 = vpop.xlane.xlu0 %4108
    %v4110 = vlog2.pop %v4109
    %v4111 = vmul.f32 %v4110, 0.6931472
    %v4112 = vsub.f32 %v4104, %v4111
    %4113 = vrot.lane.b32.xlu0 %v3942, 80
    %v4114 = vpop.permute.xlu0 %4113
    %v4116 = vsel %vm3029, %v4114, 0
    %4118 = vmatprep.subr.bf16.mxu0 0
    %4119 = vmatpush1.bf16.msra.mxu0 %v3027
    %4120 = vmatprep.subr.bf16.mxu0 0
    %4121 = vmatpush1.bf16.msra.mxu0 0
    %4122 = vmatprep.subr.bf16.mxu0 0
    %4123 = vmatpush1.bf16.msra.mxu0 0
    %4124 = vmatprep.subr.bf16.mxu0 0
    %4125 = vmatpush1.bf16.msra.mxu0 0
    %4126 = vmatprep.subr.bf16.mxu0 0
    %4127 = vmatpush1.bf16.msra.mxu0 0
    %4128 = vmatprep.subr.bf16.mxu0 0
    %4129 = vmatpush1.bf16.msra.mxu0 0
    %4130 = vmatprep.subr.bf16.mxu0 0
    %4131 = vmatpush1.bf16.msra.mxu0 0
    %4132 = vmatprep.subr.bf16.mxu0 0
    %4133 = vmatpush1.bf16.msra.mxu0 0
    %4134 = vmatprep.subr.bf16.mxu0 0
    %4135 = vmatpush1.bf16.msra.mxu0 0
    %4136 = vmatprep.subr.bf16.mxu0 0
    %4137 = vmatpush1.bf16.msra.mxu0 0
    %4138 = vmatprep.subr.bf16.mxu0 0
    %4139 = vmatpush1.bf16.msra.mxu0 0
    %4140 = vmatprep.subr.bf16.mxu0 0
    %4141 = vmatpush1.bf16.msra.mxu0 0
    %4142 = vmatprep.subr.bf16.mxu0 0
    %4143 = vmatpush1.bf16.msra.mxu0 0
    %4144 = vmatprep.subr.bf16.mxu0 0
    %4145 = vmatpush1.bf16.msra.mxu0 0
    %4146 = vmatprep.subr.bf16.mxu0 0
    %4147 = vmatpush1.bf16.msra.mxu0 0
    %4148 = vmatprep.subr.bf16.mxu0 0
    %4149 = vmatpush1.bf16.msra.mxu0 0
    %4150 = vmatprep.mubr.bf16.mxu0 0
    %4151 = vmatmul.mubr.bf16.gmra.mrb[0].mxu0 %v4116
    %v4152 = vpop.f32.mrb[0].mxu0
    %v4153 = vadd.f32 %v3021, %v4152
    %v4154 = vpop.f32.mrb[0].mxu0
    %v4155 = vpop.f32.mrb[0].mxu0
    %v4156 = vpop.f32.mrb[0].mxu0
    %4157 = vdwg.mxu0
    %v4158 = vsel %vm3073, %v4153, -inf
    %4159 = vmax.xlane.f32.xlu0 %v4158
    %v4160 = vpop.xlane.xlu0 %4159
    %v4161 = vsub.f32 %v4153, %v4160
    %v4162 = vmul.f32 %v4161, 1.442695
    %v4163 = vpow.pop %v4162
    %v4164 = vsel %vm3073, %v4163, 0.0
    %4165 = vadd.xlane.f32.xlu0 %v4164
    %v4166 = vpop.xlane.xlu0 %4165
    %v4167 = vlog2.pop %v4166
    %v4168 = vmul.f32 %v4167, 0.6931472
    %v4169 = vsub.f32 %v4161, %v4168
    %4170 = vrot.lane.b32.xlu0 %v3942, 64
    %v4171 = vpop.permute.xlu0 %4170
    %v4173 = vsel %vm3029, %v4171, 0
    %4175 = vmatprep.subr.bf16.mxu0 0
    %4176 = vmatpush1.bf16.msra.mxu0 %v3027
    %4177 = vmatprep.subr.bf16.mxu0 0
    %4178 = vmatpush1.bf16.msra.mxu0 0
    %4179 = vmatprep.subr.bf16.mxu0 0
    %4180 = vmatpush1.bf16.msra.mxu0 0
    %4181 = vmatprep.subr.bf16.mxu0 0
    %4182 = vmatpush1.bf16.msra.mxu0 0
    %4183 = vmatprep.subr.bf16.mxu0 0
    %4184 = vmatpush1.bf16.msra.mxu0 0
    %4185 = vmatprep.subr.bf16.mxu0 0
    %4186 = vmatpush1.bf16.msra.mxu0 0
    %4187 = vmatprep.subr.bf16.mxu0 0
    %4188 = vmatpush1.bf16.msra.mxu0 0
    %4189 = vmatprep.subr.bf16.mxu0 0
    %4190 = vmatpush1.bf16.msra.mxu0 0
    %4191 = vmatprep.subr.bf16.mxu0 0
    %4192 = vmatpush1.bf16.msra.mxu0 0
    %4193 = vmatprep.subr.bf16.mxu0 0
    %4194 = vmatpush1.bf16.msra.mxu0 0
    %4195 = vmatprep.subr.bf16.mxu0 0
    %4196 = vmatpush1.bf16.msra.mxu0 0
    %4197 = vmatprep.subr.bf16.mxu0 0
    %4198 = vmatpush1.bf16.msra.mxu0 0
    %4199 = vmatprep.subr.bf16.mxu0 0
    %4200 = vmatpush1.bf16.msra.mxu0 0
    %4201 = vmatprep.subr.bf16.mxu0 0
    %4202 = vmatpush1.bf16.msra.mxu0 0
    %4203 = vmatprep.subr.bf16.mxu0 0
    %4204 = vmatpush1.bf16.msra.mxu0 0
    %4205 = vmatprep.subr.bf16.mxu0 0
    %4206 = vmatpush1.bf16.msra.mxu0 0
    %4207 = vmatprep.mubr.bf16.mxu0 0
    %4208 = vmatmul.mubr.bf16.gmra.mrb[0].mxu0 %v4173
    %v4209 = vpop.f32.mrb[0].mxu0
    %v4210 = vadd.f32 %v3021, %v4209
    %v4211 = vpop.f32.mrb[0].mxu0
    %v4212 = vpop.f32.mrb[0].mxu0
    %v4213 = vpop.f32.mrb[0].mxu0
    %4214 = vdwg.mxu0
    %v4215 = vsel %vm3073, %v4210, -inf
    %4216 = vmax.xlane.f32.xlu0 %v4215
    %v4217 = vpop.xlane.xlu0 %4216
    %v4218 = vsub.f32 %v4210, %v4217
    %v4219 = vmul.f32 %v4218, 1.442695
    %v4220 = vpow.pop %v4219
    %v4221 = vsel %vm3073, %v4220, 0.0
    %4222 = vadd.xlane.f32.xlu0 %v4221
    %v4223 = vpop.xlane.xlu0 %4222
    %v4224 = vlog2.pop %v4223
    %v4225 = vmul.f32 %v4224, 0.6931472
    %v4226 = vsub.f32 %v4218, %v4225
    %4227 = vrot.lane.b32.xlu0 %v3942, 48
    %v4228 = vpop.permute.xlu0 %4227
    %v4230 = vsel %vm3029, %v4228, 0
    %4232 = vmatprep.subr.bf16.mxu0 0
    %4233 = vmatpush1.bf16.msra.mxu0 %v3027
    %4234 = vmatprep.subr.bf16.mxu0 0
    %4235 = vmatpush1.bf16.msra.mxu0 0
    %4236 = vmatprep.subr.bf16.mxu0 0
    %4237 = vmatpush1.bf16.msra.mxu0 0
    %4238 = vmatprep.subr.bf16.mxu0 0
    %4239 = vmatpush1.bf16.msra.mxu0 0
    %4240 = vmatprep.subr.bf16.mxu0 0
    %4241 = vmatpush1.bf16.msra.mxu0 0
    %4242 = vmatprep.subr.bf16.mxu0 0
    %4243 = vmatpush1.bf16.msra.mxu0 0
    %4244 = vmatprep.subr.bf16.mxu0 0
    %4245 = vmatpush1.bf16.msra.mxu0 0
    %4246 = vmatprep.subr.bf16.mxu0 0
    %4247 = vmatpush1.bf16.msra.mxu0 0
    %4248 = vmatprep.subr.bf16.mxu0 0
    %4249 = vmatpush1.bf16.msra.mxu0 0
    %4250 = vmatprep.subr.bf16.mxu0 0
    %4251 = vmatpush1.bf16.msra.mxu0 0
    %4252 = vmatprep.subr.bf16.mxu0 0
    %4253 = vmatpush1.bf16.msra.mxu0 0
    %4254 = vmatprep.subr.bf16.mxu0 0
    %4255 = vmatpush1.bf16.msra.mxu0 0
    %4256 = vmatprep.subr.bf16.mxu0 0
    %4257 = vmatpush1.bf16.msra.mxu0 0
    %4258 = vmatprep.subr.bf16.mxu0 0
    %4259 = vmatpush1.bf16.msra.mxu0 0
    %4260 = vmatprep.subr.bf16.mxu0 0
    %4261 = vmatpush1.bf16.msra.mxu0 0
    %4262 = vmatprep.subr.bf16.mxu0 0
    %4263 = vmatpush1.bf16.msra.mxu0 0
    %4264 = vmatprep.mubr.bf16.mxu0 0
    %4265 = vmatmul.mubr.bf16.gmra.mrb[0].mxu0 %v4230
    %v4266 = vpop.f32.mrb[0].mxu0
    %v4267 = vadd.f32 %v3021, %v4266
    %v4268 = vpop.f32.mrb[0].mxu0
    %v4269 = vpop.f32.mrb[0].mxu0
    %v4270 = vpop.f32.mrb[0].mxu0
    %4271 = vdwg.mxu0
    %v4272 = vsel %vm3073, %v4267, -inf
    %4273 = vmax.xlane.f32.xlu0 %v4272
    %v4274 = vpop.xlane.xlu0 %4273
    %v4275 = vsub.f32 %v4267, %v4274
    %v4276 = vmul.f32 %v4275, 1.442695
    %v4277 = vpow.pop %v4276
    %v4278 = vsel %vm3073, %v4277, 0.0
    %4279 = vadd.xlane.f32.xlu0 %v4278
    %v4280 = vpop.xlane.xlu0 %4279
    %v4281 = vlog2.pop %v4280
    %v4282 = vmul.f32 %v4281, 0.6931472
    %v4283 = vsub.f32 %v4275, %v4282
    %4284 = vrot.lane.b32.xlu0 %v3942, 32
    %v4285 = vpop.permute.xlu0 %4284
    %v4287 = vsel %vm3029, %v4285, 0
    %4289 = vmatprep.subr.bf16.mxu0 0
    %4290 = vmatpush1.bf16.msra.mxu0 %v3027
    %4291 = vmatprep.subr.bf16.mxu0 0
    %4292 = vmatpush1.bf16.msra.mxu0 0
    %4293 = vmatprep.subr.bf16.mxu0 0
    %4294 = vmatpush1.bf16.msra.mxu0 0
    %4295 = vmatprep.subr.bf16.mxu0 0
    %4296 = vmatpush1.bf16.msra.mxu0 0
    %4297 = vmatprep.subr.bf16.mxu0 0
    %4298 = vmatpush1.bf16.msra.mxu0 0
    %4299 = vmatprep.subr.bf16.mxu0 0
    %4300 = vmatpush1.bf16.msra.mxu0 0
    %4301 = vmatprep.subr.bf16.mxu0 0
    %4302 = vmatpush1.bf16.msra.mxu0 0
    %4303 = vmatprep.subr.bf16.mxu0 0
    %4304 = vmatpush1.bf16.msra.mxu0 0
    %4305 = vmatprep.subr.bf16.mxu0 0
    %4306 = vmatpush1.bf16.msra.mxu0 0
    %4307 = vmatprep.subr.bf16.mxu0 0
    %4308 = vmatpush1.bf16.msra.mxu0 0
    %4309 = vmatprep.subr.bf16.mxu0 0
    %4310 = vmatpush1.bf16.msra.mxu0 0
    %4311 = vmatprep.subr.bf16.mxu0 0
    %4312 = vmatpush1.bf16.msra.mxu0 0
    %4313 = vmatprep.subr.bf16.mxu0 0
    %4314 = vmatpush1.bf16.msra.mxu0 0
    %4315 = vmatprep.subr.bf16.mxu0 0
    %4316 = vmatpush1.bf16.msra.mxu0 0
    %4317 = vmatprep.subr.bf16.mxu0 0
    %4318 = vmatpush1.bf16.msra.mxu0 0
    %4319 = vmatprep.subr.bf16.mxu0 0
    %4320 = vmatpush1.bf16.msra.mxu0 0
    %4321 = vmatprep.mubr.bf16.mxu0 0
    %4322 = vmatmul.mubr.bf16.gmra.mrb[0].mxu0 %v4287
    %v4323 = vpop.f32.mrb[0].mxu0
    %v4324 = vadd.f32 %v3021, %v4323
    %v4325 = vpop.f32.mrb[0].mxu0
    %v4326 = vpop.f32.mrb[0].mxu0
    %v4327 = vpop.f32.mrb[0].mxu0
    %4328 = vdwg.mxu0
    %v4329 = vsel %vm3073, %v4324, -inf
    %4330 = vmax.xlane.f32.xlu0 %v4329
    %v4331 = vpop.xlane.xlu0 %4330
    %v4332 = vsub.f32 %v4324, %v4331
    %v4333 = vmul.f32 %v4332, 1.442695
    %v4334 = vpow.pop %v4333
    %v4335 = vsel %vm3073, %v4334, 0.0
    %4336 = vadd.xlane.f32.xlu0 %v4335
    %v4337 = vpop.xlane.xlu0 %4336
    %v4338 = vlog2.pop %v4337
    %v4339 = vmul.f32 %v4338, 0.6931472
    %v4340 = vsub.f32 %v4332, %v4339
    %4341 = vrot.lane.b32.xlu0 %v3942, 16
    %v4342 = vpop.permute.xlu0 %4341
    %v4344 = vsel %vm3029, %v4342, 0
    %4346 = vmatprep.subr.bf16.mxu0 0
    %4347 = vmatpush1.bf16.msra.mxu0 %v3027
    %4348 = vmatprep.subr.bf16.mxu0 0
    %4349 = vmatpush1.bf16.msra.mxu0 0
    %4350 = vmatprep.subr.bf16.mxu0 0
    %4351 = vmatpush1.bf16.msra.mxu0 0
    %4352 = vmatprep.subr.bf16.mxu0 0
    %4353 = vmatpush1.bf16.msra.mxu0 0
    %4354 = vmatprep.subr.bf16.mxu0 0
    %4355 = vmatpush1.bf16.msra.mxu0 0
    %4356 = vmatprep.subr.bf16.mxu0 0
    %4357 = vmatpush1.bf16.msra.mxu0 0
    %4358 = vmatprep.subr.bf16.mxu0 0
    %4359 = vmatpush1.bf16.msra.mxu0 0
    %4360 = vmatprep.subr.bf16.mxu0 0
    %4361 = vmatpush1.bf16.msra.mxu0 0
    %4362 = vmatprep.subr.bf16.mxu0 0
    %4363 = vmatpush1.bf16.msra.mxu0 0
    %4364 = vmatprep.subr.bf16.mxu0 0
    %4365 = vmatpush1.bf16.msra.mxu0 0
    %4366 = vmatprep.subr.bf16.mxu0 0
    %4367 = vmatpush1.bf16.msra.mxu0 0
    %4368 = vmatprep.subr.bf16.mxu0 0
    %4369 = vmatpush1.bf16.msra.mxu0 0
    %4370 = vmatprep.subr.bf16.mxu0 0
    %4371 = vmatpush1.bf16.msra.mxu0 0
    %4372 = vmatprep.subr.bf16.mxu0 0
    %4373 = vmatpush1.bf16.msra.mxu0 0
    %4374 = vmatprep.subr.bf16.mxu0 0
    %4375 = vmatpush1.bf16.msra.mxu0 0
    %4376 = vmatprep.subr.bf16.mxu0 0
    %4377 = vmatpush1.bf16.msra.mxu0 0
    %4378 = vmatprep.mubr.bf16.mxu0 0
    %4379 = vmatmul.mubr.bf16.gmra.mrb[0].mxu0 %v4344
    %v4380 = vpop.f32.mrb[0].mxu0
    %v4381 = vadd.f32 %v3021, %v4380
    %v4382 = vpop.f32.mrb[0].mxu0
    %v4383 = vpop.f32.mrb[0].mxu0
    %v4384 = vpop.f32.mrb[0].mxu0
    %4385 = vdwg.mxu0
    %v4386 = vsel %vm3073, %v4381, -inf
    %4387 = vmax.xlane.f32.xlu0 %v4386
    %v4388 = vpop.xlane.xlu0 %4387
    %v4389 = vsub.f32 %v4381, %v4388
    %v4390 = vmul.f32 %v4389, 1.442695
    %v4391 = vpow.pop %v4390
    %v4392 = vsel %vm3073, %v4391, 0.0
    %4393 = vadd.xlane.f32.xlu0 %v4392
    %v4394 = vpop.xlane.xlu0 %4393
    %v4395 = vlog2.pop %v4394
    %v4396 = vmul.f32 %v4395, 0.6931472
    %v4397 = vsub.f32 %v4389, %v4396
    %v4398 = vpack.c.bf16 %v3012, %v3012
    %v4400 = vsel %vm3029, %v4398, 0
    %4402 = vmatprep.subr.bf16.mxu0 0
    %4403 = vmatpush1.bf16.msra.mxu0 %v3027
    %4404 = vmatprep.subr.bf16.mxu0 0
    %4405 = vmatpush1.bf16.msra.mxu0 0
    %4406 = vmatprep.subr.bf16.mxu0 0
    %4407 = vmatpush1.bf16.msra.mxu0 0
    %4408 = vmatprep.subr.bf16.mxu0 0
    %4409 = vmatpush1.bf16.msra.mxu0 0
    %4410 = vmatprep.subr.bf16.mxu0 0
    %4411 = vmatpush1.bf16.msra.mxu0 0
    %4412 = vmatprep.subr.bf16.mxu0 0
    %4413 = vmatpush1.bf16.msra.mxu0 0
    %4414 = vmatprep.subr.bf16.mxu0 0
    %4415 = vmatpush1.bf16.msra.mxu0 0
    %4416 = vmatprep.subr.bf16.mxu0 0
    %4417 = vmatpush1.bf16.msra.mxu0 0
    %4418 = vmatprep.subr.bf16.mxu0 0
    %4419 = vmatpush1.bf16.msra.mxu0 0
    %4420 = vmatprep.subr.bf16.mxu0 0
    %4421 = vmatpush1.bf16.msra.mxu0 0
    %4422 = vmatprep.subr.bf16.mxu0 0
    %4423 = vmatpush1.bf16.msra.mxu0 0
    %4424 = vmatprep.subr.bf16.mxu0 0
    %4425 = vmatpush1.bf16.msra.mxu0 0
    %4426 = vmatprep.subr.bf16.mxu0 0
    %4427 = vmatpush1.bf16.msra.mxu0 0
    %4428 = vmatprep.subr.bf16.mxu0 0
    %4429 = vmatpush1.bf16.msra.mxu0 0
    %4430 = vmatprep.subr.bf16.mxu0 0
    %4431 = vmatpush1.bf16.msra.mxu0 0
    %4432 = vmatprep.subr.bf16.mxu0 0
    %4433 = vmatpush1.bf16.msra.mxu0 0
    %4434 = vmatprep.mubr.bf16.mxu0 0
    %4435 = vmatmul.mubr.bf16.gmra.mrb[0].mxu0 %v4400
    %v4436 = vpop.f32.mrb[0].mxu0
    %v4437 = vadd.f32 %v3021, %v4436
    %v4438 = vpop.f32.mrb[0].mxu0
    %v4439 = vpop.f32.mrb[0].mxu0
    %v4440 = vpop.f32.mrb[0].mxu0
    %4441 = vdwg.mxu0
    %v4442 = vsel %vm3073, %v4437, -inf
    %4443 = vmax.xlane.f32.xlu0 %v4442
    %v4444 = vpop.xlane.xlu0 %4443
    %v4445 = vsub.f32 %v4437, %v4444
    %v4446 = vmul.f32 %v4445, 1.442695
    %v4447 = vpow.pop %v4446
    %v4448 = vsel %vm3073, %v4447, 0.0
    %4449 = vadd.xlane.f32.xlu0 %v4448
    %v4450 = vpop.xlane.xlu0 %4449
    %v4451 = vlog2.pop %v4450
    %v4452 = vmul.f32 %v4451, 0.6931472
    %v4453 = vsub.f32 %v4445, %v4452
    %4455 = vrot.lane.b32.xlu0 %v4398, 112
    %v4456 = vpop.permute.xlu0 %4455
    %v4458 = vsel %vm3029, %v4456, 0
    %4460 = vmatprep.subr.bf16.mxu0 0
    %4461 = vmatpush1.bf16.msra.mxu0 %v3027
    %4462 = vmatprep.subr.bf16.mxu0 0
    %4463 = vmatpush1.bf16.msra.mxu0 0
    %4464 = vmatprep.subr.bf16.mxu0 0
    %4465 = vmatpush1.bf16.msra.mxu0 0
    %4466 = vmatprep.subr.bf16.mxu0 0
    %4467 = vmatpush1.bf16.msra.mxu0 0
    %4468 = vmatprep.subr.bf16.mxu0 0
    %4469 = vmatpush1.bf16.msra.mxu0 0
    %4470 = vmatprep.subr.bf16.mxu0 0
    %4471 = vmatpush1.bf16.msra.mxu0 0
    %4472 = vmatprep.subr.bf16.mxu0 0
    %4473 = vmatpush1.bf16.msra.mxu0 0
    %4474 = vmatprep.subr.bf16.mxu0 0
    %4475 = vmatpush1.bf16.msra.mxu0 0
    %4476 = vmatprep.subr.bf16.mxu0 0
    %4477 = vmatpush1.bf16.msra.mxu0 0
    %4478 = vmatprep.subr.bf16.mxu0 0
    %4479 = vmatpush1.bf16.msra.mxu0 0
    %4480 = vmatprep.subr.bf16.mxu0 0
    %4481 = vmatpush1.bf16.msra.mxu0 0
    %4482 = vmatprep.subr.bf16.mxu0 0
    %4483 = vmatpush1.bf16.msra.mxu0 0
    %4484 = vmatprep.subr.bf16.mxu0 0
    %4485 = vmatpush1.bf16.msra.mxu0 0
    %4486 = vmatprep.subr.bf16.mxu0 0
    %4487 = vmatpush1.bf16.msra.mxu0 0
    %4488 = vmatprep.subr.bf16.mxu0 0
    %4489 = vmatpush1.bf16.msra.mxu0 0
    %4490 = vmatprep.subr.bf16.mxu0 0
    %4491 = vmatpush1.bf16.msra.mxu0 0
    %4492 = vmatprep.mubr.bf16.mxu0 0
    %4493 = vmatmul.mubr.bf16.gmra.mrb[0].mxu0 %v4458
    %v4494 = vpop.f32.mrb[0].mxu0
    %v4495 = vadd.f32 %v3021, %v4494
    %v4496 = vpop.f32.mrb[0].mxu0
    %v4497 = vpop.f32.mrb[0].mxu0
    %v4498 = vpop.f32.mrb[0].mxu0
    %4499 = vdwg.mxu0
    %v4500 = vsel %vm3073, %v4495, -inf
    %4501 = vmax.xlane.f32.xlu0 %v4500
    %v4502 = vpop.xlane.xlu0 %4501
    %v4503 = vsub.f32 %v4495, %v4502
    %v4504 = vmul.f32 %v4503, 1.442695
    %v4505 = vpow.pop %v4504
    %v4506 = vsel %vm3073, %v4505, 0.0
    %4507 = vadd.xlane.f32.xlu0 %v4506
    %v4508 = vpop.xlane.xlu0 %4507
    %v4509 = vlog2.pop %v4508
    %v4510 = vmul.f32 %v4509, 0.6931472
    %v4511 = vsub.f32 %v4503, %v4510
    %4512 = vrot.lane.b32.xlu0 %v4398, 96
    %v4513 = vpop.permute.xlu0 %4512
    %v4515 = vsel %vm3029, %v4513, 0
    %4517 = vmatprep.subr.bf16.mxu0 0
    %4518 = vmatpush1.bf16.msra.mxu0 %v3027
    %4519 = vmatprep.subr.bf16.mxu0 0
    %4520 = vmatpush1.bf16.msra.mxu0 0
    %4521 = vmatprep.subr.bf16.mxu0 0
    %4522 = vmatpush1.bf16.msra.mxu0 0
    %4523 = vmatprep.subr.bf16.mxu0 0
    %4524 = vmatpush1.bf16.msra.mxu0 0
    %4525 = vmatprep.subr.bf16.mxu0 0
    %4526 = vmatpush1.bf16.msra.mxu0 0
    %4527 = vmatprep.subr.bf16.mxu0 0
    %4528 = vmatpush1.bf16.msra.mxu0 0
    %4529 = vmatprep.subr.bf16.mxu0 0
    %4530 = vmatpush1.bf16.msra.mxu0 0
    %4531 = vmatprep.subr.bf16.mxu0 0
    %4532 = vmatpush1.bf16.msra.mxu0 0
    %4533 = vmatprep.subr.bf16.mxu0 0
    %4534 = vmatpush1.bf16.msra.mxu0 0
    %4535 = vmatprep.subr.bf16.mxu0 0
    %4536 = vmatpush1.bf16.msra.mxu0 0
    %4537 = vmatprep.subr.bf16.mxu0 0
    %4538 = vmatpush1.bf16.msra.mxu0 0
    %4539 = vmatprep.subr.bf16.mxu0 0
    %4540 = vmatpush1.bf16.msra.mxu0 0
    %4541 = vmatprep.subr.bf16.mxu0 0
    %4542 = vmatpush1.bf16.msra.mxu0 0
    %4543 = vmatprep.subr.bf16.mxu0 0
    %4544 = vmatpush1.bf16.msra.mxu0 0
    %4545 = vmatprep.subr.bf16.mxu0 0
    %4546 = vmatpush1.bf16.msra.mxu0 0
    %4547 = vmatprep.subr.bf16.mxu0 0
    %4548 = vmatpush1.bf16.msra.mxu0 0
    %4549 = vmatprep.mubr.bf16.mxu0 0
    %4550 = vmatmul.mubr.bf16.gmra.mrb[0].mxu0 %v4515
    %v4551 = vpop.f32.mrb[0].mxu0
    %v4552 = vadd.f32 %v3021, %v4551
    %v4553 = vpop.f32.mrb[0].mxu0
    %v4554 = vpop.f32.mrb[0].mxu0
    %v4555 = vpop.f32.mrb[0].mxu0
    %4556 = vdwg.mxu0
    %v4557 = vsel %vm3073, %v4552, -inf
    %4558 = vmax.xlane.f32.xlu0 %v4557
    %v4559 = vpop.xlane.xlu0 %4558
    %v4560 = vsub.f32 %v4552, %v4559
    %v4561 = vmul.f32 %v4560, 1.442695
    %v4562 = vpow.pop %v4561
    %v4563 = vsel %vm3073, %v4562, 0.0
    %4564 = vadd.xlane.f32.xlu0 %v4563
    %v4565 = vpop.xlane.xlu0 %4564
    %v4566 = vlog2.pop %v4565
    %v4567 = vmul.f32 %v4566, 0.6931472
    %v4568 = vsub.f32 %v4560, %v4567
    %4569 = vrot.lane.b32.xlu0 %v4398, 80
    %v4570 = vpop.permute.xlu0 %4569
    %v4572 = vsel %vm3029, %v4570, 0
    %4574 = vmatprep.subr.bf16.mxu0 0
    %4575 = vmatpush1.bf16.msra.mxu0 %v3027
    %4576 = vmatprep.subr.bf16.mxu0 0
    %4577 = vmatpush1.bf16.msra.mxu0 0
    %4578 = vmatprep.subr.bf16.mxu0 0
    %4579 = vmatpush1.bf16.msra.mxu0 0
    %4580 = vmatprep.subr.bf16.mxu0 0
    %4581 = vmatpush1.bf16.msra.mxu0 0
    %4582 = vmatprep.subr.bf16.mxu0 0
    %4583 = vmatpush1.bf16.msra.mxu0 0
    %4584 = vmatprep.subr.bf16.mxu0 0
    %4585 = vmatpush1.bf16.msra.mxu0 0
    %4586 = vmatprep.subr.bf16.mxu0 0
    %4587 = vmatpush1.bf16.msra.mxu0 0
    %4588 = vmatprep.subr.bf16.mxu0 0
    %4589 = vmatpush1.bf16.msra.mxu0 0
    %4590 = vmatprep.subr.bf16.mxu0 0
    %4591 = vmatpush1.bf16.msra.mxu0 0
    %4592 = vmatprep.subr.bf16.mxu0 0
    %4593 = vmatpush1.bf16.msra.mxu0 0
    %4594 = vmatprep.subr.bf16.mxu0 0
    %4595 = vmatpush1.bf16.msra.mxu0 0
    %4596 = vmatprep.subr.bf16.mxu0 0
    %4597 = vmatpush1.bf16.msra.mxu0 0
    %4598 = vmatprep.subr.bf16.mxu0 0
    %4599 = vmatpush1.bf16.msra.mxu0 0
    %4600 = vmatprep.subr.bf16.mxu0 0
    %4601 = vmatpush1.bf16.msra.mxu0 0
    %4602 = vmatprep.subr.bf16.mxu0 0
    %4603 = vmatpush1.bf16.msra.mxu0 0
    %4604 = vmatprep.subr.bf16.mxu0 0
    %4605 = vmatpush1.bf16.msra.mxu0 0
    %4606 = vmatprep.mubr.bf16.mxu0 0
    %4607 = vmatmul.mubr.bf16.gmra.mrb[0].mxu0 %v4572
    %v4608 = vpop.f32.mrb[0].mxu0
    %v4609 = vadd.f32 %v3021, %v4608
    %v4610 = vpop.f32.mrb[0].mxu0
    %v4611 = vpop.f32.mrb[0].mxu0
    %v4612 = vpop.f32.mrb[0].mxu0
    %4613 = vdwg.mxu0
    %v4614 = vsel %vm3073, %v4609, -inf
    %4615 = vmax.xlane.f32.xlu0 %v4614
    %v4616 = vpop.xlane.xlu0 %4615
    %v4617 = vsub.f32 %v4609, %v4616
    %v4618 = vmul.f32 %v4617, 1.442695
    %v4619 = vpow.pop %v4618
    %v4620 = vsel %vm3073, %v4619, 0.0
    %4621 = vadd.xlane.f32.xlu0 %v4620
    %v4622 = vpop.xlane.xlu0 %4621
    %v4623 = vlog2.pop %v4622
    %v4624 = vmul.f32 %v4623, 0.6931472
    %v4625 = vsub.f32 %v4617, %v4624
    %4626 = vrot.lane.b32.xlu0 %v4398, 64
    %v4627 = vpop.permute.xlu0 %4626
    %v4629 = vsel %vm3029, %v4627, 0
    %4631 = vmatprep.subr.bf16.mxu0 0
    %4632 = vmatpush1.bf16.msra.mxu0 %v3027
    %4633 = vmatprep.subr.bf16.mxu0 0
    %4634 = vmatpush1.bf16.msra.mxu0 0
    %4635 = vmatprep.subr.bf16.mxu0 0
    %4636 = vmatpush1.bf16.msra.mxu0 0
    %4637 = vmatprep.subr.bf16.mxu0 0
    %4638 = vmatpush1.bf16.msra.mxu0 0
    %4639 = vmatprep.subr.bf16.mxu0 0
    %4640 = vmatpush1.bf16.msra.mxu0 0
    %4641 = vmatprep.subr.bf16.mxu0 0
    %4642 = vmatpush1.bf16.msra.mxu0 0
    %4643 = vmatprep.subr.bf16.mxu0 0
    %4644 = vmatpush1.bf16.msra.mxu0 0
    %4645 = vmatprep.subr.bf16.mxu0 0
    %4646 = vmatpush1.bf16.msra.mxu0 0
    %4647 = vmatprep.subr.bf16.mxu0 0
    %4648 = vmatpush1.bf16.msra.mxu0 0
    %4649 = vmatprep.subr.bf16.mxu0 0
    %4650 = vmatpush1.bf16.msra.mxu0 0
    %4651 = vmatprep.subr.bf16.mxu0 0
    %4652 = vmatpush1.bf16.msra.mxu0 0
    %4653 = vmatprep.subr.bf16.mxu0 0
    %4654 = vmatpush1.bf16.msra.mxu0 0
    %4655 = vmatprep.subr.bf16.mxu0 0
    %4656 = vmatpush1.bf16.msra.mxu0 0
    %4657 = vmatprep.subr.bf16.mxu0 0
    %4658 = vmatpush1.bf16.msra.mxu0 0
    %4659 = vmatprep.subr.bf16.mxu0 0
    %4660 = vmatpush1.bf16.msra.mxu0 0
    %4661 = vmatprep.subr.bf16.mxu0 0
    %4662 = vmatpush1.bf16.msra.mxu0 0
    %4663 = vmatprep.mubr.bf16.mxu0 0
    %4664 = vmatmul.mubr.bf16.gmra.mrb[0].mxu0 %v4629
    %v4665 = vpop.f32.mrb[0].mxu0
    %v4666 = vadd.f32 %v3021, %v4665
    %v4667 = vpop.f32.mrb[0].mxu0
    %v4668 = vpop.f32.mrb[0].mxu0
    %v4669 = vpop.f32.mrb[0].mxu0
    %4670 = vdwg.mxu0
    %v4671 = vsel %vm3073, %v4666, -inf
    %4672 = vmax.xlane.f32.xlu0 %v4671
    %v4673 = vpop.xlane.xlu0 %4672
    %v4674 = vsub.f32 %v4666, %v4673
    %v4675 = vmul.f32 %v4674, 1.442695
    %v4676 = vpow.pop %v4675
    %v4677 = vsel %vm3073, %v4676, 0.0
    %4678 = vadd.xlane.f32.xlu0 %v4677
    %v4679 = vpop.xlane.xlu0 %4678
    %v4680 = vlog2.pop %v4679
    %v4681 = vmul.f32 %v4680, 0.6931472
    %v4682 = vsub.f32 %v4674, %v4681
    %4683 = vrot.lane.b32.xlu0 %v4398, 48
    %v4684 = vpop.permute.xlu0 %4683
    %v4686 = vsel %vm3029, %v4684, 0
    %4688 = vmatprep.subr.bf16.mxu0 0
    %4689 = vmatpush1.bf16.msra.mxu0 %v3027
    %4690 = vmatprep.subr.bf16.mxu0 0
    %4691 = vmatpush1.bf16.msra.mxu0 0
    %4692 = vmatprep.subr.bf16.mxu0 0
    %4693 = vmatpush1.bf16.msra.mxu0 0
    %4694 = vmatprep.subr.bf16.mxu0 0
    %4695 = vmatpush1.bf16.msra.mxu0 0
    %4696 = vmatprep.subr.bf16.mxu0 0
    %4697 = vmatpush1.bf16.msra.mxu0 0
    %4698 = vmatprep.subr.bf16.mxu0 0
    %4699 = vmatpush1.bf16.msra.mxu0 0
    %4700 = vmatprep.subr.bf16.mxu0 0
    %4701 = vmatpush1.bf16.msra.mxu0 0
    %4702 = vmatprep.subr.bf16.mxu0 0
    %4703 = vmatpush1.bf16.msra.mxu0 0
    %4704 = vmatprep.subr.bf16.mxu0 0
    %4705 = vmatpush1.bf16.msra.mxu0 0
    %4706 = vmatprep.subr.bf16.mxu0 0
    %4707 = vmatpush1.bf16.msra.mxu0 0
    %4708 = vmatprep.subr.bf16.mxu0 0
    %4709 = vmatpush1.bf16.msra.mxu0 0
    %4710 = vmatprep.subr.bf16.mxu0 0
    %4711 = vmatpush1.bf16.msra.mxu0 0
    %4712 = vmatprep.subr.bf16.mxu0 0
    %4713 = vmatpush1.bf16.msra.mxu0 0
    %4714 = vmatprep.subr.bf16.mxu0 0
    %4715 = vmatpush1.bf16.msra.mxu0 0
    %4716 = vmatprep.subr.bf16.mxu0 0
    %4717 = vmatpush1.bf16.msra.mxu0 0
    %4718 = vmatprep.subr.bf16.mxu0 0
    %4719 = vmatpush1.bf16.msra.mxu0 0
    %4720 = vmatprep.mubr.bf16.mxu0 0
    %4721 = vmatmul.mubr.bf16.gmra.mrb[0].mxu0 %v4686
    %v4722 = vpop.f32.mrb[0].mxu0
    %v4723 = vadd.f32 %v3021, %v4722
    %v4724 = vpop.f32.mrb[0].mxu0
    %v4725 = vpop.f32.mrb[0].mxu0
    %v4726 = vpop.f32.mrb[0].mxu0
    %4727 = vdwg.mxu0
    %v4728 = vsel %vm3073, %v4723, -inf
    %4729 = vmax.xlane.f32.xlu0 %v4728
    %v4730 = vpop.xlane.xlu0 %4729
    %v4731 = vsub.f32 %v4723, %v4730
    %v4732 = vmul.f32 %v4731, 1.442695
    %v4733 = vpow.pop %v4732
    %v4734 = vsel %vm3073, %v4733, 0.0
    %4735 = vadd.xlane.f32.xlu0 %v4734
    %v4736 = vpop.xlane.xlu0 %4735
    %v4737 = vlog2.pop %v4736
    %v4738 = vmul.f32 %v4737, 0.6931472
    %v4739 = vsub.f32 %v4731, %v4738
    %4740 = vrot.lane.b32.xlu0 %v4398, 32
    %v4741 = vpop.permute.xlu0 %4740
    %v4743 = vsel %vm3029, %v4741, 0
    %4745 = vmatprep.subr.bf16.mxu0 0
    %4746 = vmatpush1.bf16.msra.mxu0 %v3027
    %4747 = vmatprep.subr.bf16.mxu0 0
    %4748 = vmatpush1.bf16.msra.mxu0 0
    %4749 = vmatprep.subr.bf16.mxu0 0
    %4750 = vmatpush1.bf16.msra.mxu0 0
    %4751 = vmatprep.subr.bf16.mxu0 0
    %4752 = vmatpush1.bf16.msra.mxu0 0
    %4753 = vmatprep.subr.bf16.mxu0 0
    %4754 = vmatpush1.bf16.msra.mxu0 0
    %4755 = vmatprep.subr.bf16.mxu0 0
    %4756 = vmatpush1.bf16.msra.mxu0 0
    %4757 = vmatprep.subr.bf16.mxu0 0
    %4758 = vmatpush1.bf16.msra.mxu0 0
    %4759 = vmatprep.subr.bf16.mxu0 0
    %4760 = vmatpush1.bf16.msra.mxu0 0
    %4761 = vmatprep.subr.bf16.mxu0 0
    %4762 = vmatpush1.bf16.msra.mxu0 0
    %4763 = vmatprep.subr.bf16.mxu0 0
    %4764 = vmatpush1.bf16.msra.mxu0 0
    %4765 = vmatprep.subr.bf16.mxu0 0
    %4766 = vmatpush1.bf16.msra.mxu0 0
    %4767 = vmatprep.subr.bf16.mxu0 0
    %4768 = vmatpush1.bf16.msra.mxu0 0
    %4769 = vmatprep.subr.bf16.mxu0 0
    %4770 = vmatpush1.bf16.msra.mxu0 0
    %4771 = vmatprep.subr.bf16.mxu0 0
    %4772 = vmatpush1.bf16.msra.mxu0 0
    %4773 = vmatprep.subr.bf16.mxu0 0
    %4774 = vmatpush1.bf16.msra.mxu0 0
    %4775 = vmatprep.subr.bf16.mxu0 0
    %4776 = vmatpush1.bf16.msra.mxu0 0
    %4777 = vmatprep.mubr.bf16.mxu0 0
    %4778 = vmatmul.mubr.bf16.gmra.mrb[0].mxu0 %v4743
    %v4779 = vpop.f32.mrb[0].mxu0
    %v4780 = vadd.f32 %v3021, %v4779
    %v4781 = vpop.f32.mrb[0].mxu0
    %v4782 = vpop.f32.mrb[0].mxu0
    %v4783 = vpop.f32.mrb[0].mxu0
    %4784 = vdwg.mxu0
    %v4785 = vsel %vm3073, %v4780, -inf
    %4786 = vmax.xlane.f32.xlu0 %v4785
    %v4787 = vpop.xlane.xlu0 %4786
    %v4788 = vsub.f32 %v4780, %v4787
    %v4789 = vmul.f32 %v4788, 1.442695
    %v4790 = vpow.pop %v4789
    %v4791 = vsel %vm3073, %v4790, 0.0
    %4792 = vadd.xlane.f32.xlu0 %v4791
    %v4793 = vpop.xlane.xlu0 %4792
    %v4794 = vlog2.pop %v4793
    %v4795 = vmul.f32 %v4794, 0.6931472
    %v4796 = vsub.f32 %v4788, %v4795
    %4797 = vrot.lane.b32.xlu0 %v4398, 16
    %v4798 = vpop.permute.xlu0 %4797
    %v4800 = vsel %vm3029, %v4798, 0
    %4802 = vmatprep.subr.bf16.mxu0 0
    %4803 = vmatpush1.bf16.msra.mxu0 %v3027
    %4804 = vmatprep.subr.bf16.mxu0 0
    %4805 = vmatpush1.bf16.msra.mxu0 0
    %4806 = vmatprep.subr.bf16.mxu0 0
    %4807 = vmatpush1.bf16.msra.mxu0 0
    %4808 = vmatprep.subr.bf16.mxu0 0
    %4809 = vmatpush1.bf16.msra.mxu0 0
    %4810 = vmatprep.subr.bf16.mxu0 0
    %4811 = vmatpush1.bf16.msra.mxu0 0
    %4812 = vmatprep.subr.bf16.mxu0 0
    %4813 = vmatpush1.bf16.msra.mxu0 0
    %4814 = vmatprep.subr.bf16.mxu0 0
    %4815 = vmatpush1.bf16.msra.mxu0 0
    %4816 = vmatprep.subr.bf16.mxu0 0
    %4817 = vmatpush1.bf16.msra.mxu0 0
    %4818 = vmatprep.subr.bf16.mxu0 0
    %4819 = vmatpush1.bf16.msra.mxu0 0
    %4820 = vmatprep.subr.bf16.mxu0 0
    %4821 = vmatpush1.bf16.msra.mxu0 0
    %4822 = vmatprep.subr.bf16.mxu0 0
    %4823 = vmatpush1.bf16.msra.mxu0 0
    %4824 = vmatprep.subr.bf16.mxu0 0
    %4825 = vmatpush1.bf16.msra.mxu0 0
    %4826 = vmatprep.subr.bf16.mxu0 0
    %4827 = vmatpush1.bf16.msra.mxu0 0
    %4828 = vmatprep.subr.bf16.mxu0 0
    %4829 = vmatpush1.bf16.msra.mxu0 0
    %4830 = vmatprep.subr.bf16.mxu0 0
    %4831 = vmatpush1.bf16.msra.mxu0 0
    %4832 = vmatprep.subr.bf16.mxu0 0
    %4833 = vmatpush1.bf16.msra.mxu0 0
    %4834 = vmatprep.mubr.bf16.mxu0 0
    %4835 = vmatmul.mubr.bf16.gmra.mrb[0].mxu0 %v4800
    %v4836 = vpop.f32.mrb[0].mxu0
    %v4837 = vadd.f32 %v3021, %v4836
    %v4838 = vpop.f32.mrb[0].mxu0
    %v4839 = vpop.f32.mrb[0].mxu0
    %v4840 = vpop.f32.mrb[0].mxu0
    %4841 = vdwg.mxu0
    %v4842 = vsel %vm3073, %v4837, -inf
    %4843 = vmax.xlane.f32.xlu0 %v4842
    %v4844 = vpop.xlane.xlu0 %4843
    %v4845 = vsub.f32 %v4837, %v4844
    %v4846 = vmul.f32 %v4845, 1.442695
    %v4847 = vpow.pop %v4846
    %v4848 = vsel %vm3073, %v4847, 0.0
    %4849 = vadd.xlane.f32.xlu0 %v4848
    %v4850 = vpop.xlane.xlu0 %4849
    %v4851 = vlog2.pop %v4850
    %v4852 = vmul.f32 %v4851, 0.6931472
    %v4853 = vsub.f32 %v4845, %v4852
    %v4886 = vcombine.low %v3085, %v3143
    %v4887 = vcombine.low %v3200, %v3257
    %v4889 = vunpack.c.l.s4 1983009808
    %v4890 = vunpack.c.0.s8 %v4889
    %v4891 = vlaneseq
    %v4892 = vshrl.u32 %v4891, 7
    %v4893 = vsub.s32 %v4890, %v4892
    %v4894 = vrot.slane %v4886, %v4893
    %v4896 = vunpack.c.l.s4 1983009808
    %v4897 = vunpack.c.0.s8 %v4896
    %v4898 = vlaneseq
    %v4899 = vshrl.u32 %v4898, 7
    %v4900 = vsub.s32 %v4897, %v4899
    %v4901 = vrot.slane %v4887, %v4900
    %v4902 = vcombine.low %v4894, %v4901
    %v4903 = vcombine.low %v3314, %v3371
    %v4904 = vcombine.low %v3428, %v3485
    %v4906 = vunpack.c.l.s4 1983009808
    %v4907 = vunpack.c.0.s8 %v4906
    %v4908 = vlaneseq
    %v4909 = vshrl.u32 %v4908, 7
    %v4910 = vsub.s32 %v4907, %v4909
    %v4911 = vrot.slane %v4903, %v4910
    %v4913 = vunpack.c.l.s4 1983009808
    %v4914 = vunpack.c.0.s8 %v4913
    %v4915 = vlaneseq
    %v4916 = vshrl.u32 %v4915, 7
    %v4917 = vsub.s32 %v4914, %v4916
    %v4918 = vrot.slane %v4904, %v4917
    %v4919 = vcombine.low %v4911, %v4918
    %v4920 = vcombine.low %v3541, %v3599
    %v4921 = vcombine.low %v3656, %v3713
    %v4923 = vunpack.c.l.s4 1983009808
    %v4924 = vunpack.c.0.s8 %v4923
    %v4925 = vlaneseq
    %v4926 = vshrl.u32 %v4925, 7
    %v4927 = vsub.s32 %v4924, %v4926
    %v4928 = vrot.slane %v4920, %v4927
    %v4930 = vunpack.c.l.s4 1983009808
    %v4931 = vunpack.c.0.s8 %v4930
    %v4932 = vlaneseq
    %v4933 = vshrl.u32 %v4932, 7
    %v4934 = vsub.s32 %v4931, %v4933
    %v4935 = vrot.slane %v4921, %v4934
    %v4936 = vcombine.low %v4928, %v4935
    %v4937 = vcombine.low %v3770, %v3827
    %v4938 = vcombine.low %v3884, %v3941
    %v4940 = vunpack.c.l.s4 1983009808
    %v4941 = vunpack.c.0.s8 %v4940
    %v4942 = vlaneseq
    %v4943 = vshrl.u32 %v4942, 7
    %v4944 = vsub.s32 %v4941, %v4943
    %v4945 = vrot.slane %v4937, %v4944
    %v4947 = vunpack.c.l.s4 1983009808
    %v4948 = vunpack.c.0.s8 %v4947
    %v4949 = vlaneseq
    %v4950 = vshrl.u32 %v4949, 7
    %v4951 = vsub.s32 %v4948, %v4950
    %v4952 = vrot.slane %v4938, %v4951
    %v4953 = vcombine.low %v4945, %v4952
    %v4954 = vcombine.low %v3997, %v4055
    %v4955 = vcombine.low %v4112, %v4169
    %v4957 = vunpack.c.l.s4 1983009808
    %v4958 = vunpack.c.0.s8 %v4957
    %v4959 = vlaneseq
    %v4960 = vshrl.u32 %v4959, 7
    %v4961 = vsub.s32 %v4958, %v4960
    %v4962 = vrot.slane %v4954, %v4961
    %v4964 = vunpack.c.l.s4 1983009808
    %v4965 = vunpack.c.0.s8 %v4964
    %v4966 = vlaneseq
    %v4967 = vshrl.u32 %v4966, 7
    %v4968 = vsub.s32 %v4965, %v4967
    %v4969 = vrot.slane %v4955, %v4968
    %v4970 = vcombine.low %v4962, %v4969
    %v4971 = vcombine.low %v4226, %v4283
    %v4972 = vcombine.low %v4340, %v4397
    %v4974 = vunpack.c.l.s4 1983009808
    %v4975 = vunpack.c.0.s8 %v4974
    %v4976 = vlaneseq
    %v4977 = vshrl.u32 %v4976, 7
    %v4978 = vsub.s32 %v4975, %v4977
    %v4979 = vrot.slane %v4971, %v4978
    %v4981 = vunpack.c.l.s4 1983009808
    %v4982 = vunpack.c.0.s8 %v4981
    %v4983 = vlaneseq
    %v4984 = vshrl.u32 %v4983, 7
    %v4985 = vsub.s32 %v4982, %v4984
    %v4986 = vrot.slane %v4972, %v4985
    %v4987 = vcombine.low %v4979, %v4986
    %v4988 = vcombine.low %v4453, %v4511
    %v4989 = vcombine.low %v4568, %v4625
    %v4991 = vunpack.c.l.s4 1983009808
    %v4992 = vunpack.c.0.s8 %v4991
    %v4993 = vlaneseq
    %v4994 = vshrl.u32 %v4993, 7
    %v4995 = vsub.s32 %v4992, %v4994
    %v4996 = vrot.slane %v4988, %v4995
    %v4998 = vunpack.c.l.s4 1983009808
    %v4999 = vunpack.c.0.s8 %v4998
    %v5000 = vlaneseq
    %v5001 = vshrl.u32 %v5000, 7
    %v5002 = vsub.s32 %v4999, %v5001
    %v5003 = vrot.slane %v4989, %v5002
    %v5004 = vcombine.low %v4996, %v5003
    %v5005 = vcombine.low %v4682, %v4739
    %v5006 = vcombine.low %v4796, %v4853
    %v5008 = vunpack.c.l.s4 1983009808
    %v5009 = vunpack.c.0.s8 %v5008
    %v5010 = vlaneseq
    %v5011 = vshrl.u32 %v5010, 7
    %v5012 = vsub.s32 %v5009, %v5011
    %v5013 = vrot.slane %v5005, %v5012
    %v5015 = vunpack.c.l.s4 1983009808
    %v5016 = vunpack.c.0.s8 %v5015
    %v5017 = vlaneseq
    %v5018 = vshrl.u32 %v5017, 7
    %v5019 = vsub.s32 %v5016, %v5018
    %v5020 = vrot.slane %v5006, %v5019
    %v5021 = vcombine.low %v5013, %v5020
    %5030 = vst [vmem:[#allocation14] sm:$0xff] %v4902
    %5031 = vst [vmem:[#allocation14 + $0x8] sm:$0xff] %v4919
    %5032 = vst [vmem:[#allocation14 + $0x10] sm:$0xff] %v4936
    %5033 = vst [vmem:[#allocation14 + $0x18] sm:$0xff] %v4953
    %5034 = vst [vmem:[#allocation14 + $0x20] sm:$0xff] %v4970
    %5035 = vst [vmem:[#allocation14 + $0x28] sm:$0xff] %v4987
    %5036 = vst [vmem:[#allocation14 + $0x30] sm:$0xff] %v5004
    %5037 = vst [vmem:[#allocation14 + $0x38] sm:$0xff] %v5021
    // Predicated region
    $region82: #{tpu_custom_call.1} parent=1 // pred_check
      _
    $region83: #{tpu_custom_call.1} parent=1 // pred_check_branch
      %5039 = sbr.rel (0) target = $region85
    $region84: #{tpu_custom_call.1} parent=1 // pred_region
      %s5041 = ssub.s32 1024, 1024
      %5042 = vsyncadd [#allocation4], %s5041
      %s5044 = sshll.u32 [#allocation14], 4
      %s5045 = int_to_ptr.vmem [resolvable:$true] %s5044
      %5047 = dma.vmem_to_hbm [thread:$0]  %s5045, 1024, %s13, [#allocation4]
    $region85: #{tpu_custom_call.1} parent=1 // pred_fallthru
      _
    // Predicated region
    $region86: #{tpu_custom_call.1} parent=1 // pred_check
      _
    $region87: #{tpu_custom_call.1} parent=1 // pred_check_branch
      %5049 = sbr.rel (0) target = $region89
    $region88: #{tpu_custom_call.1} parent=1 // pred_region
      %5050 = dma.done [#allocation4], 1024
    $region89: #{tpu_custom_call.1} parent=1 // pred_fallthru
      _
    %5051 = vsyncpa [#allocation3], 1
    %5052 = vsyncpa [#allocation6], 1
    %5053 = vsyncpa [#allocation9], 1
    %5054 = vsyncpa [#allocation12], 1
    %5055 = vsyncpa [#allocation4], 1

</llo_original>
